<compile_context>
chip_gen: v5e
topology: v5e:2x2
jax: 0.10.0
libtpu: 0.0.40
codegen_flags: <defaults>
</compile_context>

<pallas_src>
import jax
import jax.numpy as jnp
from jax import lax
from jax.experimental import pallas as pl
from jax.experimental.pallas import tpu as pltpu


def _round_up(x, m):
    return (x + m - 1) // m * m


def _linear_permute_kernel(x_ref, w_ref, b_ref, o_ref):
    # x_ref: (1, tm, tk)  w_ref: (tn, tk)  b_ref: (tn, 1)  o_ref: (1, tn, tm)
    k = pl.program_id(3)

    # out[n, m] = sum_k w[n, k] * x[m, k]  -> (tn, tm) produced directly
    # (both operands contract on their K axis; no transposes).
    part = lax.dot_general(
        w_ref[...],
        x_ref[0],
        dimension_numbers=(((1,), (1,)), ((), ())),
        preferred_element_type=jnp.float32,
    )

    # The output BlockSpec ignores k, so o_ref is VMEM-resident across the K
    # reduction and doubles as the f32 accumulator (output dtype is f32).
    @pl.when(k == 0)
    def _():
        o_ref[0] = part + b_ref[...]          # bias lane-broadcasts over tm

    @pl.when(k > 0)
    def _():
        o_ref[0] += part


def _pick_tile(dim, cap, align):
    """Pick (tile, padded_dim) for one axis.

    - dim <= cap: use the full dim as a single block (always layout-legal,
      regardless of alignment) -> no padding.
    - dim  > cap: prefer the largest multiple of `align` <= cap that divides
      dim (no padding); otherwise fall back to cap with padding.
    """
    if dim <= cap:
        return dim, dim
    t = cap
    while t >= align:
        if dim % t == 0:
            return t, dim
        t -= align
    return cap, _round_up(dim, cap)


def _block_vmem_bytes(shape, itemsize):
    s = list(shape)
    s[-1] = _round_up(s[-1], 128)
    if len(s) >= 2:
        s[-2] = _round_up(s[-2], 8)
    n = 1
    for d in s:
        n *= d
    return n * itemsize


def linear_permute(x, w, b, *, tm_cap=512, tn_cap=512, tk_cap=1024):
    """out = transpose(linear(x, w, b), (0, 2, 1)) as float32.

    x: (B, M, K), w: (N, K), b: (N,)  ->  out: (B, N, M) float32.
    """
    B, M, K = x.shape
    N, Kw = w.shape
    assert K == Kw and b.shape == (N,)

    # Tiny / degenerate problems (e.g. the (1,2,2) spec shape): a pallas_call
    # is pure fixed cost here; let XLA handle it directly.
    if 2 * B * M * N * K < (1 << 20) or min(M, N, K) < 8:
        y = jnp.einsum("bmk,nk->bmn", x, w) + b
        return jnp.transpose(y, (0, 2, 1)).astype(jnp.float32)

    # tm: lane axis of the output, sublane axis of x  -> cap multiple of 128.
    # tn: sublane axis of W and of the output         -> cap multiple of 8.
    # tk: lane axis of x and W (reduction)            -> cap multiple of 128.
    tm, Mp = _pick_tile(M, tm_cap, 128)
    tn, Np = _pick_tile(N, tn_cap, 8)
    tk, Kp = _pick_tile(K, tk_cap, 128)

    # Padding only occurs when an axis exceeds its cap AND no divisor tile was
    # found; typical shapes take the no-copy path (and skip the post-slice).
    xp = x if (Mp == M and Kp == K) else jnp.pad(x, ((0, 0), (0, Mp - M), (0, Kp - K)))
    wp = w if (Np == N and Kp == K) else jnp.pad(w, ((0, Np - N), (0, Kp - K)))
    bp = (b if Np == N else jnp.pad(b, (0, Np - N))).astype(jnp.float32).reshape(-1, 1)

    grid = (B, Np // tn, Mp // tm, Kp // tk)

    isz = xp.dtype.itemsize
    vmem_needed = 2 * (
        _block_vmem_bytes((1, tm, tk), isz)
        + _block_vmem_bytes((tn, tk), wp.dtype.itemsize)
        + _block_vmem_bytes((tn, 1), 4)
        + _block_vmem_bytes((1, tn, tm), 4)
    )
    vmem_limit = int(max(32 * 1024 * 1024, 2 * vmem_needed))

    out = pl.pallas_call(
        _linear_permute_kernel,
        out_shape=jax.ShapeDtypeStruct((B, Np, Mp), jnp.float32),
        grid_spec=pltpu.PrefetchScalarGridSpec(
            num_scalar_prefetch=0,
            grid=grid,
            in_specs=[
                pl.BlockSpec((1, tm, tk), lambda bi, n, m, k: (bi, m, k)),
                # W tile depends only on (n, k); with tk == K (the common case)
                # it is fetched once per (bi, n) and reused across all of M.
                pl.BlockSpec((tn, tk), lambda bi, n, m, k: (n, k)),
                pl.BlockSpec((tn, 1), lambda bi, n, m, k: (n, 0)),
            ],
            out_specs=pl.BlockSpec((1, tn, tm), lambda bi, n, m, k: (bi, n, m)),
        ),
        compiler_params=pltpu.CompilerParams(
            dimension_semantics=("parallel", "parallel", "parallel", "arbitrary"),
            vmem_limit_bytes=vmem_limit,
        ),
        cost_estimate=pl.CostEstimate(
            flops=2 * B * Np * Mp * Kp,
            transcendentals=0,
            bytes_accessed=(
                xp.size * xp.dtype.itemsize
                + wp.size * wp.dtype.itemsize
                + bp.size * 4
                + B * Np * Mp * 4
            ),
        ),
    )(xp, wp, bp)

    if Np != N or Mp != M:
        out = out[:, :N, :M]
    return out


if __name__ == "__main__":
    key = jax.random.PRNGKey(0)
    kx, kw, kb = jax.random.split(key, 3)

    # Spec shapes: x1 = torch.randn(1, 2, 2), W = torch.randn(2, 2), b = torch.randn(2)
    x1 = jax.random.normal(kx, (1, 2, 2), dtype=jnp.float32)
    W = jax.random.normal(kw, (2, 2), dtype=jnp.float32)
    bias = jax.random.normal(kb, (2,), dtype=jnp.float32)

    out = linear_permute(x1, W, bias)
    jax.block_until_ready(out)
    ref = jnp.transpose(jnp.einsum("bmk,nk->bmn", x1, W) + bias, (0, 2, 1))
    assert out.shape == (1, 2, 2) and out.dtype == jnp.float32
    assert jnp.allclose(out, ref, atol=1e-5), "small-shape mismatch vs reference"

    # Pallas path, aligned dims: adaptive tn=320 (no N padding), tm=512 lane-dense
    # stores, tk=K=384 -> single K block, no jnp.pad, no post-slice.
    kx2, kw2, kb2 = jax.random.split(jax.random.PRNGKey(1), 3)
    x2 = jax.random.normal(kx2, (2, 512, 384), dtype=jnp.float32)
    W2 = jax.random.normal(kw2, (320, 384), dtype=jnp.float32)
    b2 = jax.random.normal(kb2, (320,), dtype=jnp.float32)
    out2 = linear_permute(x2, W2, b2)
    jax.block_until_ready(out2)
    ref2 = jnp.transpose(jnp.einsum("bmk,nk->bmn", x2, W2) + b2, (0, 2, 1))
    assert out2.shape == (2, 320, 512) and out2.dtype == jnp.float32
    assert jnp.allclose(out2, ref2, atol=2e-2, rtol=2e-2), "tiled-shape mismatch vs reference"

    # Pallas path, unaligned dims covered by full-dim blocks (K=200, N=96):
    # still zero host-side padding / slicing.
    kx3, kw3, kb3 = jax.random.split(jax.random.PRNGKey(2), 3)
    x3 = jax.random.normal(kx3, (1, 256, 200), dtype=jnp.float32)
    W3 = jax.random.normal(kw3, (96, 200), dtype=jnp.float32)
    b3 = jax.random.normal(kb3, (96,), dtype=jnp.float32)
    out3 = linear_permute(x3, W3, b3)
    jax.block_until_ready(out3)
    ref3 = jnp.transpose(jnp.einsum("bmk,nk->bmn", x3, W3) + b3, (0, 2, 1))
    assert out3.shape == (1, 96, 256) and out3.dtype == jnp.float32
    assert jnp.allclose(out3, ref3, atol=2e-2, rtol=2e-2), "unaligned-shape mismatch vs reference"

    print("KERNEL_OK")
</pallas_src>

<mosaic_0001>
module attributes {stable_mosaic.version = 11 : i64} {
  func.func @_linear_permute_kernel(%arg0: i32, %arg1: i32, %arg2: i32, %arg3: i32, %arg4: memref<1x512x384xf32, #tpu.memory_space<vmem>>, %arg5: memref<320x384xf32, #tpu.memory_space<vmem>>, %arg6: memref<320x1xf32, #tpu.memory_space<vmem>>, %arg7: memref<1x320x512xf32, #tpu.memory_space<vmem>>) attributes {dimension_semantics = [#tpu.dimension_semantics<parallel>, #tpu.dimension_semantics<parallel>, #tpu.dimension_semantics<parallel>, #tpu.dimension_semantics<arbitrary>], iteration_bounds = array<i64: 2, 1, 1, 1>, scalar_prefetch = 0 : i64, scratch_operands = 0 : i64, tpu.core_type = #tpu.core_type<tc>, window_params = [{transform_indices = @transform_0, window_bounds = array<i64: 1, 512, 384>}, {transform_indices = @transform_1, window_bounds = array<i64: 320, 384>}, {transform_indices = @transform_2, window_bounds = array<i64: 320, 1>}, {transform_indices = @transform_3, window_bounds = array<i64: 1, 320, 512>}]} {
    %c0 = arith.constant 0 : index
    %c0_0 = arith.constant 0 : index
    %0 = vector.load %arg5[%c0, %c0_0] : memref<320x384xf32, #tpu.memory_space<vmem>>, vector<320x384xf32>
    %c0_1 = arith.constant 0 : index
    %c0_2 = arith.constant 0 : index
    %c0_3 = arith.constant 0 : index
    %1 = vector.load %arg4[%c0_1, %c0_2, %c0_3] : memref<1x512x384xf32, #tpu.memory_space<vmem>>, vector<1x512x384xf32>
    %2 = vector.shape_cast %1 : vector<1x512x384xf32> to vector<512x384xf32>
    %cst = arith.constant dense<0.000000e+00> : vector<320x512xf32>
    %3 = tpu.matmul %0, %2, %cst {dimension_numbers = #tpu.dot_dimension_numbers<[1], [1], [0], [0], [0, 0, 1, 0], [], []>} : vector<320x384xf32>, vector<512x384xf32>, vector<320x512xf32> -> vector<320x512xf32>
    %c0_i32 = arith.constant 0 : i32
    %4 = arith.cmpi eq, %arg3, %c0_i32 : i32
    %5 = arith.extui %4 : i1 to i32
    %c0_i32_4 = arith.constant 0 : i32
    %6 = arith.cmpi ne, %5, %c0_i32_4 : i32
    scf.if %6 {
      %c0_7 = arith.constant 0 : index
      %c0_8 = arith.constant 0 : index
      %10 = vector.load %arg6[%c0_7, %c0_8] : memref<320x1xf32, #tpu.memory_space<vmem>>, vector<320x1xf32>
      %11 = vector.broadcast %10 : vector<320x1xf32> to vector<320x512xf32>
      %12 = arith.addf %3, %11 : vector<320x512xf32>
      %c0_9 = arith.constant 0 : index
      %c0_10 = arith.constant 0 : index
      %c0_11 = arith.constant 0 : index
      %13 = vector.load %arg7[%c0_9, %c0_10, %c0_11] : memref<1x320x512xf32, #tpu.memory_space<vmem>>, vector<1x320x512xf32>
      %14 = vector.shape_cast %13 : vector<1x320x512xf32> to vector<320x512xf32>
      %15 = vector.shape_cast %12 : vector<320x512xf32> to vector<1x320x512xf32>
      tpu.vector_store %arg7[%c0_9, %c0_10, %c0_11], %15 {strides = array<i32>} : memref<1x320x512xf32, #tpu.memory_space<vmem>>, vector<1x320x512xf32>,
    } else {
    }
    %c0_i32_5 = arith.constant 0 : i32
    %7 = arith.cmpi sgt, %arg3, %c0_i32_5 : i32
    %8 = arith.extui %7 : i1 to i32
    %c0_i32_6 = arith.constant 0 : i32
    %9 = arith.cmpi ne, %8, %c0_i32_6 : i32
    scf.if %9 {
      %c0_7 = arith.constant 0 : index
      %c0_8 = arith.constant 0 : index
      %c0_9 = arith.constant 0 : index
      %10 = vector.load %arg7[%c0_7, %c0_8, %c0_9] : memref<1x320x512xf32, #tpu.memory_space<vmem>>, vector<1x320x512xf32>
      %11 = vector.shape_cast %10 : vector<1x320x512xf32> to vector<320x512xf32>
      %12 = arith.addf %11, %3 : vector<320x512xf32>
      %c0_10 = arith.constant 0 : index
      %c0_11 = arith.constant 0 : index
      %c0_12 = arith.constant 0 : index
      %13 = vector.load %arg7[%c0_10, %c0_11, %c0_12] : memref<1x320x512xf32, #tpu.memory_space<vmem>>, vector<1x320x512xf32>
      %14 = vector.shape_cast %13 : vector<1x320x512xf32> to vector<320x512xf32>
      %15 = vector.shape_cast %12 : vector<320x512xf32> to vector<1x320x512xf32>
      tpu.vector_store %arg7[%c0_10, %c0_11, %c0_12], %15 {strides = array<i32>} : memref<1x320x512xf32, #tpu.memory_space<vmem>>, vector<1x320x512xf32>,
    } else {
    }
    return
  }
  func.func @transform_0(%arg0: i32, %arg1: i32, %arg2: i32, %arg3: i32) -> (i32, i32, i32) {
    %c0_i32 = arith.constant 0 : i32
    return %arg0, %arg2, %arg3 : i32, i32, i32
  }
  func.func @transform_1(%arg0: i32, %arg1: i32, %arg2: i32, %arg3: i32) -> (i32, i32) {
    %c0_i32 = arith.constant 0 : i32
    return %arg1, %arg3 : i32, i32
  }
  func.func @transform_2(%arg0: i32, %arg1: i32, %arg2: i32, %arg3: i32) -> (i32, i32) {
    %c0_i32 = arith.constant 0 : i32
    %c0_i32_0 = arith.constant 0 : i32
    return %arg1, %c0_i32 : i32, i32
  }
  func.func @transform_3(%arg0: i32, %arg1: i32, %arg2: i32, %arg3: i32) -> (i32, i32, i32) {
    %c0_i32 = arith.constant 0 : i32
    return %arg0, %arg1, %arg2 : i32, i32, i32
  }
}

</mosaic_0001>

<llo_original>
// kernel: tpu_custom_call.1
$region0: #{tpu_custom_call.1}
  #allocation0 [shape = 'u32[]', space=smem, size = 0x4, offset = 0x4, fixed_abs, tag = 'smem constant byte address 0x4 - core index']
  #allocation1 [shape = 'u32[72,128]{1,0:T(1,128)}', space=vmem, size = 0x9000, scoped, tag = 'internal scratch']
  %s0 = inlined_call_operand.hbm [shape: f32[2,512,384], index: 0, kind: input, shape index: {}]
  %s1 = inlined_call_operand.hbm [shape: f32[320,384], index: 1, kind: input, shape index: {}]
  %s2 = inlined_call_operand.vmem [shape: f32[320,1], index: 2, kind: input, shape index: {}]
  %s3 = inlined_call_operand.hbm [shape: f32[2,320,512], index: 3, kind: output, shape index: {}]
  %s4 = sld [smem:[#allocation0]]
  $region61: #{tpu_custom_call.1} parent=0
    _
  %s6 = ssub.s32 1, %s4
  %s7 = scalar_select 0, %s6, %s4
  $region1: #{tpu_custom_call.1} parent=0
    #allocation2 [shape = 'u8[1572864]{0}', space=vmem, size = 0x180000, scoped, tag = 'input window, operand 0']
    #allocation3 [shape = 's32[2]{0}', space=sflag, size = 0x8, scoped, tag = 'scoped memory for tpu_custom_call.1']
    #allocation4 [shape = 's32[2]{0}', space=sflag, size = 0x8, scoped, tag = 'scoped memory for tpu_custom_call.1']
    #allocation5 [shape = 'u8[491520]{0}', space=vmem, size = 0x78000, scoped, tag = 'input window, operand 1, single buffered']
    #allocation6 [shape = 's32[1]{0}', space=sflag, size = 0x4, scoped, tag = 'scoped memory for tpu_custom_call.1']
    #allocation7 [shape = 'u8[1310720]{0}', space=vmem, size = 0x140000, scoped, tag = 'output window, operand 0']
    %8 = vsyncpa [#allocation3], 0
    %s9 = scalar_lea.sflag [#allocation3], 1
    %10 = vsyncpa %s9, 0
    %11 = vsyncpa [#allocation6], 0
    %12 = vsyncpa [#allocation4], 0
    %s13 = scalar_lea.sflag [#allocation4], 1
    %14 = vsyncpa %s13, 0
    loop: start=0, step=1, limit=4
    $region2: #{tpu_custom_call.1} parent=1 // loop_pre_header
      _
    $region3: #{tpu_custom_call.1} parent=1 // loop_header
      %s16 = sphi 0, %s20
      %p17 = scmp.ge.s32.totalorder %s16, 4
      %s23 = sphi 0, %s49
      %s24 = sphi 0, %s45
      %s25 = sphi 0, %s41
      %s26 = sphi 0, %s37
      %s27 = sphi 0, %s23
      %s28 = sphi 0, %s24
      %s29 = sphi 0, %s25
      %s30 = sphi 0, %s26
      %s31 = sphi 0, %s27
      %s32 = sphi 0, %s28
      %s33 = sphi 0, %s29
      %s34 = sphi 0, %s30
      %s56 = sphi 0, %s58
      %s59 = sphi 0, %s56
      %s60 = sphi 0, %s59
      %s76 = sphi 0, %s60
      %s84 = sphi 0, %s86
      %s87 = sphi 0, %s84
      %s88 = sphi 0, %s87
      %s104 = sphi 0, %s88
      %s110 = sphi 0, %s112
      %s113 = sphi 0, %s110
      %s114 = sphi 0, %s113
      %s130 = sphi 0, %s114
      %s140 = sphi 0, %s142
      %s143 = sphi 0, %s140
      %s144 = sphi 0, %s143
      %s160 = sphi 0, %s144
    $region4: #{tpu_custom_call.1} parent=1 // loop_header_branch
      %19 = sbr.rel (%p17) target = $region8
    $region5: #{tpu_custom_call.1} parent=1 // loop_body
      %s21 = ssub.s32 %s16, 1
      %s22 = ssub.s32 %s16, 2
      %s35 = sadd.s32 1, %s26
      %p36 = scmp.ge.s32.totalorder %s35, 1
      %s37 = scalar_select %p36, 0, %s35
      %s38 = sadd.s32 1, %s25
      %s39 = scalar_select %p36, %s38, %s25
      %p40 = scmp.ge.s32.totalorder %s39, 1
      %s41 = scalar_select %p40, 0, %s39
      %s42 = sadd.s32 1, %s24
      %s43 = scalar_select %p40, %s42, %s24
      %p44 = scmp.ge.s32.totalorder %s43, 1
      %s45 = scalar_select %p44, 0, %s43
      %s46 = sadd.s32 1, %s23
      %s47 = scalar_select %p44, %s46, %s23
      %p48 = scmp.ge.s32.totalorder %s47, 2
      %s49 = scalar_select %p48, 0, %s47
      %s50 = ssub.s32 %s23, %s49
      %s51 = ssub.s32 %s25, %s41
      %s52 = sor.u32 %s50, %s51
      %s53 = ssub.s32 %s26, %s37
      %s54 = sor.u32 %s52, %s53
      %p55 = scmp.eq.s32.totalorder %s54, 0
      %s57 = sadd.s32 %s56, 1
      %s58 = scalar_select %p55, %s56, %s57
      %p61 = pneg %p55
      %p62 = scmp.eq.s32.totalorder %s16, 1
      %p63 = por %p61, %p62
      %p64 = scmp.ne.s32.totalorder %s56, %s59
      %p65 = scmp.eq.s32.totalorder %s16, 0
      %p66 = por %p64, %p65
      %p67 = scmp.ne.s32.totalorder %s56, %s59
      %p68 = scmp.eq.s32.totalorder %s21, 1
      %p69 = por %p67, %p68
      %p70 = scmp.ne.s32.totalorder %s59, %s60
      %p71 = scmp.eq.s32.totalorder %s21, 0
      %p72 = por %p70, %p71
      %p73 = scmp.ne.s32.totalorder %s59, %s60
      %p74 = scmp.eq.s32.totalorder %s22, 1
      %p75 = por %p73, %p74
      %p77 = scmp.ne.s32.totalorder %s60, %s76
      %p78 = scmp.eq.s32.totalorder %s22, 0
      %p79 = por %p77, %p78
      %s80 = ssub.s32 %s24, %s45
      %s81 = ssub.s32 %s26, %s37
      %s82 = sor.u32 %s80, %s81
      %p83 = scmp.eq.s32.totalorder %s82, 0
      %s85 = sadd.s32 %s84, 1
      %s86 = scalar_select %p83, %s84, %s85
      %p89 = pneg %p83
      %p90 = scmp.eq.s32.totalorder %s16, 1
      %p91 = por %p89, %p90
      %p92 = scmp.ne.s32.totalorder %s84, %s87
      %p93 = scmp.eq.s32.totalorder %s16, 0
      %p94 = por %p92, %p93
      %p95 = scmp.ne.s32.totalorder %s84, %s87
      %p96 = scmp.eq.s32.totalorder %s21, 1
      %p97 = por %p95, %p96
      %p98 = scmp.ne.s32.totalorder %s87, %s88
      %p99 = scmp.eq.s32.totalorder %s21, 0
      %p100 = por %p98, %p99
      %p101 = scmp.ne.s32.totalorder %s87, %s88
      %p102 = scmp.eq.s32.totalorder %s22, 1
      %p103 = por %p101, %p102
      %p105 = scmp.ne.s32.totalorder %s88, %s104
      %p106 = scmp.eq.s32.totalorder %s22, 0
      %p107 = por %p105, %p106
      %s108 = ssub.s32 %s24, %s45
      %p109 = scmp.eq.s32.totalorder %s108, 0
      %s111 = sadd.s32 %s110, 1
      %s112 = scalar_select %p109, %s110, %s111
      %p115 = pneg %p109
      %p116 = scmp.eq.s32.totalorder %s16, 1
      %p117 = por %p115, %p116
      %p118 = scmp.ne.s32.totalorder %s110, %s113
      %p119 = scmp.eq.s32.totalorder %s16, 0
      %p120 = por %p118, %p119
      %p121 = scmp.ne.s32.totalorder %s110, %s113
      %p122 = scmp.eq.s32.totalorder %s21, 1
      %p123 = por %p121, %p122
      %p124 = scmp.ne.s32.totalorder %s113, %s114
      %p125 = scmp.eq.s32.totalorder %s21, 0
      %p126 = por %p124, %p125
      %p127 = scmp.ne.s32.totalorder %s113, %s114
      %p128 = scmp.eq.s32.totalorder %s22, 1
      %p129 = por %p127, %p128
      %p131 = scmp.ne.s32.totalorder %s114, %s130
      %p132 = scmp.eq.s32.totalorder %s22, 0
      %p133 = por %p131, %p132
      %s134 = ssub.s32 %s23, %s49
      %s135 = ssub.s32 %s24, %s45
      %s136 = sor.u32 %s134, %s135
      %s137 = ssub.s32 %s25, %s41
      %s138 = sor.u32 %s136, %s137
      %p139 = scmp.eq.s32.totalorder %s138, 0
      %s141 = sadd.s32 %s140, 1
      %s142 = scalar_select %p139, %s140, %s141
      %p145 = pneg %p139
      %p146 = scmp.eq.s32.totalorder %s16, 1
      %p147 = por %p145, %p146
      %p148 = scmp.ne.s32.totalorder %s140, %s143
      %p149 = scmp.eq.s32.totalorder %s16, 0
      %p150 = por %p148, %p149
      %p151 = scmp.ne.s32.totalorder %s140, %s143
      %p152 = scmp.eq.s32.totalorder %s21, 1
      %p153 = por %p151, %p152
      %p154 = scmp.ne.s32.totalorder %s143, %s144
      %p155 = scmp.eq.s32.totalorder %s21, 0
      %p156 = por %p154, %p155
      %p157 = scmp.ne.s32.totalorder %s143, %s144
      %p158 = scmp.eq.s32.totalorder %s22, 1
      %p159 = por %p157, %p158
      %p161 = scmp.ne.s32.totalorder %s144, %s160
      %p162 = scmp.eq.s32.totalorder %s22, 0
      %p163 = por %p161, %p162
      %p164 = scmp.le.s32.totalorder 1, %s16
      %p165 = scmp.lt.s32.totalorder %s16, 3
      %p166 = pnand %p164, %p165
      %p167 = pneg %p166
      // Predicated region
      $region9: #{tpu_custom_call.1} parent=5 // pred_check
        _
      $region10: #{tpu_custom_call.1} parent=5 // pred_check_branch
        %169 = sbr.rel (%p166) target = $region12
      $region11: #{tpu_custom_call.1} parent=5 // pred_region
        %s170 = ssub.s32 %s16, 1
        // Predicated region
        $region13: #{tpu_custom_call.1} parent=11 // pred_check
          %p171 = pneg %p100
        $region14: #{tpu_custom_call.1} parent=11 // pred_check_branch
          %173 = sbr.rel (%p171) target = $region16
        $region15: #{tpu_custom_call.1} parent=11 // pred_region
          %s174 = smul.u32 40, %s28
          %s175 = smul.u32 3, %s30
          %177 = vsyncadd [#allocation6], 0
          %s178 = smul.addr %s174, 3
          %s179 = sadd.s32 %s175, %s178
          %s180 = smul.addr %s179, 8
          %s181 = scalar_lea.hbm %s1, %s180
          %s182 = sshll.u32 %s181, 4
          %s183 = int_to_ptr.hbm [resolvable:$true] %s182
          %s184 = sshll.u32 [#allocation5], 4
          %s185 = int_to_ptr.vmem [resolvable:$true] %s184
          %190 = dma.hbm_to_vmem [thread:$0]  %s183, 15360, %s185, [#allocation6], 384, 384, 24
        $region16: #{tpu_custom_call.1} parent=11 // pred_fallthru
          _
        // Predicated region
        $region17: #{tpu_custom_call.1} parent=11 // pred_check
          %p191 = pneg %p126
        $region18: #{tpu_custom_call.1} parent=11 // pred_check_branch
          %193 = sbr.rel (%p191) target = $region20
        $region19: #{tpu_custom_call.1} parent=11 // pred_region
          %s194 = smul.u32 40, %s28
          %p195 = scmp.lt.s32.totalorder %s194, 39
          %s196 = scalar_select %p195, %s194, 39
          %s197 = smul.addr %s196, 8
          %s198 = scalar_lea.vmem %s2, %s197
          %s199 = smul.u32 40, %s28
        $region20: #{tpu_custom_call.1} parent=11 // pred_fallthru
          _
      $region12: #{tpu_custom_call.1} parent=5 // pred_fallthru
        _
      %p200 = scmp.lt.s32.totalorder %s16, 2
      // Predicated region
      $region21: #{tpu_custom_call.1} parent=5 // pred_check
        %p201 = pneg %p200
      $region22: #{tpu_custom_call.1} parent=5 // pred_check_branch
        %203 = sbr.rel (%p201) target = $region24
      $region23: #{tpu_custom_call.1} parent=5 // pred_region
        // Predicated region
        $region25: #{tpu_custom_call.1} parent=23 // pred_check
          %p204 = pneg %p66
        $region26: #{tpu_custom_call.1} parent=23 // pred_check_branch
          %206 = sbr.rel (%p204) target = $region28
        $region27: #{tpu_custom_call.1} parent=23 // pred_region
          %s207 = sand.u32 %s56, 1
          %s208 = scalar_lea.sflag [#allocation3], %s207
          %s209 = sand.u32 %s56, 1
          %s210 = smul.addr %s209, 1536
          %s211 = scalar_lea.vmem [#allocation2], %s210
          %s212 = smul.u32 64, %s25
          %s213 = smul.u32 3, %s26
          %215 = vsyncadd %s208, 0
          %s216 = smul.addr %s212, 3
          %s217 = sadd.s32 %s213, %s216
          %s218 = smul.addr %s23, 192
          %s219 = sadd.s32 %s217, %s218
          %s220 = smul.addr %s219, 8
          %s221 = scalar_lea.hbm %s0, %s220
          %s222 = sshll.u32 %s221, 4
          %s223 = int_to_ptr.hbm [resolvable:$true] %s222
          %s224 = sshll.u32 %s211, 4
          %s225 = int_to_ptr.vmem [resolvable:$true] %s224
          %230 = dma.hbm_to_vmem [thread:$0]  %s223, 24576, %s225, %s208, 384, 384, 24
        $region28: #{tpu_custom_call.1} parent=23 // pred_fallthru
          _
      $region24: #{tpu_custom_call.1} parent=5 // pred_fallthru
        _
      %p231 = scmp.le.s32.totalorder 1, %s16
      %p232 = scmp.lt.s32.totalorder %s16, 3
      %p233 = pnand %p231, %p232
      %p234 = pneg %p233
      // Predicated region
      $region29: #{tpu_custom_call.1} parent=5 // pred_check
        _
      $region30: #{tpu_custom_call.1} parent=5 // pred_check_branch
        %236 = sbr.rel (%p233) target = $region32
      $region31: #{tpu_custom_call.1} parent=5 // pred_region
        %s237 = ssub.s32 %s16, 1
        %s238 = sand.u32 %s59, 1
        %s239 = scalar_lea.sflag [#allocation3], %s238
        %s240 = sand.u32 %s59, 1
        %s241 = smul.addr %s240, 1536
        %s242 = scalar_lea.vmem [#allocation2], %s241
        // Predicated region
        $region33: #{tpu_custom_call.1} parent=31 // pred_check
          %p243 = pneg %p72
        $region34: #{tpu_custom_call.1} parent=31 // pred_check_branch
          %245 = sbr.rel (%p243) target = $region36
        $region35: #{tpu_custom_call.1} parent=31 // pred_region
          %247 = dma.done %s239, 24576
        $region36: #{tpu_custom_call.1} parent=31 // pred_fallthru
          _
        // Predicated region
        $region37: #{tpu_custom_call.1} parent=31 // pred_check
          %p248 = pneg %p100
        $region38: #{tpu_custom_call.1} parent=31 // pred_check_branch
          %250 = sbr.rel (%p248) target = $region40
        $region39: #{tpu_custom_call.1} parent=31 // pred_region
          %252 = dma.done [#allocation6], 15360
        $region40: #{tpu_custom_call.1} parent=31 // pred_fallthru
          _
        %s253 = sand.u32 %s59, 1
        %s254 = scalar_lea.sflag [#allocation3], %s253
        %s255 = sand.u32 %s59, 1
        %s256 = smul.addr %s255, 1536
        %s257 = scalar_lea.vmem [#allocation2], %s256
        %p258 = pneg %p72
        %p259 = pneg %p69
        %p260 = pneg %p100
        %p261 = pneg %p97
        %s262 = smul.u32 40, %s28
        %p263 = scmp.lt.s32.totalorder %s262, 39
        %s264 = scalar_select %p263, %s262, 39
        %s265 = smul.addr %s264, 8
        %s266 = scalar_lea.vmem %s2, %s265
        %p267 = pneg %p126
        %p268 = pneg %p123
        %p269 = pneg %p156
        %p270 = pneg %p153
        %s271 = sand.u32 %s143, 1
        %s272 = scalar_lea.sflag [#allocation4], %s271
        %s273 = sand.u32 %s143, 1
        %s274 = smul.addr %s273, 1280
        %s275 = scalar_lea.vmem [#allocation7], %s274
        %s276 = smul.u32 64, %s29
        %s277 = smul.u32 3, %s30
        %s278 = smul.u32 40, %s28
        %s279 = smul.u32 3, %s30
        %s280 = smul.u32 40, %s28
        %p281 = scmp.lt.s32.totalorder %s280, 39
        %s282 = scalar_select %p281, %s280, 39
        %s283 = smul.addr %s282, 8
        %s284 = scalar_lea.vmem %s2, %s283
        %s285 = smul.u32 40, %s28
        %s286 = smul.u32 40, %s28
        %s287 = smul.u32 4, %s29
        %v288 = vld [vmem:[#allocation5] sm:$0xff]
        %v289 = vld [vmem:[#allocation5 + $0x8] sm:$0xff]
        %v290 = vld [vmem:[#allocation5 + $0x10] sm:$0xff]
        %v291 = vld [vmem:[#allocation5 + $0x18] sm:$0xff]
        %v292 = vld [vmem:[#allocation5 + $0x20] sm:$0xff]
        %v293 = vld [vmem:[#allocation5 + $0x28] sm:$0xff]
        %v294 = vld [vmem:[#allocation5 + $0x30] sm:$0xff]
        %v295 = vld [vmem:[#allocation5 + $0x38] sm:$0xff]
        %v296 = vld [vmem:[#allocation5 + $0x40] sm:$0xff]
        %v297 = vld [vmem:[#allocation5 + $0x48] sm:$0xff]
        %v298 = vld [vmem:[#allocation5 + $0x50] sm:$0xff]
        %v299 = vld [vmem:[#allocation5 + $0x58] sm:$0xff]
        %v300 = vld [vmem:[#allocation5 + $0x60] sm:$0xff]
        %v301 = vld [vmem:[#allocation5 + $0x68] sm:$0xff]
        %v302 = vld [vmem:[#allocation5 + $0x70] sm:$0xff]
        %v303 = vld [vmem:[#allocation5 + $0x78] sm:$0xff]
        %v304 = vld [vmem:[#allocation5 + $0x80] sm:$0xff]
        %v305 = vld [vmem:[#allocation5 + $0x88] sm:$0xff]
        %v306 = vld [vmem:[#allocation5 + $0x90] sm:$0xff]
        %v307 = vld [vmem:[#allocation5 + $0x98] sm:$0xff]
        %v308 = vld [vmem:[#allocation5 + $0xa0] sm:$0xff]
        %v309 = vld [vmem:[#allocation5 + $0xa8] sm:$0xff]
        %v310 = vld [vmem:[#allocation5 + $0xb0] sm:$0xff]
        %v311 = vld [vmem:[#allocation5 + $0xb8] sm:$0xff]
        %v312 = vld [vmem:[#allocation5 + $0xc0] sm:$0xff]
        %v313 = vld [vmem:[#allocation5 + $0xc8] sm:$0xff]
        %v314 = vld [vmem:[#allocation5 + $0xd0] sm:$0xff]
        %v315 = vld [vmem:[#allocation5 + $0xd8] sm:$0xff]
        %v316 = vld [vmem:[#allocation5 + $0xe0] sm:$0xff]
        %v317 = vld [vmem:[#allocation5 + $0xe8] sm:$0xff]
        %v318 = vld [vmem:[#allocation5 + $0xf0] sm:$0xff]
        %v319 = vld [vmem:[#allocation5 + $0xf8] sm:$0xff]
        %v320 = vld [vmem:[#allocation5 + $0x100] sm:$0xff]
        %v321 = vld [vmem:[#allocation5 + $0x108] sm:$0xff]
        %v322 = vld [vmem:[#allocation5 + $0x110] sm:$0xff]
        %v323 = vld [vmem:[#allocation5 + $0x118] sm:$0xff]
        %v324 = vld [vmem:[#allocation5 + $0x120] sm:$0xff]
        %v325 = vld [vmem:[#allocation5 + $0x128] sm:$0xff]
        %v326 = vld [vmem:[#allocation5 + $0x130] sm:$0xff]
        %v327 = vld [vmem:[#allocation5 + $0x138] sm:$0xff]
        %v328 = vld [vmem:[#allocation5 + $0x140] sm:$0xff]
        %v329 = vld [vmem:[#allocation5 + $0x148] sm:$0xff]
        %v330 = vld [vmem:[#allocation5 + $0x150] sm:$0xff]
        %v331 = vld [vmem:[#allocation5 + $0x158] sm:$0xff]
        %v332 = vld [vmem:[#allocation5 + $0x160] sm:$0xff]
        %v333 = vld [vmem:[#allocation5 + $0x168] sm:$0xff]
        %v334 = vld [vmem:[#allocation5 + $0x170] sm:$0xff]
        %v335 = vld [vmem:[#allocation5 + $0x178] sm:$0xff]
        %v336 = vld [vmem:[#allocation5 + $0x180] sm:$0xff]
        %v337 = vld [vmem:[#allocation5 + $0x188] sm:$0xff]
        %v338 = vld [vmem:[#allocation5 + $0x190] sm:$0xff]
        %v339 = vld [vmem:[#allocation5 + $0x198] sm:$0xff]
        %v340 = vld [vmem:[#allocation5 + $0x1a0] sm:$0xff]
        %v341 = vld [vmem:[#allocation5 + $0x1a8] sm:$0xff]
        %v342 = vld [vmem:[#allocation5 + $0x1b0] sm:$0xff]
        %v343 = vld [vmem:[#allocation5 + $0x1b8] sm:$0xff]
        %v344 = vld [vmem:[#allocation5 + $0x1c0] sm:$0xff]
        %v345 = vld [vmem:[#allocation5 + $0x1c8] sm:$0xff]
        %v346 = vld [vmem:[#allocation5 + $0x1d0] sm:$0xff]
        %v347 = vld [vmem:[#allocation5 + $0x1d8] sm:$0xff]
        %v348 = vld [vmem:[#allocation5 + $0x1e0] sm:$0xff]
        %v349 = vld [vmem:[#allocation5 + $0x1e8] sm:$0xff]
        %v350 = vld [vmem:[#allocation5 + $0x1f0] sm:$0xff]
        %v351 = vld [vmem:[#allocation5 + $0x1f8] sm:$0xff]
        %v352 = vld [vmem:[#allocation5 + $0x200] sm:$0xff]
        %v353 = vld [vmem:[#allocation5 + $0x208] sm:$0xff]
        %v354 = vld [vmem:[#allocation5 + $0x210] sm:$0xff]
        %v355 = vld [vmem:[#allocation5 + $0x218] sm:$0xff]
        %v356 = vld [vmem:[#allocation5 + $0x220] sm:$0xff]
        %v357 = vld [vmem:[#allocation5 + $0x228] sm:$0xff]
        %v358 = vld [vmem:[#allocation5 + $0x230] sm:$0xff]
        %v359 = vld [vmem:[#allocation5 + $0x238] sm:$0xff]
        %v360 = vld [vmem:[#allocation5 + $0x240] sm:$0xff]
        %v361 = vld [vmem:[#allocation5 + $0x248] sm:$0xff]
        %v362 = vld [vmem:[#allocation5 + $0x250] sm:$0xff]
        %v363 = vld [vmem:[#allocation5 + $0x258] sm:$0xff]
        %v364 = vld [vmem:[#allocation5 + $0x260] sm:$0xff]
        %v365 = vld [vmem:[#allocation5 + $0x268] sm:$0xff]
        %v366 = vld [vmem:[#allocation5 + $0x270] sm:$0xff]
        %v367 = vld [vmem:[#allocation5 + $0x278] sm:$0xff]
        %v368 = vld [vmem:[#allocation5 + $0x280] sm:$0xff]
        %v369 = vld [vmem:[#allocation5 + $0x288] sm:$0xff]
        %v370 = vld [vmem:[#allocation5 + $0x290] sm:$0xff]
        %v371 = vld [vmem:[#allocation5 + $0x298] sm:$0xff]
        %v372 = vld [vmem:[#allocation5 + $0x2a0] sm:$0xff]
        %v373 = vld [vmem:[#allocation5 + $0x2a8] sm:$0xff]
        %v374 = vld [vmem:[#allocation5 + $0x2b0] sm:$0xff]
        %v375 = vld [vmem:[#allocation5 + $0x2b8] sm:$0xff]
        %v376 = vld [vmem:[#allocation5 + $0x2c0] sm:$0xff]
        %v377 = vld [vmem:[#allocation5 + $0x2c8] sm:$0xff]
        %v378 = vld [vmem:[#allocation5 + $0x2d0] sm:$0xff]
        %v379 = vld [vmem:[#allocation5 + $0x2d8] sm:$0xff]
        %v380 = vld [vmem:[#allocation5 + $0x2e0] sm:$0xff]
        %v381 = vld [vmem:[#allocation5 + $0x2e8] sm:$0xff]
        %v382 = vld [vmem:[#allocation5 + $0x2f0] sm:$0xff]
        %v383 = vld [vmem:[#allocation5 + $0x2f8] sm:$0xff]
        %v384 = vld [vmem:[#allocation5 + $0x300] sm:$0xff]
        %v385 = vld [vmem:[#allocation5 + $0x308] sm:$0xff]
        %v386 = vld [vmem:[#allocation5 + $0x310] sm:$0xff]
        %v387 = vld [vmem:[#allocation5 + $0x318] sm:$0xff]
        %v388 = vld [vmem:[#allocation5 + $0x320] sm:$0xff]
        %v389 = vld [vmem:[#allocation5 + $0x328] sm:$0xff]
        %v390 = vld [vmem:[#allocation5 + $0x330] sm:$0xff]
        %v391 = vld [vmem:[#allocation5 + $0x338] sm:$0xff]
        %v392 = vld [vmem:[#allocation5 + $0x340] sm:$0xff]
        %v393 = vld [vmem:[#allocation5 + $0x348] sm:$0xff]
        %v394 = vld [vmem:[#allocation5 + $0x350] sm:$0xff]
        %v395 = vld [vmem:[#allocation5 + $0x358] sm:$0xff]
        %v396 = vld [vmem:[#allocation5 + $0x360] sm:$0xff]
        %v397 = vld [vmem:[#allocation5 + $0x368] sm:$0xff]
        %v398 = vld [vmem:[#allocation5 + $0x370] sm:$0xff]
        %v399 = vld [vmem:[#allocation5 + $0x378] sm:$0xff]
        %v400 = vld [vmem:[#allocation5 + $0x380] sm:$0xff]
        %v401 = vld [vmem:[#allocation5 + $0x388] sm:$0xff]
        %v402 = vld [vmem:[#allocation5 + $0x390] sm:$0xff]
        %v403 = vld [vmem:[#allocation5 + $0x398] sm:$0xff]
        %v404 = vld [vmem:[#allocation5 + $0x3a0] sm:$0xff]
        %v405 = vld [vmem:[#allocation5 + $0x3a8] sm:$0xff]
        %v406 = vld [vmem:[#allocation5 + $0x3b0] sm:$0xff]
        %v407 = vld [vmem:[#allocation5 + $0x3b8] sm:$0xff]
        %v408 = vld [vmem:[%s242] sm:$0xff]
        %v409 = vld [vmem:[%s242 + $0x8] sm:$0xff]
        %v410 = vld [vmem:[%s242 + $0x10] sm:$0xff]
        %v411 = vld [vmem:[%s242 + $0x18] sm:$0xff]
        %v412 = vld [vmem:[%s242 + $0x20] sm:$0xff]
        %v413 = vld [vmem:[%s242 + $0x28] sm:$0xff]
        %v414 = vld [vmem:[%s242 + $0x30] sm:$0xff]
        %v415 = vld [vmem:[%s242 + $0x38] sm:$0xff]
        %v416 = vld [vmem:[%s242 + $0x40] sm:$0xff]
        %v417 = vld [vmem:[%s242 + $0x48] sm:$0xff]
        %v418 = vld [vmem:[%s242 + $0x50] sm:$0xff]
        %v419 = vld [vmem:[%s242 + $0x58] sm:$0xff]
        %v420 = vld [vmem:[%s242 + $0x60] sm:$0xff]
        %v421 = vld [vmem:[%s242 + $0x68] sm:$0xff]
        %v422 = vld [vmem:[%s242 + $0x70] sm:$0xff]
        %v423 = vld [vmem:[%s242 + $0x78] sm:$0xff]
        %v424 = vld [vmem:[%s242 + $0x80] sm:$0xff]
        %v425 = vld [vmem:[%s242 + $0x88] sm:$0xff]
        %v426 = vld [vmem:[%s242 + $0x90] sm:$0xff]
        %v427 = vld [vmem:[%s242 + $0x98] sm:$0xff]
        %v428 = vld [vmem:[%s242 + $0xa0] sm:$0xff]
        %v429 = vld [vmem:[%s242 + $0xa8] sm:$0xff]
        %v430 = vld [vmem:[%s242 + $0xb0] sm:$0xff]
        %v431 = vld [vmem:[%s242 + $0xb8] sm:$0xff]
        %v432 = vld [vmem:[%s242 + $0xc0] sm:$0xff]
        %v433 = vld [vmem:[%s242 + $0xc8] sm:$0xff]
        %v434 = vld [vmem:[%s242 + $0xd0] sm:$0xff]
        %v435 = vld [vmem:[%s242 + $0xd8] sm:$0xff]
        %v436 = vld [vmem:[%s242 + $0xe0] sm:$0xff]
        %v437 = vld [vmem:[%s242 + $0xe8] sm:$0xff]
        %v438 = vld [vmem:[%s242 + $0xf0] sm:$0xff]
        %v439 = vld [vmem:[%s242 + $0xf8] sm:$0xff]
        %v440 = vld [vmem:[%s242 + $0x100] sm:$0xff]
        %v441 = vld [vmem:[%s242 + $0x108] sm:$0xff]
        %v442 = vld [vmem:[%s242 + $0x110] sm:$0xff]
        %v443 = vld [vmem:[%s242 + $0x118] sm:$0xff]
        %v444 = vld [vmem:[%s242 + $0x120] sm:$0xff]
        %v445 = vld [vmem:[%s242 + $0x128] sm:$0xff]
        %v446 = vld [vmem:[%s242 + $0x130] sm:$0xff]
        %v447 = vld [vmem:[%s242 + $0x138] sm:$0xff]
        %v448 = vld [vmem:[%s242 + $0x140] sm:$0xff]
        %v449 = vld [vmem:[%s242 + $0x148] sm:$0xff]
        %v450 = vld [vmem:[%s242 + $0x150] sm:$0xff]
        %v451 = vld [vmem:[%s242 + $0x158] sm:$0xff]
        %v452 = vld [vmem:[%s242 + $0x160] sm:$0xff]
        %v453 = vld [vmem:[%s242 + $0x168] sm:$0xff]
        %v454 = vld [vmem:[%s242 + $0x170] sm:$0xff]
        %v455 = vld [vmem:[%s242 + $0x178] sm:$0xff]
        %v456 = vld [vmem:[%s242 + $0x180] sm:$0xff]
        %v457 = vld [vmem:[%s242 + $0x188] sm:$0xff]
        %v458 = vld [vmem:[%s242 + $0x190] sm:$0xff]
        %v459 = vld [vmem:[%s242 + $0x198] sm:$0xff]
        %v460 = vld [vmem:[%s242 + $0x1a0] sm:$0xff]
        %v461 = vld [vmem:[%s242 + $0x1a8] sm:$0xff]
        %v462 = vld [vmem:[%s242 + $0x1b0] sm:$0xff]
        %v463 = vld [vmem:[%s242 + $0x1b8] sm:$0xff]
        %v464 = vld [vmem:[%s242 + $0x1c0] sm:$0xff]
        %v465 = vld [vmem:[%s242 + $0x1c8] sm:$0xff]
        %v466 = vld [vmem:[%s242 + $0x1d0] sm:$0xff]
        %v467 = vld [vmem:[%s242 + $0x1d8] sm:$0xff]
        %v468 = vld [vmem:[%s242 + $0x1e0] sm:$0xff]
        %v469 = vld [vmem:[%s242 + $0x1e8] sm:$0xff]
        %v470 = vld [vmem:[%s242 + $0x1f0] sm:$0xff]
        %v471 = vld [vmem:[%s242 + $0x1f8] sm:$0xff]
        %v472 = vld [vmem:[%s242 + $0x200] sm:$0xff]
        %v473 = vld [vmem:[%s242 + $0x208] sm:$0xff]
        %v474 = vld [vmem:[%s242 + $0x210] sm:$0xff]
        %v475 = vld [vmem:[%s242 + $0x218] sm:$0xff]
        %v476 = vld [vmem:[%s242 + $0x220] sm:$0xff]
        %v477 = vld [vmem:[%s242 + $0x228] sm:$0xff]
        %v478 = vld [vmem:[%s242 + $0x230] sm:$0xff]
        %v479 = vld [vmem:[%s242 + $0x238] sm:$0xff]
        %v480 = vld [vmem:[%s242 + $0x240] sm:$0xff]
        %v481 = vld [vmem:[%s242 + $0x248] sm:$0xff]
        %v482 = vld [vmem:[%s242 + $0x250] sm:$0xff]
        %v483 = vld [vmem:[%s242 + $0x258] sm:$0xff]
        %v484 = vld [vmem:[%s242 + $0x260] sm:$0xff]
        %v485 = vld [vmem:[%s242 + $0x268] sm:$0xff]
        %v486 = vld [vmem:[%s242 + $0x270] sm:$0xff]
        %v487 = vld [vmem:[%s242 + $0x278] sm:$0xff]
        %v488 = vld [vmem:[%s242 + $0x280] sm:$0xff]
        %v489 = vld [vmem:[%s242 + $0x288] sm:$0xff]
        %v490 = vld [vmem:[%s242 + $0x290] sm:$0xff]
        %v491 = vld [vmem:[%s242 + $0x298] sm:$0xff]
        %v492 = vld [vmem:[%s242 + $0x2a0] sm:$0xff]
        %v493 = vld [vmem:[%s242 + $0x2a8] sm:$0xff]
        %v494 = vld [vmem:[%s242 + $0x2b0] sm:$0xff]
        %v495 = vld [vmem:[%s242 + $0x2b8] sm:$0xff]
        %v496 = vld [vmem:[%s242 + $0x2c0] sm:$0xff]
        %v497 = vld [vmem:[%s242 + $0x2c8] sm:$0xff]
        %v498 = vld [vmem:[%s242 + $0x2d0] sm:$0xff]
        %v499 = vld [vmem:[%s242 + $0x2d8] sm:$0xff]
        %v500 = vld [vmem:[%s242 + $0x2e0] sm:$0xff]
        %v501 = vld [vmem:[%s242 + $0x2e8] sm:$0xff]
        %v502 = vld [vmem:[%s242 + $0x2f0] sm:$0xff]
        %v503 = vld [vmem:[%s242 + $0x2f8] sm:$0xff]
        %v504 = vld [vmem:[%s242 + $0x300] sm:$0xff]
        %v505 = vld [vmem:[%s242 + $0x308] sm:$0xff]
        %v506 = vld [vmem:[%s242 + $0x310] sm:$0xff]
        %v507 = vld [vmem:[%s242 + $0x318] sm:$0xff]
        %v508 = vld [vmem:[%s242 + $0x320] sm:$0xff]
        %v509 = vld [vmem:[%s242 + $0x328] sm:$0xff]
        %v510 = vld [vmem:[%s242 + $0x330] sm:$0xff]
        %v511 = vld [vmem:[%s242 + $0x338] sm:$0xff]
        %v512 = vld [vmem:[%s242 + $0x340] sm:$0xff]
        %v513 = vld [vmem:[%s242 + $0x348] sm:$0xff]
        %v514 = vld [vmem:[%s242 + $0x350] sm:$0xff]
        %v515 = vld [vmem:[%s242 + $0x358] sm:$0xff]
        %v516 = vld [vmem:[%s242 + $0x360] sm:$0xff]
        %v517 = vld [vmem:[%s242 + $0x368] sm:$0xff]
        %v518 = vld [vmem:[%s242 + $0x370] sm:$0xff]
        %v519 = vld [vmem:[%s242 + $0x378] sm:$0xff]
        %v520 = vld [vmem:[%s242 + $0x380] sm:$0xff]
        %v521 = vld [vmem:[%s242 + $0x388] sm:$0xff]
        %v522 = vld [vmem:[%s242 + $0x390] sm:$0xff]
        %v523 = vld [vmem:[%s242 + $0x398] sm:$0xff]
        %v524 = vld [vmem:[%s242 + $0x3a0] sm:$0xff]
        %v525 = vld [vmem:[%s242 + $0x3a8] sm:$0xff]
        %v526 = vld [vmem:[%s242 + $0x3b0] sm:$0xff]
        %v527 = vld [vmem:[%s242 + $0x3b8] sm:$0xff]
        %v528 = vld [vmem:[%s242 + $0x3c0] sm:$0xff]
        %v529 = vld [vmem:[%s242 + $0x3c8] sm:$0xff]
        %v530 = vld [vmem:[%s242 + $0x3d0] sm:$0xff]
        %v531 = vld [vmem:[%s242 + $0x3d8] sm:$0xff]
        %v532 = vld [vmem:[%s242 + $0x3e0] sm:$0xff]
        %v533 = vld [vmem:[%s242 + $0x3e8] sm:$0xff]
        %v534 = vld [vmem:[%s242 + $0x3f0] sm:$0xff]
        %v535 = vld [vmem:[%s242 + $0x3f8] sm:$0xff]
        %v536 = vld [vmem:[%s242 + $0x400] sm:$0xff]
        %v537 = vld [vmem:[%s242 + $0x408] sm:$0xff]
        %v538 = vld [vmem:[%s242 + $0x410] sm:$0xff]
        %v539 = vld [vmem:[%s242 + $0x418] sm:$0xff]
        %v540 = vld [vmem:[%s242 + $0x420] sm:$0xff]
        %v541 = vld [vmem:[%s242 + $0x428] sm:$0xff]
        %v542 = vld [vmem:[%s242 + $0x430] sm:$0xff]
        %v543 = vld [vmem:[%s242 + $0x438] sm:$0xff]
        %v544 = vld [vmem:[%s242 + $0x440] sm:$0xff]
        %v545 = vld [vmem:[%s242 + $0x448] sm:$0xff]
        %v546 = vld [vmem:[%s242 + $0x450] sm:$0xff]
        %v547 = vld [vmem:[%s242 + $0x458] sm:$0xff]
        %v548 = vld [vmem:[%s242 + $0x460] sm:$0xff]
        %v549 = vld [vmem:[%s242 + $0x468] sm:$0xff]
        %v550 = vld [vmem:[%s242 + $0x470] sm:$0xff]
        %v551 = vld [vmem:[%s242 + $0x478] sm:$0xff]
        %v552 = vld [vmem:[%s242 + $0x480] sm:$0xff]
        %v553 = vld [vmem:[%s242 + $0x488] sm:$0xff]
        %v554 = vld [vmem:[%s242 + $0x490] sm:$0xff]
        %v555 = vld [vmem:[%s242 + $0x498] sm:$0xff]
        %v556 = vld [vmem:[%s242 + $0x4a0] sm:$0xff]
        %v557 = vld [vmem:[%s242 + $0x4a8] sm:$0xff]
        %v558 = vld [vmem:[%s242 + $0x4b0] sm:$0xff]
        %v559 = vld [vmem:[%s242 + $0x4b8] sm:$0xff]
        %v560 = vld [vmem:[%s242 + $0x4c0] sm:$0xff]
        %v561 = vld [vmem:[%s242 + $0x4c8] sm:$0xff]
        %v562 = vld [vmem:[%s242 + $0x4d0] sm:$0xff]
        %v563 = vld [vmem:[%s242 + $0x4d8] sm:$0xff]
        %v564 = vld [vmem:[%s242 + $0x4e0] sm:$0xff]
        %v565 = vld [vmem:[%s242 + $0x4e8] sm:$0xff]
        %v566 = vld [vmem:[%s242 + $0x4f0] sm:$0xff]
        %v567 = vld [vmem:[%s242 + $0x4f8] sm:$0xff]
        %v568 = vld [vmem:[%s242 + $0x500] sm:$0xff]
        %v569 = vld [vmem:[%s242 + $0x508] sm:$0xff]
        %v570 = vld [vmem:[%s242 + $0x510] sm:$0xff]
        %v571 = vld [vmem:[%s242 + $0x518] sm:$0xff]
        %v572 = vld [vmem:[%s242 + $0x520] sm:$0xff]
        %v573 = vld [vmem:[%s242 + $0x528] sm:$0xff]
        %v574 = vld [vmem:[%s242 + $0x530] sm:$0xff]
        %v575 = vld [vmem:[%s242 + $0x538] sm:$0xff]
        %v576 = vld [vmem:[%s242 + $0x540] sm:$0xff]
        %v577 = vld [vmem:[%s242 + $0x548] sm:$0xff]
        %v578 = vld [vmem:[%s242 + $0x550] sm:$0xff]
        %v579 = vld [vmem:[%s242 + $0x558] sm:$0xff]
        %v580 = vld [vmem:[%s242 + $0x560] sm:$0xff]
        %v581 = vld [vmem:[%s242 + $0x568] sm:$0xff]
        %v582 = vld [vmem:[%s242 + $0x570] sm:$0xff]
        %v583 = vld [vmem:[%s242 + $0x578] sm:$0xff]
        %v584 = vld [vmem:[%s242 + $0x580] sm:$0xff]
        %v585 = vld [vmem:[%s242 + $0x588] sm:$0xff]
        %v586 = vld [vmem:[%s242 + $0x590] sm:$0xff]
        %v587 = vld [vmem:[%s242 + $0x598] sm:$0xff]
        %v588 = vld [vmem:[%s242 + $0x5a0] sm:$0xff]
        %v589 = vld [vmem:[%s242 + $0x5a8] sm:$0xff]
        %v590 = vld [vmem:[%s242 + $0x5b0] sm:$0xff]
        %v591 = vld [vmem:[%s242 + $0x5b8] sm:$0xff]
        %v592 = vld [vmem:[%s242 + $0x5c0] sm:$0xff]
        %v593 = vld [vmem:[%s242 + $0x5c8] sm:$0xff]
        %v594 = vld [vmem:[%s242 + $0x5d0] sm:$0xff]
        %v595 = vld [vmem:[%s242 + $0x5d8] sm:$0xff]
        %v596 = vld [vmem:[%s242 + $0x5e0] sm:$0xff]
        %v597 = vld [vmem:[%s242 + $0x5e8] sm:$0xff]
        %v598 = vld [vmem:[%s242 + $0x5f0] sm:$0xff]
        %v599 = vld [vmem:[%s242 + $0x5f8] sm:$0xff]
        %600 = vmatpush.xpose.msra.mxu0 %v453
        %601 = vmatpush.xpose.msra.mxu0 %v450
        %602 = vmatpush.xpose.msra.mxu0 %v447
        %603 = vmatpush.xpose.msra.mxu0 %v444
        %604 = vmatpush.xpose.msra.mxu0 %v441
        %605 = vmatpush.xpose.msra.mxu0 %v438
        %606 = vmatpush.xpose.msra.mxu0 %v435
        %607 = vmatpush.xpose.msra.mxu0 %v432
        %608 = vmatpush.xpose.msra.mxu0 %v429
        %609 = vmatpush.xpose.msra.mxu0 %v426
        %610 = vmatpush.xpose.msra.mxu0 %v423
        %611 = vmatpush.xpose.msra.mxu0 %v420
        %612 = vmatpush.xpose.msra.mxu0 %v417
        %613 = vmatpush.xpose.msra.mxu0 %v414
        %614 = vmatpush.xpose.msra.mxu0 %v411
        %615 = vmatpush.xpose.msra.mxu0 %v408
        %616 = vmatmul.f32.gmra.mxu0 %v288
        %v617 = vpop.f32.mrf.mxu0
        %v618 = vadd.f32 0.0, %v617
        %619 = vmatmul.f32.gmra.mxu0 %v291
        %v620 = vpop.f32.mrf.mxu0
        %v621 = vadd.f32 0.0, %v620
        %622 = vmatmul.f32.gmra.mxu0 %v294
        %v623 = vpop.f32.mrf.mxu0
        %v624 = vadd.f32 0.0, %v623
        %625 = vmatmul.f32.gmra.mxu0 %v297
        %v626 = vpop.f32.mrf.mxu0
        %v627 = vadd.f32 0.0, %v626
        %628 = vmatmul.f32.gmra.mxu0 %v300
        %v629 = vpop.f32.mrf.mxu0
        %v630 = vadd.f32 0.0, %v629
        %631 = vmatmul.f32.gmra.mxu0 %v303
        %v632 = vpop.f32.mrf.mxu0
        %v633 = vadd.f32 0.0, %v632
        %634 = vmatmul.f32.gmra.mxu0 %v306
        %v635 = vpop.f32.mrf.mxu0
        %v636 = vadd.f32 0.0, %v635
        %637 = vmatmul.f32.gmra.mxu0 %v309
        %v638 = vpop.f32.mrf.mxu0
        %v639 = vadd.f32 0.0, %v638
        %640 = vmatmul.f32.gmra.mxu0 %v312
        %v641 = vpop.f32.mrf.mxu0
        %v642 = vadd.f32 0.0, %v641
        %643 = vmatmul.f32.gmra.mxu0 %v315
        %v644 = vpop.f32.mrf.mxu0
        %v645 = vadd.f32 0.0, %v644
        %646 = vmatmul.f32.gmra.mxu0 %v318
        %v647 = vpop.f32.mrf.mxu0
        %v648 = vadd.f32 0.0, %v647
        %649 = vmatmul.f32.gmra.mxu0 %v321
        %v650 = vpop.f32.mrf.mxu0
        %v651 = vadd.f32 0.0, %v650
        %652 = vmatmul.f32.gmra.mxu0 %v324
        %v653 = vpop.f32.mrf.mxu0
        %v654 = vadd.f32 0.0, %v653
        %655 = vmatmul.f32.gmra.mxu0 %v327
        %v656 = vpop.f32.mrf.mxu0
        %v657 = vadd.f32 0.0, %v656
        %658 = vmatmul.f32.gmra.mxu0 %v330
        %v659 = vpop.f32.mrf.mxu0
        %v660 = vadd.f32 0.0, %v659
        %661 = vmatmul.f32.gmra.mxu0 %v333
        %v662 = vpop.f32.mrf.mxu0
        %v663 = vadd.f32 0.0, %v662
        %664 = vmatmul.f32.gmra.mxu0 %v336
        %v665 = vpop.f32.mrf.mxu0
        %v666 = vadd.f32 0.0, %v665
        %667 = vmatmul.f32.gmra.mxu0 %v339
        %v668 = vpop.f32.mrf.mxu0
        %v669 = vadd.f32 0.0, %v668
        %670 = vmatmul.f32.gmra.mxu0 %v342
        %v671 = vpop.f32.mrf.mxu0
        %v672 = vadd.f32 0.0, %v671
        %673 = vmatmul.f32.gmra.mxu0 %v345
        %v674 = vpop.f32.mrf.mxu0
        %v675 = vadd.f32 0.0, %v674
        %676 = vmatmul.f32.gmra.mxu0 %v348
        %v677 = vpop.f32.mrf.mxu0
        %v678 = vadd.f32 0.0, %v677
        %679 = vmatmul.f32.gmra.mxu0 %v351
        %v680 = vpop.f32.mrf.mxu0
        %v681 = vadd.f32 0.0, %v680
        %682 = vmatmul.f32.gmra.mxu0 %v354
        %v683 = vpop.f32.mrf.mxu0
        %v684 = vadd.f32 0.0, %v683
        %685 = vmatmul.f32.gmra.mxu0 %v357
        %v686 = vpop.f32.mrf.mxu0
        %v687 = vadd.f32 0.0, %v686
        %688 = vmatmul.f32.gmra.mxu0 %v360
        %v689 = vpop.f32.mrf.mxu0
        %v690 = vadd.f32 0.0, %v689
        %691 = vmatmul.f32.gmra.mxu0 %v363
        %v692 = vpop.f32.mrf.mxu0
        %v693 = vadd.f32 0.0, %v692
        %694 = vmatmul.f32.gmra.mxu0 %v366
        %v695 = vpop.f32.mrf.mxu0
        %v696 = vadd.f32 0.0, %v695
        %697 = vmatmul.f32.gmra.mxu0 %v369
        %v698 = vpop.f32.mrf.mxu0
        %v699 = vadd.f32 0.0, %v698
        %700 = vmatmul.f32.gmra.mxu0 %v372
        %v701 = vpop.f32.mrf.mxu0
        %v702 = vadd.f32 0.0, %v701
        %703 = vmatmul.f32.gmra.mxu0 %v375
        %v704 = vpop.f32.mrf.mxu0
        %v705 = vadd.f32 0.0, %v704
        %706 = vmatmul.f32.gmra.mxu0 %v378
        %v707 = vpop.f32.mrf.mxu0
        %v708 = vadd.f32 0.0, %v707
        %709 = vmatmul.f32.gmra.mxu0 %v381
        %v710 = vpop.f32.mrf.mxu0
        %v711 = vadd.f32 0.0, %v710
        %712 = vmatmul.f32.gmra.mxu0 %v384
        %v713 = vpop.f32.mrf.mxu0
        %v714 = vadd.f32 0.0, %v713
        %715 = vmatmul.f32.gmra.mxu0 %v387
        %v716 = vpop.f32.mrf.mxu0
        %v717 = vadd.f32 0.0, %v716
        %718 = vmatmul.f32.gmra.mxu0 %v390
        %v719 = vpop.f32.mrf.mxu0
        %v720 = vadd.f32 0.0, %v719
        %721 = vmatmul.f32.gmra.mxu0 %v393
        %v722 = vpop.f32.mrf.mxu0
        %v723 = vadd.f32 0.0, %v722
        %724 = vmatmul.f32.gmra.mxu0 %v396
        %v725 = vpop.f32.mrf.mxu0
        %v726 = vadd.f32 0.0, %v725
        %727 = vmatmul.f32.gmra.mxu0 %v399
        %v728 = vpop.f32.mrf.mxu0
        %v729 = vadd.f32 0.0, %v728
        %730 = vmatmul.f32.gmra.mxu0 %v402
        %v731 = vpop.f32.mrf.mxu0
        %v732 = vadd.f32 0.0, %v731
        %733 = vmatmul.f32.gmra.mxu0 %v405
        %v734 = vpop.f32.mrf.mxu0
        %v735 = vadd.f32 0.0, %v734
        %736 = vdwg.mxu0
        %737 = vmatpush.xpose.msra.mxu0 %v454
        %738 = vmatpush.xpose.msra.mxu0 %v451
        %739 = vmatpush.xpose.msra.mxu0 %v448
        %740 = vmatpush.xpose.msra.mxu0 %v445
        %741 = vmatpush.xpose.msra.mxu0 %v442
        %742 = vmatpush.xpose.msra.mxu0 %v439
        %743 = vmatpush.xpose.msra.mxu0 %v436
        %744 = vmatpush.xpose.msra.mxu0 %v433
        %745 = vmatpush.xpose.msra.mxu0 %v430
        %746 = vmatpush.xpose.msra.mxu0 %v427
        %747 = vmatpush.xpose.msra.mxu0 %v424
        %748 = vmatpush.xpose.msra.mxu0 %v421
        %749 = vmatpush.xpose.msra.mxu0 %v418
        %750 = vmatpush.xpose.msra.mxu0 %v415
        %751 = vmatpush.xpose.msra.mxu0 %v412
        %752 = vmatpush.xpose.msra.mxu0 %v409
        %753 = vmatmul.f32.gmra.mxu0 %v289
        %v754 = vpop.f32.mrf.mxu0
        %v755 = vadd.f32 %v618, %v754
        %756 = vmatmul.f32.gmra.mxu0 %v292
        %v757 = vpop.f32.mrf.mxu0
        %v758 = vadd.f32 %v621, %v757
        %759 = vmatmul.f32.gmra.mxu0 %v295
        %v760 = vpop.f32.mrf.mxu0
        %v761 = vadd.f32 %v624, %v760
        %762 = vmatmul.f32.gmra.mxu0 %v298
        %v763 = vpop.f32.mrf.mxu0
        %v764 = vadd.f32 %v627, %v763
        %765 = vmatmul.f32.gmra.mxu0 %v301
        %v766 = vpop.f32.mrf.mxu0
        %v767 = vadd.f32 %v630, %v766
        %768 = vmatmul.f32.gmra.mxu0 %v304
        %v769 = vpop.f32.mrf.mxu0
        %v770 = vadd.f32 %v633, %v769
        %771 = vmatmul.f32.gmra.mxu0 %v307
        %v772 = vpop.f32.mrf.mxu0
        %v773 = vadd.f32 %v636, %v772
        %774 = vmatmul.f32.gmra.mxu0 %v310
        %v775 = vpop.f32.mrf.mxu0
        %v776 = vadd.f32 %v639, %v775
        %777 = vmatmul.f32.gmra.mxu0 %v313
        %v778 = vpop.f32.mrf.mxu0
        %v779 = vadd.f32 %v642, %v778
        %780 = vmatmul.f32.gmra.mxu0 %v316
        %v781 = vpop.f32.mrf.mxu0
        %v782 = vadd.f32 %v645, %v781
        %783 = vmatmul.f32.gmra.mxu0 %v319
        %v784 = vpop.f32.mrf.mxu0
        %v785 = vadd.f32 %v648, %v784
        %786 = vmatmul.f32.gmra.mxu0 %v322
        %v787 = vpop.f32.mrf.mxu0
        %v788 = vadd.f32 %v651, %v787
        %789 = vmatmul.f32.gmra.mxu0 %v325
        %v790 = vpop.f32.mrf.mxu0
        %v791 = vadd.f32 %v654, %v790
        %792 = vmatmul.f32.gmra.mxu0 %v328
        %v793 = vpop.f32.mrf.mxu0
        %v794 = vadd.f32 %v657, %v793
        %795 = vmatmul.f32.gmra.mxu0 %v331
        %v796 = vpop.f32.mrf.mxu0
        %v797 = vadd.f32 %v660, %v796
        %798 = vmatmul.f32.gmra.mxu0 %v334
        %v799 = vpop.f32.mrf.mxu0
        %v800 = vadd.f32 %v663, %v799
        %801 = vmatmul.f32.gmra.mxu0 %v337
        %v802 = vpop.f32.mrf.mxu0
        %v803 = vadd.f32 %v666, %v802
        %804 = vmatmul.f32.gmra.mxu0 %v340
        %v805 = vpop.f32.mrf.mxu0
        %v806 = vadd.f32 %v669, %v805
        %807 = vmatmul.f32.gmra.mxu0 %v343
        %v808 = vpop.f32.mrf.mxu0
        %v809 = vadd.f32 %v672, %v808
        %810 = vmatmul.f32.gmra.mxu0 %v346
        %v811 = vpop.f32.mrf.mxu0
        %v812 = vadd.f32 %v675, %v811
        %813 = vmatmul.f32.gmra.mxu0 %v349
        %v814 = vpop.f32.mrf.mxu0
        %v815 = vadd.f32 %v678, %v814
        %816 = vmatmul.f32.gmra.mxu0 %v352
        %v817 = vpop.f32.mrf.mxu0
        %v818 = vadd.f32 %v681, %v817
        %819 = vmatmul.f32.gmra.mxu0 %v355
        %v820 = vpop.f32.mrf.mxu0
        %v821 = vadd.f32 %v684, %v820
        %822 = vmatmul.f32.gmra.mxu0 %v358
        %v823 = vpop.f32.mrf.mxu0
        %v824 = vadd.f32 %v687, %v823
        %825 = vmatmul.f32.gmra.mxu0 %v361
        %v826 = vpop.f32.mrf.mxu0
        %v827 = vadd.f32 %v690, %v826
        %828 = vmatmul.f32.gmra.mxu0 %v364
        %v829 = vpop.f32.mrf.mxu0
        %v830 = vadd.f32 %v693, %v829
        %831 = vmatmul.f32.gmra.mxu0 %v367
        %v832 = vpop.f32.mrf.mxu0
        %v833 = vadd.f32 %v696, %v832
        %834 = vmatmul.f32.gmra.mxu0 %v370
        %v835 = vpop.f32.mrf.mxu0
        %v836 = vadd.f32 %v699, %v835
        %837 = vmatmul.f32.gmra.mxu0 %v373
        %v838 = vpop.f32.mrf.mxu0
        %v839 = vadd.f32 %v702, %v838
        %840 = vmatmul.f32.gmra.mxu0 %v376
        %v841 = vpop.f32.mrf.mxu0
        %v842 = vadd.f32 %v705, %v841
        %843 = vmatmul.f32.gmra.mxu0 %v379
        %v844 = vpop.f32.mrf.mxu0
        %v845 = vadd.f32 %v708, %v844
        %846 = vmatmul.f32.gmra.mxu0 %v382
        %v847 = vpop.f32.mrf.mxu0
        %v848 = vadd.f32 %v711, %v847
        %849 = vmatmul.f32.gmra.mxu0 %v385
        %v850 = vpop.f32.mrf.mxu0
        %v851 = vadd.f32 %v714, %v850
        %852 = vmatmul.f32.gmra.mxu0 %v388
        %v853 = vpop.f32.mrf.mxu0
        %v854 = vadd.f32 %v717, %v853
        %855 = vmatmul.f32.gmra.mxu0 %v391
        %v856 = vpop.f32.mrf.mxu0
        %v857 = vadd.f32 %v720, %v856
        %858 = vmatmul.f32.gmra.mxu0 %v394
        %v859 = vpop.f32.mrf.mxu0
        %v860 = vadd.f32 %v723, %v859
        %861 = vmatmul.f32.gmra.mxu0 %v397
        %v862 = vpop.f32.mrf.mxu0
        %v863 = vadd.f32 %v726, %v862
        %864 = vmatmul.f32.gmra.mxu0 %v400
        %v865 = vpop.f32.mrf.mxu0
        %v866 = vadd.f32 %v729, %v865
        %867 = vmatmul.f32.gmra.mxu0 %v403
        %v868 = vpop.f32.mrf.mxu0
        %v869 = vadd.f32 %v732, %v868
        %870 = vmatmul.f32.gmra.mxu0 %v406
        %v871 = vpop.f32.mrf.mxu0
        %v872 = vadd.f32 %v735, %v871
        %873 = vdwg.mxu0
        %874 = vmatpush.xpose.msra.mxu0 %v455
        %875 = vmatpush.xpose.msra.mxu0 %v452
        %876 = vmatpush.xpose.msra.mxu0 %v449
        %877 = vmatpush.xpose.msra.mxu0 %v446
        %878 = vmatpush.xpose.msra.mxu0 %v443
        %879 = vmatpush.xpose.msra.mxu0 %v440
        %880 = vmatpush.xpose.msra.mxu0 %v437
        %881 = vmatpush.xpose.msra.mxu0 %v434
        %882 = vmatpush.xpose.msra.mxu0 %v431
        %883 = vmatpush.xpose.msra.mxu0 %v428
        %884 = vmatpush.xpose.msra.mxu0 %v425
        %885 = vmatpush.xpose.msra.mxu0 %v422
        %886 = vmatpush.xpose.msra.mxu0 %v419
        %887 = vmatpush.xpose.msra.mxu0 %v416
        %888 = vmatpush.xpose.msra.mxu0 %v413
        %889 = vmatpush.xpose.msra.mxu0 %v410
        %890 = vmatmul.f32.gmra.mxu0 %v290
        %v891 = vpop.f32.mrf.mxu0
        %v892 = vadd.f32 %v755, %v891
        %893 = vmatmul.f32.gmra.mxu0 %v293
        %v894 = vpop.f32.mrf.mxu0
        %v895 = vadd.f32 %v758, %v894
        %896 = vmatmul.f32.gmra.mxu0 %v296
        %v897 = vpop.f32.mrf.mxu0
        %v898 = vadd.f32 %v761, %v897
        %899 = vmatmul.f32.gmra.mxu0 %v299
        %v900 = vpop.f32.mrf.mxu0
        %v901 = vadd.f32 %v764, %v900
        %902 = vmatmul.f32.gmra.mxu0 %v302
        %v903 = vpop.f32.mrf.mxu0
        %v904 = vadd.f32 %v767, %v903
        %905 = vmatmul.f32.gmra.mxu0 %v305
        %v906 = vpop.f32.mrf.mxu0
        %v907 = vadd.f32 %v770, %v906
        %908 = vmatmul.f32.gmra.mxu0 %v308
        %v909 = vpop.f32.mrf.mxu0
        %v910 = vadd.f32 %v773, %v909
        %911 = vmatmul.f32.gmra.mxu0 %v311
        %v912 = vpop.f32.mrf.mxu0
        %v913 = vadd.f32 %v776, %v912
        %914 = vmatmul.f32.gmra.mxu0 %v314
        %v915 = vpop.f32.mrf.mxu0
        %v916 = vadd.f32 %v779, %v915
        %917 = vmatmul.f32.gmra.mxu0 %v317
        %v918 = vpop.f32.mrf.mxu0
        %v919 = vadd.f32 %v782, %v918
        %920 = vmatmul.f32.gmra.mxu0 %v320
        %v921 = vpop.f32.mrf.mxu0
        %v922 = vadd.f32 %v785, %v921
        %923 = vmatmul.f32.gmra.mxu0 %v323
        %v924 = vpop.f32.mrf.mxu0
        %v925 = vadd.f32 %v788, %v924
        %926 = vmatmul.f32.gmra.mxu0 %v326
        %v927 = vpop.f32.mrf.mxu0
        %v928 = vadd.f32 %v791, %v927
        %929 = vmatmul.f32.gmra.mxu0 %v329
        %v930 = vpop.f32.mrf.mxu0
        %v931 = vadd.f32 %v794, %v930
        %932 = vmatmul.f32.gmra.mxu0 %v332
        %v933 = vpop.f32.mrf.mxu0
        %v934 = vadd.f32 %v797, %v933
        %935 = vmatmul.f32.gmra.mxu0 %v335
        %v936 = vpop.f32.mrf.mxu0
        %v937 = vadd.f32 %v800, %v936
        %938 = vmatmul.f32.gmra.mxu0 %v338
        %v939 = vpop.f32.mrf.mxu0
        %v940 = vadd.f32 %v803, %v939
        %941 = vmatmul.f32.gmra.mxu0 %v341
        %v942 = vpop.f32.mrf.mxu0
        %v943 = vadd.f32 %v806, %v942
        %944 = vmatmul.f32.gmra.mxu0 %v344
        %v945 = vpop.f32.mrf.mxu0
        %v946 = vadd.f32 %v809, %v945
        %947 = vmatmul.f32.gmra.mxu0 %v347
        %v948 = vpop.f32.mrf.mxu0
        %v949 = vadd.f32 %v812, %v948
        %950 = vmatmul.f32.gmra.mxu0 %v350
        %v951 = vpop.f32.mrf.mxu0
        %v952 = vadd.f32 %v815, %v951
        %953 = vmatmul.f32.gmra.mxu0 %v353
        %v954 = vpop.f32.mrf.mxu0
        %v955 = vadd.f32 %v818, %v954
        %956 = vmatmul.f32.gmra.mxu0 %v356
        %v957 = vpop.f32.mrf.mxu0
        %v958 = vadd.f32 %v821, %v957
        %959 = vmatmul.f32.gmra.mxu0 %v359
        %v960 = vpop.f32.mrf.mxu0
        %v961 = vadd.f32 %v824, %v960
        %962 = vmatmul.f32.gmra.mxu0 %v362
        %v963 = vpop.f32.mrf.mxu0
        %v964 = vadd.f32 %v827, %v963
        %965 = vmatmul.f32.gmra.mxu0 %v365
        %v966 = vpop.f32.mrf.mxu0
        %v967 = vadd.f32 %v830, %v966
        %968 = vmatmul.f32.gmra.mxu0 %v368
        %v969 = vpop.f32.mrf.mxu0
        %v970 = vadd.f32 %v833, %v969
        %971 = vmatmul.f32.gmra.mxu0 %v371
        %v972 = vpop.f32.mrf.mxu0
        %v973 = vadd.f32 %v836, %v972
        %974 = vmatmul.f32.gmra.mxu0 %v374
        %v975 = vpop.f32.mrf.mxu0
        %v976 = vadd.f32 %v839, %v975
        %977 = vmatmul.f32.gmra.mxu0 %v377
        %v978 = vpop.f32.mrf.mxu0
        %v979 = vadd.f32 %v842, %v978
        %980 = vmatmul.f32.gmra.mxu0 %v380
        %v981 = vpop.f32.mrf.mxu0
        %v982 = vadd.f32 %v845, %v981
        %983 = vmatmul.f32.gmra.mxu0 %v383
        %v984 = vpop.f32.mrf.mxu0
        %v985 = vadd.f32 %v848, %v984
        %986 = vmatmul.f32.gmra.mxu0 %v386
        %v987 = vpop.f32.mrf.mxu0
        %v988 = vadd.f32 %v851, %v987
        %989 = vmatmul.f32.gmra.mxu0 %v389
        %v990 = vpop.f32.mrf.mxu0
        %v991 = vadd.f32 %v854, %v990
        %992 = vmatmul.f32.gmra.mxu0 %v392
        %v993 = vpop.f32.mrf.mxu0
        %v994 = vadd.f32 %v857, %v993
        %995 = vmatmul.f32.gmra.mxu0 %v395
        %v996 = vpop.f32.mrf.mxu0
        %v997 = vadd.f32 %v860, %v996
        %998 = vmatmul.f32.gmra.mxu0 %v398
        %v999 = vpop.f32.mrf.mxu0
        %v1000 = vadd.f32 %v863, %v999
        %1001 = vmatmul.f32.gmra.mxu0 %v401
        %v1002 = vpop.f32.mrf.mxu0
        %v1003 = vadd.f32 %v866, %v1002
        %1004 = vmatmul.f32.gmra.mxu0 %v404
        %v1005 = vpop.f32.mrf.mxu0
        %v1006 = vadd.f32 %v869, %v1005
        %1007 = vmatmul.f32.gmra.mxu0 %v407
        %v1008 = vpop.f32.mrf.mxu0
        %v1009 = vadd.f32 %v872, %v1008
        %1010 = vdwg.mxu0
        %1011 = vmatpush.xpose.msra.mxu0 %v501
        %1012 = vmatpush.xpose.msra.mxu0 %v498
        %1013 = vmatpush.xpose.msra.mxu0 %v495
        %1014 = vmatpush.xpose.msra.mxu0 %v492
        %1015 = vmatpush.xpose.msra.mxu0 %v489
        %1016 = vmatpush.xpose.msra.mxu0 %v486
        %1017 = vmatpush.xpose.msra.mxu0 %v483
        %1018 = vmatpush.xpose.msra.mxu0 %v480
        %1019 = vmatpush.xpose.msra.mxu0 %v477
        %1020 = vmatpush.xpose.msra.mxu0 %v474
        %1021 = vmatpush.xpose.msra.mxu0 %v471
        %1022 = vmatpush.xpose.msra.mxu0 %v468
        %1023 = vmatpush.xpose.msra.mxu0 %v465
        %1024 = vmatpush.xpose.msra.mxu0 %v462
        %1025 = vmatpush.xpose.msra.mxu0 %v459
        %1026 = vmatpush.xpose.msra.mxu0 %v456
        %1027 = vmatmul.f32.gmra.mxu0 %v288
        %v1028 = vpop.f32.mrf.mxu0
        %v1029 = vadd.f32 0.0, %v1028
        %1030 = vmatmul.f32.gmra.mxu0 %v291
        %v1031 = vpop.f32.mrf.mxu0
        %v1032 = vadd.f32 0.0, %v1031
        %1033 = vmatmul.f32.gmra.mxu0 %v294
        %v1034 = vpop.f32.mrf.mxu0
        %v1035 = vadd.f32 0.0, %v1034
        %1036 = vmatmul.f32.gmra.mxu0 %v297
        %v1037 = vpop.f32.mrf.mxu0
        %v1038 = vadd.f32 0.0, %v1037
        %1039 = vmatmul.f32.gmra.mxu0 %v300
        %v1040 = vpop.f32.mrf.mxu0
        %v1041 = vadd.f32 0.0, %v1040
        %1042 = vmatmul.f32.gmra.mxu0 %v303
        %v1043 = vpop.f32.mrf.mxu0
        %v1044 = vadd.f32 0.0, %v1043
        %1045 = vmatmul.f32.gmra.mxu0 %v306
        %v1046 = vpop.f32.mrf.mxu0
        %v1047 = vadd.f32 0.0, %v1046
        %1048 = vmatmul.f32.gmra.mxu0 %v309
        %v1049 = vpop.f32.mrf.mxu0
        %v1050 = vadd.f32 0.0, %v1049
        %1051 = vmatmul.f32.gmra.mxu0 %v312
        %v1052 = vpop.f32.mrf.mxu0
        %v1053 = vadd.f32 0.0, %v1052
        %1054 = vmatmul.f32.gmra.mxu0 %v315
        %v1055 = vpop.f32.mrf.mxu0
        %v1056 = vadd.f32 0.0, %v1055
        %1057 = vmatmul.f32.gmra.mxu0 %v318
        %v1058 = vpop.f32.mrf.mxu0
        %v1059 = vadd.f32 0.0, %v1058
        %1060 = vmatmul.f32.gmra.mxu0 %v321
        %v1061 = vpop.f32.mrf.mxu0
        %v1062 = vadd.f32 0.0, %v1061
        %1063 = vmatmul.f32.gmra.mxu0 %v324
        %v1064 = vpop.f32.mrf.mxu0
        %v1065 = vadd.f32 0.0, %v1064
        %1066 = vmatmul.f32.gmra.mxu0 %v327
        %v1067 = vpop.f32.mrf.mxu0
        %v1068 = vadd.f32 0.0, %v1067
        %1069 = vmatmul.f32.gmra.mxu0 %v330
        %v1070 = vpop.f32.mrf.mxu0
        %v1071 = vadd.f32 0.0, %v1070
        %1072 = vmatmul.f32.gmra.mxu0 %v333
        %v1073 = vpop.f32.mrf.mxu0
        %v1074 = vadd.f32 0.0, %v1073
        %1075 = vmatmul.f32.gmra.mxu0 %v336
        %v1076 = vpop.f32.mrf.mxu0
        %v1077 = vadd.f32 0.0, %v1076
        %1078 = vmatmul.f32.gmra.mxu0 %v339
        %v1079 = vpop.f32.mrf.mxu0
        %v1080 = vadd.f32 0.0, %v1079
        %1081 = vmatmul.f32.gmra.mxu0 %v342
        %v1082 = vpop.f32.mrf.mxu0
        %v1083 = vadd.f32 0.0, %v1082
        %1084 = vmatmul.f32.gmra.mxu0 %v345
        %v1085 = vpop.f32.mrf.mxu0
        %v1086 = vadd.f32 0.0, %v1085
        %1087 = vmatmul.f32.gmra.mxu0 %v348
        %v1088 = vpop.f32.mrf.mxu0
        %v1089 = vadd.f32 0.0, %v1088
        %1090 = vmatmul.f32.gmra.mxu0 %v351
        %v1091 = vpop.f32.mrf.mxu0
        %v1092 = vadd.f32 0.0, %v1091
        %1093 = vmatmul.f32.gmra.mxu0 %v354
        %v1094 = vpop.f32.mrf.mxu0
        %v1095 = vadd.f32 0.0, %v1094
        %1096 = vmatmul.f32.gmra.mxu0 %v357
        %v1097 = vpop.f32.mrf.mxu0
        %v1098 = vadd.f32 0.0, %v1097
        %1099 = vmatmul.f32.gmra.mxu0 %v360
        %v1100 = vpop.f32.mrf.mxu0
        %v1101 = vadd.f32 0.0, %v1100
        %1102 = vmatmul.f32.gmra.mxu0 %v363
        %v1103 = vpop.f32.mrf.mxu0
        %v1104 = vadd.f32 0.0, %v1103
        %1105 = vmatmul.f32.gmra.mxu0 %v366
        %v1106 = vpop.f32.mrf.mxu0
        %v1107 = vadd.f32 0.0, %v1106
        %1108 = vmatmul.f32.gmra.mxu0 %v369
        %v1109 = vpop.f32.mrf.mxu0
        %v1110 = vadd.f32 0.0, %v1109
        %1111 = vmatmul.f32.gmra.mxu0 %v372
        %v1112 = vpop.f32.mrf.mxu0
        %v1113 = vadd.f32 0.0, %v1112
        %1114 = vmatmul.f32.gmra.mxu0 %v375
        %v1115 = vpop.f32.mrf.mxu0
        %v1116 = vadd.f32 0.0, %v1115
        %1117 = vmatmul.f32.gmra.mxu0 %v378
        %v1118 = vpop.f32.mrf.mxu0
        %v1119 = vadd.f32 0.0, %v1118
        %1120 = vmatmul.f32.gmra.mxu0 %v381
        %v1121 = vpop.f32.mrf.mxu0
        %v1122 = vadd.f32 0.0, %v1121
        %1123 = vmatmul.f32.gmra.mxu0 %v384
        %v1124 = vpop.f32.mrf.mxu0
        %v1125 = vadd.f32 0.0, %v1124
        %1126 = vmatmul.f32.gmra.mxu0 %v387
        %v1127 = vpop.f32.mrf.mxu0
        %v1128 = vadd.f32 0.0, %v1127
        %1129 = vmatmul.f32.gmra.mxu0 %v390
        %v1130 = vpop.f32.mrf.mxu0
        %v1131 = vadd.f32 0.0, %v1130
        %1132 = vmatmul.f32.gmra.mxu0 %v393
        %v1133 = vpop.f32.mrf.mxu0
        %v1134 = vadd.f32 0.0, %v1133
        %1135 = vmatmul.f32.gmra.mxu0 %v396
        %v1136 = vpop.f32.mrf.mxu0
        %v1137 = vadd.f32 0.0, %v1136
        %1138 = vmatmul.f32.gmra.mxu0 %v399
        %v1139 = vpop.f32.mrf.mxu0
        %v1140 = vadd.f32 0.0, %v1139
        %1141 = vmatmul.f32.gmra.mxu0 %v402
        %v1142 = vpop.f32.mrf.mxu0
        %v1143 = vadd.f32 0.0, %v1142
        %1144 = vmatmul.f32.gmra.mxu0 %v405
        %v1145 = vpop.f32.mrf.mxu0
        %v1146 = vadd.f32 0.0, %v1145
        %1147 = vdwg.mxu0
        %1148 = vmatpush.xpose.msra.mxu0 %v502
        %1149 = vmatpush.xpose.msra.mxu0 %v499
        %1150 = vmatpush.xpose.msra.mxu0 %v496
        %1151 = vmatpush.xpose.msra.mxu0 %v493
        %1152 = vmatpush.xpose.msra.mxu0 %v490
        %1153 = vmatpush.xpose.msra.mxu0 %v487
        %1154 = vmatpush.xpose.msra.mxu0 %v484
        %1155 = vmatpush.xpose.msra.mxu0 %v481
        %1156 = vmatpush.xpose.msra.mxu0 %v478
        %1157 = vmatpush.xpose.msra.mxu0 %v475
        %1158 = vmatpush.xpose.msra.mxu0 %v472
        %1159 = vmatpush.xpose.msra.mxu0 %v469
        %1160 = vmatpush.xpose.msra.mxu0 %v466
        %1161 = vmatpush.xpose.msra.mxu0 %v463
        %1162 = vmatpush.xpose.msra.mxu0 %v460
        %1163 = vmatpush.xpose.msra.mxu0 %v457
        %1164 = vmatmul.f32.gmra.mxu0 %v289
        %v1165 = vpop.f32.mrf.mxu0
        %v1166 = vadd.f32 %v1029, %v1165
        %1167 = vmatmul.f32.gmra.mxu0 %v292
        %v1168 = vpop.f32.mrf.mxu0
        %v1169 = vadd.f32 %v1032, %v1168
        %1170 = vmatmul.f32.gmra.mxu0 %v295
        %v1171 = vpop.f32.mrf.mxu0
        %v1172 = vadd.f32 %v1035, %v1171
        %1173 = vmatmul.f32.gmra.mxu0 %v298
        %v1174 = vpop.f32.mrf.mxu0
        %v1175 = vadd.f32 %v1038, %v1174
        %1176 = vmatmul.f32.gmra.mxu0 %v301
        %v1177 = vpop.f32.mrf.mxu0
        %v1178 = vadd.f32 %v1041, %v1177
        %1179 = vmatmul.f32.gmra.mxu0 %v304
        %v1180 = vpop.f32.mrf.mxu0
        %v1181 = vadd.f32 %v1044, %v1180
        %1182 = vmatmul.f32.gmra.mxu0 %v307
        %v1183 = vpop.f32.mrf.mxu0
        %v1184 = vadd.f32 %v1047, %v1183
        %1185 = vmatmul.f32.gmra.mxu0 %v310
        %v1186 = vpop.f32.mrf.mxu0
        %v1187 = vadd.f32 %v1050, %v1186
        %1188 = vmatmul.f32.gmra.mxu0 %v313
        %v1189 = vpop.f32.mrf.mxu0
        %v1190 = vadd.f32 %v1053, %v1189
        %1191 = vmatmul.f32.gmra.mxu0 %v316
        %v1192 = vpop.f32.mrf.mxu0
        %v1193 = vadd.f32 %v1056, %v1192
        %1194 = vmatmul.f32.gmra.mxu0 %v319
        %v1195 = vpop.f32.mrf.mxu0
        %v1196 = vadd.f32 %v1059, %v1195
        %1197 = vmatmul.f32.gmra.mxu0 %v322
        %v1198 = vpop.f32.mrf.mxu0
        %v1199 = vadd.f32 %v1062, %v1198
        %1200 = vmatmul.f32.gmra.mxu0 %v325
        %v1201 = vpop.f32.mrf.mxu0
        %v1202 = vadd.f32 %v1065, %v1201
        %1203 = vmatmul.f32.gmra.mxu0 %v328
        %v1204 = vpop.f32.mrf.mxu0
        %v1205 = vadd.f32 %v1068, %v1204
        %1206 = vmatmul.f32.gmra.mxu0 %v331
        %v1207 = vpop.f32.mrf.mxu0
        %v1208 = vadd.f32 %v1071, %v1207
        %1209 = vmatmul.f32.gmra.mxu0 %v334
        %v1210 = vpop.f32.mrf.mxu0
        %v1211 = vadd.f32 %v1074, %v1210
        %1212 = vmatmul.f32.gmra.mxu0 %v337
        %v1213 = vpop.f32.mrf.mxu0
        %v1214 = vadd.f32 %v1077, %v1213
        %1215 = vmatmul.f32.gmra.mxu0 %v340
        %v1216 = vpop.f32.mrf.mxu0
        %v1217 = vadd.f32 %v1080, %v1216
        %1218 = vmatmul.f32.gmra.mxu0 %v343
        %v1219 = vpop.f32.mrf.mxu0
        %v1220 = vadd.f32 %v1083, %v1219
        %1221 = vmatmul.f32.gmra.mxu0 %v346
        %v1222 = vpop.f32.mrf.mxu0
        %v1223 = vadd.f32 %v1086, %v1222
        %1224 = vmatmul.f32.gmra.mxu0 %v349
        %v1225 = vpop.f32.mrf.mxu0
        %v1226 = vadd.f32 %v1089, %v1225
        %1227 = vmatmul.f32.gmra.mxu0 %v352
        %v1228 = vpop.f32.mrf.mxu0
        %v1229 = vadd.f32 %v1092, %v1228
        %1230 = vmatmul.f32.gmra.mxu0 %v355
        %v1231 = vpop.f32.mrf.mxu0
        %v1232 = vadd.f32 %v1095, %v1231
        %1233 = vmatmul.f32.gmra.mxu0 %v358
        %v1234 = vpop.f32.mrf.mxu0
        %v1235 = vadd.f32 %v1098, %v1234
        %1236 = vmatmul.f32.gmra.mxu0 %v361
        %v1237 = vpop.f32.mrf.mxu0
        %v1238 = vadd.f32 %v1101, %v1237
        %1239 = vmatmul.f32.gmra.mxu0 %v364
        %v1240 = vpop.f32.mrf.mxu0
        %v1241 = vadd.f32 %v1104, %v1240
        %1242 = vmatmul.f32.gmra.mxu0 %v367
        %v1243 = vpop.f32.mrf.mxu0
        %v1244 = vadd.f32 %v1107, %v1243
        %1245 = vmatmul.f32.gmra.mxu0 %v370
        %v1246 = vpop.f32.mrf.mxu0
        %v1247 = vadd.f32 %v1110, %v1246
        %1248 = vmatmul.f32.gmra.mxu0 %v373
        %v1249 = vpop.f32.mrf.mxu0
        %v1250 = vadd.f32 %v1113, %v1249
        %1251 = vmatmul.f32.gmra.mxu0 %v376
        %v1252 = vpop.f32.mrf.mxu0
        %v1253 = vadd.f32 %v1116, %v1252
        %1254 = vmatmul.f32.gmra.mxu0 %v379
        %v1255 = vpop.f32.mrf.mxu0
        %v1256 = vadd.f32 %v1119, %v1255
        %1257 = vmatmul.f32.gmra.mxu0 %v382
        %v1258 = vpop.f32.mrf.mxu0
        %v1259 = vadd.f32 %v1122, %v1258
        %1260 = vmatmul.f32.gmra.mxu0 %v385
        %v1261 = vpop.f32.mrf.mxu0
        %v1262 = vadd.f32 %v1125, %v1261
        %1263 = vmatmul.f32.gmra.mxu0 %v388
        %v1264 = vpop.f32.mrf.mxu0
        %v1265 = vadd.f32 %v1128, %v1264
        %1266 = vmatmul.f32.gmra.mxu0 %v391
        %v1267 = vpop.f32.mrf.mxu0
        %v1268 = vadd.f32 %v1131, %v1267
        %1269 = vmatmul.f32.gmra.mxu0 %v394
        %v1270 = vpop.f32.mrf.mxu0
        %v1271 = vadd.f32 %v1134, %v1270
        %1272 = vmatmul.f32.gmra.mxu0 %v397
        %v1273 = vpop.f32.mrf.mxu0
        %v1274 = vadd.f32 %v1137, %v1273
        %1275 = vmatmul.f32.gmra.mxu0 %v400
        %v1276 = vpop.f32.mrf.mxu0
        %v1277 = vadd.f32 %v1140, %v1276
        %1278 = vmatmul.f32.gmra.mxu0 %v403
        %v1279 = vpop.f32.mrf.mxu0
        %v1280 = vadd.f32 %v1143, %v1279
        %1281 = vmatmul.f32.gmra.mxu0 %v406
        %v1282 = vpop.f32.mrf.mxu0
        %v1283 = vadd.f32 %v1146, %v1282
        %1284 = vdwg.mxu0
        %1285 = vmatpush.xpose.msra.mxu0 %v503
        %1286 = vmatpush.xpose.msra.mxu0 %v500
        %1287 = vmatpush.xpose.msra.mxu0 %v497
        %1288 = vmatpush.xpose.msra.mxu0 %v494
        %1289 = vmatpush.xpose.msra.mxu0 %v491
        %1290 = vmatpush.xpose.msra.mxu0 %v488
        %1291 = vmatpush.xpose.msra.mxu0 %v485
        %1292 = vmatpush.xpose.msra.mxu0 %v482
        %1293 = vmatpush.xpose.msra.mxu0 %v479
        %1294 = vmatpush.xpose.msra.mxu0 %v476
        %1295 = vmatpush.xpose.msra.mxu0 %v473
        %1296 = vmatpush.xpose.msra.mxu0 %v470
        %1297 = vmatpush.xpose.msra.mxu0 %v467
        %1298 = vmatpush.xpose.msra.mxu0 %v464
        %1299 = vmatpush.xpose.msra.mxu0 %v461
        %1300 = vmatpush.xpose.msra.mxu0 %v458
        %1301 = vmatmul.f32.gmra.mxu0 %v290
        %v1302 = vpop.f32.mrf.mxu0
        %v1303 = vadd.f32 %v1166, %v1302
        %1304 = vmatmul.f32.gmra.mxu0 %v293
        %v1305 = vpop.f32.mrf.mxu0
        %v1306 = vadd.f32 %v1169, %v1305
        %1307 = vmatmul.f32.gmra.mxu0 %v296
        %v1308 = vpop.f32.mrf.mxu0
        %v1309 = vadd.f32 %v1172, %v1308
        %1310 = vmatmul.f32.gmra.mxu0 %v299
        %v1311 = vpop.f32.mrf.mxu0
        %v1312 = vadd.f32 %v1175, %v1311
        %1313 = vmatmul.f32.gmra.mxu0 %v302
        %v1314 = vpop.f32.mrf.mxu0
        %v1315 = vadd.f32 %v1178, %v1314
        %1316 = vmatmul.f32.gmra.mxu0 %v305
        %v1317 = vpop.f32.mrf.mxu0
        %v1318 = vadd.f32 %v1181, %v1317
        %1319 = vmatmul.f32.gmra.mxu0 %v308
        %v1320 = vpop.f32.mrf.mxu0
        %v1321 = vadd.f32 %v1184, %v1320
        %1322 = vmatmul.f32.gmra.mxu0 %v311
        %v1323 = vpop.f32.mrf.mxu0
        %v1324 = vadd.f32 %v1187, %v1323
        %1325 = vmatmul.f32.gmra.mxu0 %v314
        %v1326 = vpop.f32.mrf.mxu0
        %v1327 = vadd.f32 %v1190, %v1326
        %1328 = vmatmul.f32.gmra.mxu0 %v317
        %v1329 = vpop.f32.mrf.mxu0
        %v1330 = vadd.f32 %v1193, %v1329
        %1331 = vmatmul.f32.gmra.mxu0 %v320
        %v1332 = vpop.f32.mrf.mxu0
        %v1333 = vadd.f32 %v1196, %v1332
        %1334 = vmatmul.f32.gmra.mxu0 %v323
        %v1335 = vpop.f32.mrf.mxu0
        %v1336 = vadd.f32 %v1199, %v1335
        %1337 = vmatmul.f32.gmra.mxu0 %v326
        %v1338 = vpop.f32.mrf.mxu0
        %v1339 = vadd.f32 %v1202, %v1338
        %1340 = vmatmul.f32.gmra.mxu0 %v329
        %v1341 = vpop.f32.mrf.mxu0
        %v1342 = vadd.f32 %v1205, %v1341
        %1343 = vmatmul.f32.gmra.mxu0 %v332
        %v1344 = vpop.f32.mrf.mxu0
        %v1345 = vadd.f32 %v1208, %v1344
        %1346 = vmatmul.f32.gmra.mxu0 %v335
        %v1347 = vpop.f32.mrf.mxu0
        %v1348 = vadd.f32 %v1211, %v1347
        %1349 = vmatmul.f32.gmra.mxu0 %v338
        %v1350 = vpop.f32.mrf.mxu0
        %v1351 = vadd.f32 %v1214, %v1350
        %1352 = vmatmul.f32.gmra.mxu0 %v341
        %v1353 = vpop.f32.mrf.mxu0
        %v1354 = vadd.f32 %v1217, %v1353
        %1355 = vmatmul.f32.gmra.mxu0 %v344
        %v1356 = vpop.f32.mrf.mxu0
        %v1357 = vadd.f32 %v1220, %v1356
        %1358 = vmatmul.f32.gmra.mxu0 %v347
        %v1359 = vpop.f32.mrf.mxu0
        %v1360 = vadd.f32 %v1223, %v1359
        %1361 = vmatmul.f32.gmra.mxu0 %v350
        %v1362 = vpop.f32.mrf.mxu0
        %v1363 = vadd.f32 %v1226, %v1362
        %1364 = vmatmul.f32.gmra.mxu0 %v353
        %v1365 = vpop.f32.mrf.mxu0
        %v1366 = vadd.f32 %v1229, %v1365
        %1367 = vmatmul.f32.gmra.mxu0 %v356
        %v1368 = vpop.f32.mrf.mxu0
        %v1369 = vadd.f32 %v1232, %v1368
        %1370 = vmatmul.f32.gmra.mxu0 %v359
        %v1371 = vpop.f32.mrf.mxu0
        %v1372 = vadd.f32 %v1235, %v1371
        %1373 = vmatmul.f32.gmra.mxu0 %v362
        %v1374 = vpop.f32.mrf.mxu0
        %v1375 = vadd.f32 %v1238, %v1374
        %1376 = vmatmul.f32.gmra.mxu0 %v365
        %v1377 = vpop.f32.mrf.mxu0
        %v1378 = vadd.f32 %v1241, %v1377
        %1379 = vmatmul.f32.gmra.mxu0 %v368
        %v1380 = vpop.f32.mrf.mxu0
        %v1381 = vadd.f32 %v1244, %v1380
        %1382 = vmatmul.f32.gmra.mxu0 %v371
        %v1383 = vpop.f32.mrf.mxu0
        %v1384 = vadd.f32 %v1247, %v1383
        %1385 = vmatmul.f32.gmra.mxu0 %v374
        %v1386 = vpop.f32.mrf.mxu0
        %v1387 = vadd.f32 %v1250, %v1386
        %1388 = vmatmul.f32.gmra.mxu0 %v377
        %v1389 = vpop.f32.mrf.mxu0
        %v1390 = vadd.f32 %v1253, %v1389
        %1391 = vmatmul.f32.gmra.mxu0 %v380
        %v1392 = vpop.f32.mrf.mxu0
        %v1393 = vadd.f32 %v1256, %v1392
        %1394 = vmatmul.f32.gmra.mxu0 %v383
        %v1395 = vpop.f32.mrf.mxu0
        %v1396 = vadd.f32 %v1259, %v1395
        %1397 = vmatmul.f32.gmra.mxu0 %v386
        %v1398 = vpop.f32.mrf.mxu0
        %v1399 = vadd.f32 %v1262, %v1398
        %1400 = vmatmul.f32.gmra.mxu0 %v389
        %v1401 = vpop.f32.mrf.mxu0
        %v1402 = vadd.f32 %v1265, %v1401
        %1403 = vmatmul.f32.gmra.mxu0 %v392
        %v1404 = vpop.f32.mrf.mxu0
        %v1405 = vadd.f32 %v1268, %v1404
        %1406 = vmatmul.f32.gmra.mxu0 %v395
        %v1407 = vpop.f32.mrf.mxu0
        %v1408 = vadd.f32 %v1271, %v1407
        %1409 = vmatmul.f32.gmra.mxu0 %v398
        %v1410 = vpop.f32.mrf.mxu0
        %v1411 = vadd.f32 %v1274, %v1410
        %1412 = vmatmul.f32.gmra.mxu0 %v401
        %v1413 = vpop.f32.mrf.mxu0
        %v1414 = vadd.f32 %v1277, %v1413
        %1415 = vmatmul.f32.gmra.mxu0 %v404
        %v1416 = vpop.f32.mrf.mxu0
        %v1417 = vadd.f32 %v1280, %v1416
        %1418 = vmatmul.f32.gmra.mxu0 %v407
        %v1419 = vpop.f32.mrf.mxu0
        %v1420 = vadd.f32 %v1283, %v1419
        %1421 = vdwg.mxu0
        %1422 = vmatpush.xpose.msra.mxu0 %v549
        %1423 = vmatpush.xpose.msra.mxu0 %v546
        %1424 = vmatpush.xpose.msra.mxu0 %v543
        %1425 = vmatpush.xpose.msra.mxu0 %v540
        %1426 = vmatpush.xpose.msra.mxu0 %v537
        %1427 = vmatpush.xpose.msra.mxu0 %v534
        %1428 = vmatpush.xpose.msra.mxu0 %v531
        %1429 = vmatpush.xpose.msra.mxu0 %v528
        %1430 = vmatpush.xpose.msra.mxu0 %v525
        %1431 = vmatpush.xpose.msra.mxu0 %v522
        %1432 = vmatpush.xpose.msra.mxu0 %v519
        %1433 = vmatpush.xpose.msra.mxu0 %v516
        %1434 = vmatpush.xpose.msra.mxu0 %v513
        %1435 = vmatpush.xpose.msra.mxu0 %v510
        %1436 = vmatpush.xpose.msra.mxu0 %v507
        %1437 = vmatpush.xpose.msra.mxu0 %v504
        %1438 = vmatmul.f32.gmra.mxu0 %v288
        %v1439 = vpop.f32.mrf.mxu0
        %v1440 = vadd.f32 0.0, %v1439
        %1441 = vmatmul.f32.gmra.mxu0 %v291
        %v1442 = vpop.f32.mrf.mxu0
        %v1443 = vadd.f32 0.0, %v1442
        %1444 = vmatmul.f32.gmra.mxu0 %v294
        %v1445 = vpop.f32.mrf.mxu0
        %v1446 = vadd.f32 0.0, %v1445
        %1447 = vmatmul.f32.gmra.mxu0 %v297
        %v1448 = vpop.f32.mrf.mxu0
        %v1449 = vadd.f32 0.0, %v1448
        %1450 = vmatmul.f32.gmra.mxu0 %v300
        %v1451 = vpop.f32.mrf.mxu0
        %v1452 = vadd.f32 0.0, %v1451
        %1453 = vmatmul.f32.gmra.mxu0 %v303
        %v1454 = vpop.f32.mrf.mxu0
        %v1455 = vadd.f32 0.0, %v1454
        %1456 = vmatmul.f32.gmra.mxu0 %v306
        %v1457 = vpop.f32.mrf.mxu0
        %v1458 = vadd.f32 0.0, %v1457
        %1459 = vmatmul.f32.gmra.mxu0 %v309
        %v1460 = vpop.f32.mrf.mxu0
        %v1461 = vadd.f32 0.0, %v1460
        %1462 = vmatmul.f32.gmra.mxu0 %v312
        %v1463 = vpop.f32.mrf.mxu0
        %v1464 = vadd.f32 0.0, %v1463
        %1465 = vmatmul.f32.gmra.mxu0 %v315
        %v1466 = vpop.f32.mrf.mxu0
        %v1467 = vadd.f32 0.0, %v1466
        %1468 = vmatmul.f32.gmra.mxu0 %v318
        %v1469 = vpop.f32.mrf.mxu0
        %v1470 = vadd.f32 0.0, %v1469
        %1471 = vmatmul.f32.gmra.mxu0 %v321
        %v1472 = vpop.f32.mrf.mxu0
        %v1473 = vadd.f32 0.0, %v1472
        %1474 = vmatmul.f32.gmra.mxu0 %v324
        %v1475 = vpop.f32.mrf.mxu0
        %v1476 = vadd.f32 0.0, %v1475
        %1477 = vmatmul.f32.gmra.mxu0 %v327
        %v1478 = vpop.f32.mrf.mxu0
        %v1479 = vadd.f32 0.0, %v1478
        %1480 = vmatmul.f32.gmra.mxu0 %v330
        %v1481 = vpop.f32.mrf.mxu0
        %v1482 = vadd.f32 0.0, %v1481
        %1483 = vmatmul.f32.gmra.mxu0 %v333
        %v1484 = vpop.f32.mrf.mxu0
        %v1485 = vadd.f32 0.0, %v1484
        %1486 = vmatmul.f32.gmra.mxu0 %v336
        %v1487 = vpop.f32.mrf.mxu0
        %v1488 = vadd.f32 0.0, %v1487
        %1489 = vmatmul.f32.gmra.mxu0 %v339
        %v1490 = vpop.f32.mrf.mxu0
        %v1491 = vadd.f32 0.0, %v1490
        %1492 = vmatmul.f32.gmra.mxu0 %v342
        %v1493 = vpop.f32.mrf.mxu0
        %v1494 = vadd.f32 0.0, %v1493
        %1495 = vmatmul.f32.gmra.mxu0 %v345
        %v1496 = vpop.f32.mrf.mxu0
        %v1497 = vadd.f32 0.0, %v1496
        %1498 = vmatmul.f32.gmra.mxu0 %v348
        %v1499 = vpop.f32.mrf.mxu0
        %v1500 = vadd.f32 0.0, %v1499
        %1501 = vmatmul.f32.gmra.mxu0 %v351
        %v1502 = vpop.f32.mrf.mxu0
        %v1503 = vadd.f32 0.0, %v1502
        %1504 = vmatmul.f32.gmra.mxu0 %v354
        %v1505 = vpop.f32.mrf.mxu0
        %v1506 = vadd.f32 0.0, %v1505
        %1507 = vmatmul.f32.gmra.mxu0 %v357
        %v1508 = vpop.f32.mrf.mxu0
        %v1509 = vadd.f32 0.0, %v1508
        %1510 = vmatmul.f32.gmra.mxu0 %v360
        %v1511 = vpop.f32.mrf.mxu0
        %v1512 = vadd.f32 0.0, %v1511
        %1513 = vmatmul.f32.gmra.mxu0 %v363
        %v1514 = vpop.f32.mrf.mxu0
        %v1515 = vadd.f32 0.0, %v1514
        %1516 = vmatmul.f32.gmra.mxu0 %v366
        %v1517 = vpop.f32.mrf.mxu0
        %v1518 = vadd.f32 0.0, %v1517
        %1519 = vmatmul.f32.gmra.mxu0 %v369
        %v1520 = vpop.f32.mrf.mxu0
        %v1521 = vadd.f32 0.0, %v1520
        %1522 = vmatmul.f32.gmra.mxu0 %v372
        %v1523 = vpop.f32.mrf.mxu0
        %v1524 = vadd.f32 0.0, %v1523
        %1525 = vmatmul.f32.gmra.mxu0 %v375
        %v1526 = vpop.f32.mrf.mxu0
        %v1527 = vadd.f32 0.0, %v1526
        %1528 = vmatmul.f32.gmra.mxu0 %v378
        %v1529 = vpop.f32.mrf.mxu0
        %v1530 = vadd.f32 0.0, %v1529
        %1531 = vmatmul.f32.gmra.mxu0 %v381
        %v1532 = vpop.f32.mrf.mxu0
        %v1533 = vadd.f32 0.0, %v1532
        %1534 = vmatmul.f32.gmra.mxu0 %v384
        %v1535 = vpop.f32.mrf.mxu0
        %v1536 = vadd.f32 0.0, %v1535
        %1537 = vmatmul.f32.gmra.mxu0 %v387
        %v1538 = vpop.f32.mrf.mxu0
        %v1539 = vadd.f32 0.0, %v1538
        %1540 = vmatmul.f32.gmra.mxu0 %v390
        %v1541 = vpop.f32.mrf.mxu0
        %v1542 = vadd.f32 0.0, %v1541
        %1543 = vmatmul.f32.gmra.mxu0 %v393
        %v1544 = vpop.f32.mrf.mxu0
        %v1545 = vadd.f32 0.0, %v1544
        %1546 = vmatmul.f32.gmra.mxu0 %v396
        %v1547 = vpop.f32.mrf.mxu0
        %v1548 = vadd.f32 0.0, %v1547
        %1549 = vmatmul.f32.gmra.mxu0 %v399
        %v1550 = vpop.f32.mrf.mxu0
        %v1551 = vadd.f32 0.0, %v1550
        %1552 = vmatmul.f32.gmra.mxu0 %v402
        %v1553 = vpop.f32.mrf.mxu0
        %v1554 = vadd.f32 0.0, %v1553
        %1555 = vmatmul.f32.gmra.mxu0 %v405
        %v1556 = vpop.f32.mrf.mxu0
        %v1557 = vadd.f32 0.0, %v1556
        %1558 = vdwg.mxu0
        %1559 = vmatpush.xpose.msra.mxu0 %v550
        %1560 = vmatpush.xpose.msra.mxu0 %v547
        %1561 = vmatpush.xpose.msra.mxu0 %v544
        %1562 = vmatpush.xpose.msra.mxu0 %v541
        %1563 = vmatpush.xpose.msra.mxu0 %v538
        %1564 = vmatpush.xpose.msra.mxu0 %v535
        %1565 = vmatpush.xpose.msra.mxu0 %v532
        %1566 = vmatpush.xpose.msra.mxu0 %v529
        %1567 = vmatpush.xpose.msra.mxu0 %v526
        %1568 = vmatpush.xpose.msra.mxu0 %v523
        %1569 = vmatpush.xpose.msra.mxu0 %v520
        %1570 = vmatpush.xpose.msra.mxu0 %v517
        %1571 = vmatpush.xpose.msra.mxu0 %v514
        %1572 = vmatpush.xpose.msra.mxu0 %v511
        %1573 = vmatpush.xpose.msra.mxu0 %v508
        %1574 = vmatpush.xpose.msra.mxu0 %v505
        %1575 = vmatmul.f32.gmra.mxu0 %v289
        %v1576 = vpop.f32.mrf.mxu0
        %v1577 = vadd.f32 %v1440, %v1576
        %1578 = vmatmul.f32.gmra.mxu0 %v292
        %v1579 = vpop.f32.mrf.mxu0
        %v1580 = vadd.f32 %v1443, %v1579
        %1581 = vmatmul.f32.gmra.mxu0 %v295
        %v1582 = vpop.f32.mrf.mxu0
        %v1583 = vadd.f32 %v1446, %v1582
        %1584 = vmatmul.f32.gmra.mxu0 %v298
        %v1585 = vpop.f32.mrf.mxu0
        %v1586 = vadd.f32 %v1449, %v1585
        %1587 = vmatmul.f32.gmra.mxu0 %v301
        %v1588 = vpop.f32.mrf.mxu0
        %v1589 = vadd.f32 %v1452, %v1588
        %1590 = vmatmul.f32.gmra.mxu0 %v304
        %v1591 = vpop.f32.mrf.mxu0
        %v1592 = vadd.f32 %v1455, %v1591
        %1593 = vmatmul.f32.gmra.mxu0 %v307
        %v1594 = vpop.f32.mrf.mxu0
        %v1595 = vadd.f32 %v1458, %v1594
        %1596 = vmatmul.f32.gmra.mxu0 %v310
        %v1597 = vpop.f32.mrf.mxu0
        %v1598 = vadd.f32 %v1461, %v1597
        %1599 = vmatmul.f32.gmra.mxu0 %v313
        %v1600 = vpop.f32.mrf.mxu0
        %v1601 = vadd.f32 %v1464, %v1600
        %1602 = vmatmul.f32.gmra.mxu0 %v316
        %v1603 = vpop.f32.mrf.mxu0
        %v1604 = vadd.f32 %v1467, %v1603
        %1605 = vmatmul.f32.gmra.mxu0 %v319
        %v1606 = vpop.f32.mrf.mxu0
        %v1607 = vadd.f32 %v1470, %v1606
        %1608 = vmatmul.f32.gmra.mxu0 %v322
        %v1609 = vpop.f32.mrf.mxu0
        %v1610 = vadd.f32 %v1473, %v1609
        %1611 = vmatmul.f32.gmra.mxu0 %v325
        %v1612 = vpop.f32.mrf.mxu0
        %v1613 = vadd.f32 %v1476, %v1612
        %1614 = vmatmul.f32.gmra.mxu0 %v328
        %v1615 = vpop.f32.mrf.mxu0
        %v1616 = vadd.f32 %v1479, %v1615
        %1617 = vmatmul.f32.gmra.mxu0 %v331
        %v1618 = vpop.f32.mrf.mxu0
        %v1619 = vadd.f32 %v1482, %v1618
        %1620 = vmatmul.f32.gmra.mxu0 %v334
        %v1621 = vpop.f32.mrf.mxu0
        %v1622 = vadd.f32 %v1485, %v1621
        %1623 = vmatmul.f32.gmra.mxu0 %v337
        %v1624 = vpop.f32.mrf.mxu0
        %v1625 = vadd.f32 %v1488, %v1624
        %1626 = vmatmul.f32.gmra.mxu0 %v340
        %v1627 = vpop.f32.mrf.mxu0
        %v1628 = vadd.f32 %v1491, %v1627
        %1629 = vmatmul.f32.gmra.mxu0 %v343
        %v1630 = vpop.f32.mrf.mxu0
        %v1631 = vadd.f32 %v1494, %v1630
        %1632 = vmatmul.f32.gmra.mxu0 %v346
        %v1633 = vpop.f32.mrf.mxu0
        %v1634 = vadd.f32 %v1497, %v1633
        %1635 = vmatmul.f32.gmra.mxu0 %v349
        %v1636 = vpop.f32.mrf.mxu0
        %v1637 = vadd.f32 %v1500, %v1636
        %1638 = vmatmul.f32.gmra.mxu0 %v352
        %v1639 = vpop.f32.mrf.mxu0
        %v1640 = vadd.f32 %v1503, %v1639
        %1641 = vmatmul.f32.gmra.mxu0 %v355
        %v1642 = vpop.f32.mrf.mxu0
        %v1643 = vadd.f32 %v1506, %v1642
        %1644 = vmatmul.f32.gmra.mxu0 %v358
        %v1645 = vpop.f32.mrf.mxu0
        %v1646 = vadd.f32 %v1509, %v1645
        %1647 = vmatmul.f32.gmra.mxu0 %v361
        %v1648 = vpop.f32.mrf.mxu0
        %v1649 = vadd.f32 %v1512, %v1648
        %1650 = vmatmul.f32.gmra.mxu0 %v364
        %v1651 = vpop.f32.mrf.mxu0
        %v1652 = vadd.f32 %v1515, %v1651
        %1653 = vmatmul.f32.gmra.mxu0 %v367
        %v1654 = vpop.f32.mrf.mxu0
        %v1655 = vadd.f32 %v1518, %v1654
        %1656 = vmatmul.f32.gmra.mxu0 %v370
        %v1657 = vpop.f32.mrf.mxu0
        %v1658 = vadd.f32 %v1521, %v1657
        %1659 = vmatmul.f32.gmra.mxu0 %v373
        %v1660 = vpop.f32.mrf.mxu0
        %v1661 = vadd.f32 %v1524, %v1660
        %1662 = vmatmul.f32.gmra.mxu0 %v376
        %v1663 = vpop.f32.mrf.mxu0
        %v1664 = vadd.f32 %v1527, %v1663
        %1665 = vmatmul.f32.gmra.mxu0 %v379
        %v1666 = vpop.f32.mrf.mxu0
        %v1667 = vadd.f32 %v1530, %v1666
        %1668 = vmatmul.f32.gmra.mxu0 %v382
        %v1669 = vpop.f32.mrf.mxu0
        %v1670 = vadd.f32 %v1533, %v1669
        %1671 = vmatmul.f32.gmra.mxu0 %v385
        %v1672 = vpop.f32.mrf.mxu0
        %v1673 = vadd.f32 %v1536, %v1672
        %1674 = vmatmul.f32.gmra.mxu0 %v388
        %v1675 = vpop.f32.mrf.mxu0
        %v1676 = vadd.f32 %v1539, %v1675
        %1677 = vmatmul.f32.gmra.mxu0 %v391
        %v1678 = vpop.f32.mrf.mxu0
        %v1679 = vadd.f32 %v1542, %v1678
        %1680 = vmatmul.f32.gmra.mxu0 %v394
        %v1681 = vpop.f32.mrf.mxu0
        %v1682 = vadd.f32 %v1545, %v1681
        %1683 = vmatmul.f32.gmra.mxu0 %v397
        %v1684 = vpop.f32.mrf.mxu0
        %v1685 = vadd.f32 %v1548, %v1684
        %1686 = vmatmul.f32.gmra.mxu0 %v400
        %v1687 = vpop.f32.mrf.mxu0
        %v1688 = vadd.f32 %v1551, %v1687
        %1689 = vmatmul.f32.gmra.mxu0 %v403
        %v1690 = vpop.f32.mrf.mxu0
        %v1691 = vadd.f32 %v1554, %v1690
        %1692 = vmatmul.f32.gmra.mxu0 %v406
        %v1693 = vpop.f32.mrf.mxu0
        %v1694 = vadd.f32 %v1557, %v1693
        %1695 = vdwg.mxu0
        %1696 = vmatpush.xpose.msra.mxu0 %v551
        %1697 = vmatpush.xpose.msra.mxu0 %v548
        %1698 = vmatpush.xpose.msra.mxu0 %v545
        %1699 = vmatpush.xpose.msra.mxu0 %v542
        %1700 = vmatpush.xpose.msra.mxu0 %v539
        %1701 = vmatpush.xpose.msra.mxu0 %v536
        %1702 = vmatpush.xpose.msra.mxu0 %v533
        %1703 = vmatpush.xpose.msra.mxu0 %v530
        %1704 = vmatpush.xpose.msra.mxu0 %v527
        %1705 = vmatpush.xpose.msra.mxu0 %v524
        %1706 = vmatpush.xpose.msra.mxu0 %v521
        %1707 = vmatpush.xpose.msra.mxu0 %v518
        %1708 = vmatpush.xpose.msra.mxu0 %v515
        %1709 = vmatpush.xpose.msra.mxu0 %v512
        %1710 = vmatpush.xpose.msra.mxu0 %v509
        %1711 = vmatpush.xpose.msra.mxu0 %v506
        %1712 = vmatmul.f32.gmra.mxu0 %v290
        %v1713 = vpop.f32.mrf.mxu0
        %v1714 = vadd.f32 %v1577, %v1713
        %1715 = vmatmul.f32.gmra.mxu0 %v293
        %v1716 = vpop.f32.mrf.mxu0
        %v1717 = vadd.f32 %v1580, %v1716
        %1718 = vmatmul.f32.gmra.mxu0 %v296
        %v1719 = vpop.f32.mrf.mxu0
        %v1720 = vadd.f32 %v1583, %v1719
        %1721 = vmatmul.f32.gmra.mxu0 %v299
        %v1722 = vpop.f32.mrf.mxu0
        %v1723 = vadd.f32 %v1586, %v1722
        %1724 = vmatmul.f32.gmra.mxu0 %v302
        %v1725 = vpop.f32.mrf.mxu0
        %v1726 = vadd.f32 %v1589, %v1725
        %1727 = vmatmul.f32.gmra.mxu0 %v305
        %v1728 = vpop.f32.mrf.mxu0
        %v1729 = vadd.f32 %v1592, %v1728
        %1730 = vmatmul.f32.gmra.mxu0 %v308
        %v1731 = vpop.f32.mrf.mxu0
        %v1732 = vadd.f32 %v1595, %v1731
        %1733 = vmatmul.f32.gmra.mxu0 %v311
        %v1734 = vpop.f32.mrf.mxu0
        %v1735 = vadd.f32 %v1598, %v1734
        %1736 = vmatmul.f32.gmra.mxu0 %v314
        %v1737 = vpop.f32.mrf.mxu0
        %v1738 = vadd.f32 %v1601, %v1737
        %1739 = vmatmul.f32.gmra.mxu0 %v317
        %v1740 = vpop.f32.mrf.mxu0
        %v1741 = vadd.f32 %v1604, %v1740
        %1742 = vmatmul.f32.gmra.mxu0 %v320
        %v1743 = vpop.f32.mrf.mxu0
        %v1744 = vadd.f32 %v1607, %v1743
        %1745 = vmatmul.f32.gmra.mxu0 %v323
        %v1746 = vpop.f32.mrf.mxu0
        %v1747 = vadd.f32 %v1610, %v1746
        %1748 = vmatmul.f32.gmra.mxu0 %v326
        %v1749 = vpop.f32.mrf.mxu0
        %v1750 = vadd.f32 %v1613, %v1749
        %1751 = vmatmul.f32.gmra.mxu0 %v329
        %v1752 = vpop.f32.mrf.mxu0
        %v1753 = vadd.f32 %v1616, %v1752
        %1754 = vmatmul.f32.gmra.mxu0 %v332
        %v1755 = vpop.f32.mrf.mxu0
        %v1756 = vadd.f32 %v1619, %v1755
        %1757 = vmatmul.f32.gmra.mxu0 %v335
        %v1758 = vpop.f32.mrf.mxu0
        %v1759 = vadd.f32 %v1622, %v1758
        %1760 = vmatmul.f32.gmra.mxu0 %v338
        %v1761 = vpop.f32.mrf.mxu0
        %v1762 = vadd.f32 %v1625, %v1761
        %1763 = vmatmul.f32.gmra.mxu0 %v341
        %v1764 = vpop.f32.mrf.mxu0
        %v1765 = vadd.f32 %v1628, %v1764
        %1766 = vmatmul.f32.gmra.mxu0 %v344
        %v1767 = vpop.f32.mrf.mxu0
        %v1768 = vadd.f32 %v1631, %v1767
        %1769 = vmatmul.f32.gmra.mxu0 %v347
        %v1770 = vpop.f32.mrf.mxu0
        %v1771 = vadd.f32 %v1634, %v1770
        %1772 = vmatmul.f32.gmra.mxu0 %v350
        %v1773 = vpop.f32.mrf.mxu0
        %v1774 = vadd.f32 %v1637, %v1773
        %1775 = vmatmul.f32.gmra.mxu0 %v353
        %v1776 = vpop.f32.mrf.mxu0
        %v1777 = vadd.f32 %v1640, %v1776
        %1778 = vmatmul.f32.gmra.mxu0 %v356
        %v1779 = vpop.f32.mrf.mxu0
        %v1780 = vadd.f32 %v1643, %v1779
        %1781 = vmatmul.f32.gmra.mxu0 %v359
        %v1782 = vpop.f32.mrf.mxu0
        %v1783 = vadd.f32 %v1646, %v1782
        %1784 = vmatmul.f32.gmra.mxu0 %v362
        %v1785 = vpop.f32.mrf.mxu0
        %v1786 = vadd.f32 %v1649, %v1785
        %1787 = vmatmul.f32.gmra.mxu0 %v365
        %v1788 = vpop.f32.mrf.mxu0
        %v1789 = vadd.f32 %v1652, %v1788
        %1790 = vmatmul.f32.gmra.mxu0 %v368
        %v1791 = vpop.f32.mrf.mxu0
        %v1792 = vadd.f32 %v1655, %v1791
        %1793 = vmatmul.f32.gmra.mxu0 %v371
        %v1794 = vpop.f32.mrf.mxu0
        %v1795 = vadd.f32 %v1658, %v1794
        %1796 = vmatmul.f32.gmra.mxu0 %v374
        %v1797 = vpop.f32.mrf.mxu0
        %v1798 = vadd.f32 %v1661, %v1797
        %1799 = vmatmul.f32.gmra.mxu0 %v377
        %v1800 = vpop.f32.mrf.mxu0
        %v1801 = vadd.f32 %v1664, %v1800
        %1802 = vmatmul.f32.gmra.mxu0 %v380
        %v1803 = vpop.f32.mrf.mxu0
        %v1804 = vadd.f32 %v1667, %v1803
        %1805 = vmatmul.f32.gmra.mxu0 %v383
        %v1806 = vpop.f32.mrf.mxu0
        %v1807 = vadd.f32 %v1670, %v1806
        %1808 = vmatmul.f32.gmra.mxu0 %v386
        %v1809 = vpop.f32.mrf.mxu0
        %v1810 = vadd.f32 %v1673, %v1809
        %1811 = vmatmul.f32.gmra.mxu0 %v389
        %v1812 = vpop.f32.mrf.mxu0
        %v1813 = vadd.f32 %v1676, %v1812
        %1814 = vmatmul.f32.gmra.mxu0 %v392
        %v1815 = vpop.f32.mrf.mxu0
        %v1816 = vadd.f32 %v1679, %v1815
        %1817 = vmatmul.f32.gmra.mxu0 %v395
        %v1818 = vpop.f32.mrf.mxu0
        %v1819 = vadd.f32 %v1682, %v1818
        %1820 = vmatmul.f32.gmra.mxu0 %v398
        %v1821 = vpop.f32.mrf.mxu0
        %v1822 = vadd.f32 %v1685, %v1821
        %1823 = vmatmul.f32.gmra.mxu0 %v401
        %v1824 = vpop.f32.mrf.mxu0
        %v1825 = vadd.f32 %v1688, %v1824
        %1826 = vmatmul.f32.gmra.mxu0 %v404
        %v1827 = vpop.f32.mrf.mxu0
        %v1828 = vadd.f32 %v1691, %v1827
        %1829 = vmatmul.f32.gmra.mxu0 %v407
        %v1830 = vpop.f32.mrf.mxu0
        %v1831 = vadd.f32 %v1694, %v1830
        %1832 = vdwg.mxu0
        %1833 = vmatpush.xpose.msra.mxu0 %v597
        %1834 = vmatpush.xpose.msra.mxu0 %v594
        %1835 = vmatpush.xpose.msra.mxu0 %v591
        %1836 = vmatpush.xpose.msra.mxu0 %v588
        %1837 = vmatpush.xpose.msra.mxu0 %v585
        %1838 = vmatpush.xpose.msra.mxu0 %v582
        %1839 = vmatpush.xpose.msra.mxu0 %v579
        %1840 = vmatpush.xpose.msra.mxu0 %v576
        %1841 = vmatpush.xpose.msra.mxu0 %v573
        %1842 = vmatpush.xpose.msra.mxu0 %v570
        %1843 = vmatpush.xpose.msra.mxu0 %v567
        %1844 = vmatpush.xpose.msra.mxu0 %v564
        %1845 = vmatpush.xpose.msra.mxu0 %v561
        %1846 = vmatpush.xpose.msra.mxu0 %v558
        %1847 = vmatpush.xpose.msra.mxu0 %v555
        %1848 = vmatpush.xpose.msra.mxu0 %v552
        %1849 = vmatmul.f32.gmra.mxu0 %v288
        %v1850 = vpop.f32.mrf.mxu0
        %v1851 = vadd.f32 0.0, %v1850
        %1852 = vmatmul.f32.gmra.mxu0 %v291
        %v1853 = vpop.f32.mrf.mxu0
        %v1854 = vadd.f32 0.0, %v1853
        %1855 = vmatmul.f32.gmra.mxu0 %v294
        %v1856 = vpop.f32.mrf.mxu0
        %v1857 = vadd.f32 0.0, %v1856
        %1858 = vmatmul.f32.gmra.mxu0 %v297
        %v1859 = vpop.f32.mrf.mxu0
        %v1860 = vadd.f32 0.0, %v1859
        %1861 = vmatmul.f32.gmra.mxu0 %v300
        %v1862 = vpop.f32.mrf.mxu0
        %v1863 = vadd.f32 0.0, %v1862
        %1864 = vmatmul.f32.gmra.mxu0 %v303
        %v1865 = vpop.f32.mrf.mxu0
        %v1866 = vadd.f32 0.0, %v1865
        %1867 = vmatmul.f32.gmra.mxu0 %v306
        %v1868 = vpop.f32.mrf.mxu0
        %v1869 = vadd.f32 0.0, %v1868
        %1870 = vmatmul.f32.gmra.mxu0 %v309
        %v1871 = vpop.f32.mrf.mxu0
        %v1872 = vadd.f32 0.0, %v1871
        %1873 = vmatmul.f32.gmra.mxu0 %v312
        %v1874 = vpop.f32.mrf.mxu0
        %v1875 = vadd.f32 0.0, %v1874
        %1876 = vmatmul.f32.gmra.mxu0 %v315
        %v1877 = vpop.f32.mrf.mxu0
        %v1878 = vadd.f32 0.0, %v1877
        %1879 = vmatmul.f32.gmra.mxu0 %v318
        %v1880 = vpop.f32.mrf.mxu0
        %v1881 = vadd.f32 0.0, %v1880
        %1882 = vmatmul.f32.gmra.mxu0 %v321
        %v1883 = vpop.f32.mrf.mxu0
        %v1884 = vadd.f32 0.0, %v1883
        %1885 = vmatmul.f32.gmra.mxu0 %v324
        %v1886 = vpop.f32.mrf.mxu0
        %v1887 = vadd.f32 0.0, %v1886
        %1888 = vmatmul.f32.gmra.mxu0 %v327
        %v1889 = vpop.f32.mrf.mxu0
        %v1890 = vadd.f32 0.0, %v1889
        %1891 = vmatmul.f32.gmra.mxu0 %v330
        %v1892 = vpop.f32.mrf.mxu0
        %v1893 = vadd.f32 0.0, %v1892
        %1894 = vmatmul.f32.gmra.mxu0 %v333
        %v1895 = vpop.f32.mrf.mxu0
        %v1896 = vadd.f32 0.0, %v1895
        %1897 = vmatmul.f32.gmra.mxu0 %v336
        %v1898 = vpop.f32.mrf.mxu0
        %v1899 = vadd.f32 0.0, %v1898
        %1900 = vmatmul.f32.gmra.mxu0 %v339
        %v1901 = vpop.f32.mrf.mxu0
        %v1902 = vadd.f32 0.0, %v1901
        %1903 = vmatmul.f32.gmra.mxu0 %v342
        %v1904 = vpop.f32.mrf.mxu0
        %v1905 = vadd.f32 0.0, %v1904
        %1906 = vmatmul.f32.gmra.mxu0 %v345
        %v1907 = vpop.f32.mrf.mxu0
        %v1908 = vadd.f32 0.0, %v1907
        %1909 = vmatmul.f32.gmra.mxu0 %v348
        %v1910 = vpop.f32.mrf.mxu0
        %v1911 = vadd.f32 0.0, %v1910
        %1912 = vmatmul.f32.gmra.mxu0 %v351
        %v1913 = vpop.f32.mrf.mxu0
        %v1914 = vadd.f32 0.0, %v1913
        %1915 = vmatmul.f32.gmra.mxu0 %v354
        %v1916 = vpop.f32.mrf.mxu0
        %v1917 = vadd.f32 0.0, %v1916
        %1918 = vmatmul.f32.gmra.mxu0 %v357
        %v1919 = vpop.f32.mrf.mxu0
        %v1920 = vadd.f32 0.0, %v1919
        %1921 = vmatmul.f32.gmra.mxu0 %v360
        %v1922 = vpop.f32.mrf.mxu0
        %v1923 = vadd.f32 0.0, %v1922
        %1924 = vmatmul.f32.gmra.mxu0 %v363
        %v1925 = vpop.f32.mrf.mxu0
        %v1926 = vadd.f32 0.0, %v1925
        %1927 = vmatmul.f32.gmra.mxu0 %v366
        %v1928 = vpop.f32.mrf.mxu0
        %v1929 = vadd.f32 0.0, %v1928
        %1930 = vmatmul.f32.gmra.mxu0 %v369
        %v1931 = vpop.f32.mrf.mxu0
        %v1932 = vadd.f32 0.0, %v1931
        %1933 = vmatmul.f32.gmra.mxu0 %v372
        %v1934 = vpop.f32.mrf.mxu0
        %v1935 = vadd.f32 0.0, %v1934
        %1936 = vmatmul.f32.gmra.mxu0 %v375
        %v1937 = vpop.f32.mrf.mxu0
        %v1938 = vadd.f32 0.0, %v1937
        %1939 = vmatmul.f32.gmra.mxu0 %v378
        %v1940 = vpop.f32.mrf.mxu0
        %v1941 = vadd.f32 0.0, %v1940
        %1942 = vmatmul.f32.gmra.mxu0 %v381
        %v1943 = vpop.f32.mrf.mxu0
        %v1944 = vadd.f32 0.0, %v1943
        %1945 = vmatmul.f32.gmra.mxu0 %v384
        %v1946 = vpop.f32.mrf.mxu0
        %v1947 = vadd.f32 0.0, %v1946
        %1948 = vmatmul.f32.gmra.mxu0 %v387
        %v1949 = vpop.f32.mrf.mxu0
        %v1950 = vadd.f32 0.0, %v1949
        %1951 = vmatmul.f32.gmra.mxu0 %v390
        %v1952 = vpop.f32.mrf.mxu0
        %v1953 = vadd.f32 0.0, %v1952
        %1954 = vmatmul.f32.gmra.mxu0 %v393
        %v1955 = vpop.f32.mrf.mxu0
        %v1956 = vadd.f32 0.0, %v1955
        %1957 = vmatmul.f32.gmra.mxu0 %v396
        %v1958 = vpop.f32.mrf.mxu0
        %v1959 = vadd.f32 0.0, %v1958
        %1960 = vmatmul.f32.gmra.mxu0 %v399
        %v1961 = vpop.f32.mrf.mxu0
        %v1962 = vadd.f32 0.0, %v1961
        %1963 = vmatmul.f32.gmra.mxu0 %v402
        %v1964 = vpop.f32.mrf.mxu0
        %v1965 = vadd.f32 0.0, %v1964
        %1966 = vmatmul.f32.gmra.mxu0 %v405
        %v1967 = vpop.f32.mrf.mxu0
        %v1968 = vadd.f32 0.0, %v1967
        %1969 = vdwg.mxu0
        %1970 = vmatpush.xpose.msra.mxu0 %v598
        %1971 = vmatpush.xpose.msra.mxu0 %v595
        %1972 = vmatpush.xpose.msra.mxu0 %v592
        %1973 = vmatpush.xpose.msra.mxu0 %v589
        %1974 = vmatpush.xpose.msra.mxu0 %v586
        %1975 = vmatpush.xpose.msra.mxu0 %v583
        %1976 = vmatpush.xpose.msra.mxu0 %v580
        %1977 = vmatpush.xpose.msra.mxu0 %v577
        %1978 = vmatpush.xpose.msra.mxu0 %v574
        %1979 = vmatpush.xpose.msra.mxu0 %v571
        %1980 = vmatpush.xpose.msra.mxu0 %v568
        %1981 = vmatpush.xpose.msra.mxu0 %v565
        %1982 = vmatpush.xpose.msra.mxu0 %v562
        %1983 = vmatpush.xpose.msra.mxu0 %v559
        %1984 = vmatpush.xpose.msra.mxu0 %v556
        %1985 = vmatpush.xpose.msra.mxu0 %v553
        %1986 = vmatmul.f32.gmra.mxu0 %v289
        %v1987 = vpop.f32.mrf.mxu0
        %v1988 = vadd.f32 %v1851, %v1987
        %1989 = vmatmul.f32.gmra.mxu0 %v292
        %v1990 = vpop.f32.mrf.mxu0
        %v1991 = vadd.f32 %v1854, %v1990
        %1992 = vmatmul.f32.gmra.mxu0 %v295
        %v1993 = vpop.f32.mrf.mxu0
        %v1994 = vadd.f32 %v1857, %v1993
        %1995 = vmatmul.f32.gmra.mxu0 %v298
        %v1996 = vpop.f32.mrf.mxu0
        %v1997 = vadd.f32 %v1860, %v1996
        %1998 = vmatmul.f32.gmra.mxu0 %v301
        %v1999 = vpop.f32.mrf.mxu0
        %v2000 = vadd.f32 %v1863, %v1999
        %2001 = vmatmul.f32.gmra.mxu0 %v304
        %v2002 = vpop.f32.mrf.mxu0
        %v2003 = vadd.f32 %v1866, %v2002
        %2004 = vmatmul.f32.gmra.mxu0 %v307
        %v2005 = vpop.f32.mrf.mxu0
        %v2006 = vadd.f32 %v1869, %v2005
        %2007 = vmatmul.f32.gmra.mxu0 %v310
        %v2008 = vpop.f32.mrf.mxu0
        %v2009 = vadd.f32 %v1872, %v2008
        %2010 = vmatmul.f32.gmra.mxu0 %v313
        %v2011 = vpop.f32.mrf.mxu0
        %v2012 = vadd.f32 %v1875, %v2011
        %2013 = vmatmul.f32.gmra.mxu0 %v316
        %v2014 = vpop.f32.mrf.mxu0
        %v2015 = vadd.f32 %v1878, %v2014
        %2016 = vmatmul.f32.gmra.mxu0 %v319
        %v2017 = vpop.f32.mrf.mxu0
        %v2018 = vadd.f32 %v1881, %v2017
        %2019 = vmatmul.f32.gmra.mxu0 %v322
        %v2020 = vpop.f32.mrf.mxu0
        %v2021 = vadd.f32 %v1884, %v2020
        %2022 = vmatmul.f32.gmra.mxu0 %v325
        %v2023 = vpop.f32.mrf.mxu0
        %v2024 = vadd.f32 %v1887, %v2023
        %2025 = vmatmul.f32.gmra.mxu0 %v328
        %v2026 = vpop.f32.mrf.mxu0
        %v2027 = vadd.f32 %v1890, %v2026
        %2028 = vmatmul.f32.gmra.mxu0 %v331
        %v2029 = vpop.f32.mrf.mxu0
        %v2030 = vadd.f32 %v1893, %v2029
        %2031 = vmatmul.f32.gmra.mxu0 %v334
        %v2032 = vpop.f32.mrf.mxu0
        %v2033 = vadd.f32 %v1896, %v2032
        %2034 = vmatmul.f32.gmra.mxu0 %v337
        %v2035 = vpop.f32.mrf.mxu0
        %v2036 = vadd.f32 %v1899, %v2035
        %2037 = vmatmul.f32.gmra.mxu0 %v340
        %v2038 = vpop.f32.mrf.mxu0
        %v2039 = vadd.f32 %v1902, %v2038
        %2040 = vmatmul.f32.gmra.mxu0 %v343
        %v2041 = vpop.f32.mrf.mxu0
        %v2042 = vadd.f32 %v1905, %v2041
        %2043 = vmatmul.f32.gmra.mxu0 %v346
        %v2044 = vpop.f32.mrf.mxu0
        %v2045 = vadd.f32 %v1908, %v2044
        %2046 = vmatmul.f32.gmra.mxu0 %v349
        %v2047 = vpop.f32.mrf.mxu0
        %v2048 = vadd.f32 %v1911, %v2047
        %2049 = vmatmul.f32.gmra.mxu0 %v352
        %v2050 = vpop.f32.mrf.mxu0
        %v2051 = vadd.f32 %v1914, %v2050
        %2052 = vmatmul.f32.gmra.mxu0 %v355
        %v2053 = vpop.f32.mrf.mxu0
        %v2054 = vadd.f32 %v1917, %v2053
        %2055 = vmatmul.f32.gmra.mxu0 %v358
        %v2056 = vpop.f32.mrf.mxu0
        %v2057 = vadd.f32 %v1920, %v2056
        %2058 = vmatmul.f32.gmra.mxu0 %v361
        %v2059 = vpop.f32.mrf.mxu0
        %v2060 = vadd.f32 %v1923, %v2059
        %2061 = vmatmul.f32.gmra.mxu0 %v364
        %v2062 = vpop.f32.mrf.mxu0
        %v2063 = vadd.f32 %v1926, %v2062
        %2064 = vmatmul.f32.gmra.mxu0 %v367
        %v2065 = vpop.f32.mrf.mxu0
        %v2066 = vadd.f32 %v1929, %v2065
        %2067 = vmatmul.f32.gmra.mxu0 %v370
        %v2068 = vpop.f32.mrf.mxu0
        %v2069 = vadd.f32 %v1932, %v2068
        %2070 = vmatmul.f32.gmra.mxu0 %v373
        %v2071 = vpop.f32.mrf.mxu0
        %v2072 = vadd.f32 %v1935, %v2071
        %2073 = vmatmul.f32.gmra.mxu0 %v376
        %v2074 = vpop.f32.mrf.mxu0
        %v2075 = vadd.f32 %v1938, %v2074
        %2076 = vmatmul.f32.gmra.mxu0 %v379
        %v2077 = vpop.f32.mrf.mxu0
        %v2078 = vadd.f32 %v1941, %v2077
        %2079 = vmatmul.f32.gmra.mxu0 %v382
        %v2080 = vpop.f32.mrf.mxu0
        %v2081 = vadd.f32 %v1944, %v2080
        %2082 = vmatmul.f32.gmra.mxu0 %v385
        %v2083 = vpop.f32.mrf.mxu0
        %v2084 = vadd.f32 %v1947, %v2083
        %2085 = vmatmul.f32.gmra.mxu0 %v388
        %v2086 = vpop.f32.mrf.mxu0
        %v2087 = vadd.f32 %v1950, %v2086
        %2088 = vmatmul.f32.gmra.mxu0 %v391
        %v2089 = vpop.f32.mrf.mxu0
        %v2090 = vadd.f32 %v1953, %v2089
        %2091 = vmatmul.f32.gmra.mxu0 %v394
        %v2092 = vpop.f32.mrf.mxu0
        %v2093 = vadd.f32 %v1956, %v2092
        %2094 = vmatmul.f32.gmra.mxu0 %v397
        %v2095 = vpop.f32.mrf.mxu0
        %v2096 = vadd.f32 %v1959, %v2095
        %2097 = vmatmul.f32.gmra.mxu0 %v400
        %v2098 = vpop.f32.mrf.mxu0
        %v2099 = vadd.f32 %v1962, %v2098
        %2100 = vmatmul.f32.gmra.mxu0 %v403
        %v2101 = vpop.f32.mrf.mxu0
        %v2102 = vadd.f32 %v1965, %v2101
        %2103 = vmatmul.f32.gmra.mxu0 %v406
        %v2104 = vpop.f32.mrf.mxu0
        %v2105 = vadd.f32 %v1968, %v2104
        %2106 = vdwg.mxu0
        %2107 = vmatpush.xpose.msra.mxu0 %v599
        %2108 = vmatpush.xpose.msra.mxu0 %v596
        %2109 = vmatpush.xpose.msra.mxu0 %v593
        %2110 = vmatpush.xpose.msra.mxu0 %v590
        %2111 = vmatpush.xpose.msra.mxu0 %v587
        %2112 = vmatpush.xpose.msra.mxu0 %v584
        %2113 = vmatpush.xpose.msra.mxu0 %v581
        %2114 = vmatpush.xpose.msra.mxu0 %v578
        %2115 = vmatpush.xpose.msra.mxu0 %v575
        %2116 = vmatpush.xpose.msra.mxu0 %v572
        %2117 = vmatpush.xpose.msra.mxu0 %v569
        %2118 = vmatpush.xpose.msra.mxu0 %v566
        %2119 = vmatpush.xpose.msra.mxu0 %v563
        %2120 = vmatpush.xpose.msra.mxu0 %v560
        %2121 = vmatpush.xpose.msra.mxu0 %v557
        %2122 = vmatpush.xpose.msra.mxu0 %v554
        %2123 = vmatmul.f32.gmra.mxu0 %v290
        %v2124 = vpop.f32.mrf.mxu0
        %v2125 = vadd.f32 %v1988, %v2124
        %2126 = vmatmul.f32.gmra.mxu0 %v293
        %v2127 = vpop.f32.mrf.mxu0
        %v2128 = vadd.f32 %v1991, %v2127
        %2129 = vmatmul.f32.gmra.mxu0 %v296
        %v2130 = vpop.f32.mrf.mxu0
        %v2131 = vadd.f32 %v1994, %v2130
        %2132 = vmatmul.f32.gmra.mxu0 %v299
        %v2133 = vpop.f32.mrf.mxu0
        %v2134 = vadd.f32 %v1997, %v2133
        %2135 = vmatmul.f32.gmra.mxu0 %v302
        %v2136 = vpop.f32.mrf.mxu0
        %v2137 = vadd.f32 %v2000, %v2136
        %2138 = vmatmul.f32.gmra.mxu0 %v305
        %v2139 = vpop.f32.mrf.mxu0
        %v2140 = vadd.f32 %v2003, %v2139
        %2141 = vmatmul.f32.gmra.mxu0 %v308
        %v2142 = vpop.f32.mrf.mxu0
        %v2143 = vadd.f32 %v2006, %v2142
        %2144 = vmatmul.f32.gmra.mxu0 %v311
        %v2145 = vpop.f32.mrf.mxu0
        %v2146 = vadd.f32 %v2009, %v2145
        %2147 = vmatmul.f32.gmra.mxu0 %v314
        %v2148 = vpop.f32.mrf.mxu0
        %v2149 = vadd.f32 %v2012, %v2148
        %2150 = vmatmul.f32.gmra.mxu0 %v317
        %v2151 = vpop.f32.mrf.mxu0
        %v2152 = vadd.f32 %v2015, %v2151
        %2153 = vmatmul.f32.gmra.mxu0 %v320
        %v2154 = vpop.f32.mrf.mxu0
        %v2155 = vadd.f32 %v2018, %v2154
        %2156 = vmatmul.f32.gmra.mxu0 %v323
        %v2157 = vpop.f32.mrf.mxu0
        %v2158 = vadd.f32 %v2021, %v2157
        %2159 = vmatmul.f32.gmra.mxu0 %v326
        %v2160 = vpop.f32.mrf.mxu0
        %v2161 = vadd.f32 %v2024, %v2160
        %2162 = vmatmul.f32.gmra.mxu0 %v329
        %v2163 = vpop.f32.mrf.mxu0
        %v2164 = vadd.f32 %v2027, %v2163
        %2165 = vmatmul.f32.gmra.mxu0 %v332
        %v2166 = vpop.f32.mrf.mxu0
        %v2167 = vadd.f32 %v2030, %v2166
        %2168 = vmatmul.f32.gmra.mxu0 %v335
        %v2169 = vpop.f32.mrf.mxu0
        %v2170 = vadd.f32 %v2033, %v2169
        %2171 = vmatmul.f32.gmra.mxu0 %v338
        %v2172 = vpop.f32.mrf.mxu0
        %v2173 = vadd.f32 %v2036, %v2172
        %2174 = vmatmul.f32.gmra.mxu0 %v341
        %v2175 = vpop.f32.mrf.mxu0
        %v2176 = vadd.f32 %v2039, %v2175
        %2177 = vmatmul.f32.gmra.mxu0 %v344
        %v2178 = vpop.f32.mrf.mxu0
        %v2179 = vadd.f32 %v2042, %v2178
        %2180 = vmatmul.f32.gmra.mxu0 %v347
        %v2181 = vpop.f32.mrf.mxu0
        %v2182 = vadd.f32 %v2045, %v2181
        %2183 = vmatmul.f32.gmra.mxu0 %v350
        %v2184 = vpop.f32.mrf.mxu0
        %v2185 = vadd.f32 %v2048, %v2184
        %2186 = vmatmul.f32.gmra.mxu0 %v353
        %v2187 = vpop.f32.mrf.mxu0
        %v2188 = vadd.f32 %v2051, %v2187
        %2189 = vmatmul.f32.gmra.mxu0 %v356
        %v2190 = vpop.f32.mrf.mxu0
        %v2191 = vadd.f32 %v2054, %v2190
        %2192 = vmatmul.f32.gmra.mxu0 %v359
        %v2193 = vpop.f32.mrf.mxu0
        %v2194 = vadd.f32 %v2057, %v2193
        %2195 = vmatmul.f32.gmra.mxu0 %v362
        %v2196 = vpop.f32.mrf.mxu0
        %v2197 = vadd.f32 %v2060, %v2196
        %2198 = vmatmul.f32.gmra.mxu0 %v365
        %v2199 = vpop.f32.mrf.mxu0
        %v2200 = vadd.f32 %v2063, %v2199
        %2201 = vmatmul.f32.gmra.mxu0 %v368
        %v2202 = vpop.f32.mrf.mxu0
        %v2203 = vadd.f32 %v2066, %v2202
        %2204 = vmatmul.f32.gmra.mxu0 %v371
        %v2205 = vpop.f32.mrf.mxu0
        %v2206 = vadd.f32 %v2069, %v2205
        %2207 = vmatmul.f32.gmra.mxu0 %v374
        %v2208 = vpop.f32.mrf.mxu0
        %v2209 = vadd.f32 %v2072, %v2208
        %2210 = vmatmul.f32.gmra.mxu0 %v377
        %v2211 = vpop.f32.mrf.mxu0
        %v2212 = vadd.f32 %v2075, %v2211
        %2213 = vmatmul.f32.gmra.mxu0 %v380
        %v2214 = vpop.f32.mrf.mxu0
        %v2215 = vadd.f32 %v2078, %v2214
        %2216 = vmatmul.f32.gmra.mxu0 %v383
        %v2217 = vpop.f32.mrf.mxu0
        %v2218 = vadd.f32 %v2081, %v2217
        %2219 = vmatmul.f32.gmra.mxu0 %v386
        %v2220 = vpop.f32.mrf.mxu0
        %v2221 = vadd.f32 %v2084, %v2220
        %2222 = vmatmul.f32.gmra.mxu0 %v389
        %v2223 = vpop.f32.mrf.mxu0
        %v2224 = vadd.f32 %v2087, %v2223
        %2225 = vmatmul.f32.gmra.mxu0 %v392
        %v2226 = vpop.f32.mrf.mxu0
        %v2227 = vadd.f32 %v2090, %v2226
        %2228 = vmatmul.f32.gmra.mxu0 %v395
        %v2229 = vpop.f32.mrf.mxu0
        %v2230 = vadd.f32 %v2093, %v2229
        %2231 = vmatmul.f32.gmra.mxu0 %v398
        %v2232 = vpop.f32.mrf.mxu0
        %v2233 = vadd.f32 %v2096, %v2232
        %2234 = vmatmul.f32.gmra.mxu0 %v401
        %v2235 = vpop.f32.mrf.mxu0
        %v2236 = vadd.f32 %v2099, %v2235
        %2237 = vmatmul.f32.gmra.mxu0 %v404
        %v2238 = vpop.f32.mrf.mxu0
        %v2239 = vadd.f32 %v2102, %v2238
        %2240 = vmatmul.f32.gmra.mxu0 %v407
        %v2241 = vpop.f32.mrf.mxu0
        %v2242 = vadd.f32 %v2105, %v2241
        %2243 = vdwg.mxu0
        %p2244 = scmp.eq.s32.totalorder %s30, 0
        // Predicated region
        $region41: #{tpu_custom_call.1} parent=31 // pred_check
          %p2245 = pneg %p2244
        $region42: #{tpu_custom_call.1} parent=31 // pred_check_branch
          %2247 = sbr.rel (%p2245) target = $region44
        $region43: #{tpu_custom_call.1} parent=31 // pred_region
          %v2248 = vld [vmem:[%s284] sm:$0xff]
          %v2249 = vld [vmem:[%s284 + $0x8] sm:$0xff]
          %v2250 = vld [vmem:[%s284 + $0x10] sm:$0xff]
          %v2251 = vld [vmem:[%s284 + $0x18] sm:$0xff]
          %v2252 = vld [vmem:[%s284 + $0x20] sm:$0xff]
          %v2253 = vld [vmem:[%s284 + $0x28] sm:$0xff]
          %v2254 = vld [vmem:[%s284 + $0x30] sm:$0xff]
          %v2255 = vld [vmem:[%s284 + $0x38] sm:$0xff]
          %v2256 = vld [vmem:[%s284 + $0x40] sm:$0xff]
          %v2257 = vld [vmem:[%s284 + $0x48] sm:$0xff]
          %v2258 = vld [vmem:[%s284 + $0x50] sm:$0xff]
          %v2259 = vld [vmem:[%s284 + $0x58] sm:$0xff]
          %v2260 = vld [vmem:[%s284 + $0x60] sm:$0xff]
          %v2261 = vld [vmem:[%s284 + $0x68] sm:$0xff]
          %v2262 = vld [vmem:[%s284 + $0x70] sm:$0xff]
          %v2263 = vld [vmem:[%s284 + $0x78] sm:$0xff]
          %v2264 = vld [vmem:[%s284 + $0x80] sm:$0xff]
          %v2265 = vld [vmem:[%s284 + $0x88] sm:$0xff]
          %v2266 = vld [vmem:[%s284 + $0x90] sm:$0xff]
          %v2267 = vld [vmem:[%s284 + $0x98] sm:$0xff]
          %v2268 = vld [vmem:[%s284 + $0xa0] sm:$0xff]
          %v2269 = vld [vmem:[%s284 + $0xa8] sm:$0xff]
          %v2270 = vld [vmem:[%s284 + $0xb0] sm:$0xff]
          %v2271 = vld [vmem:[%s284 + $0xb8] sm:$0xff]
          %v2272 = vld [vmem:[%s284 + $0xc0] sm:$0xff]
          %v2273 = vld [vmem:[%s284 + $0xc8] sm:$0xff]
          %v2274 = vld [vmem:[%s284 + $0xd0] sm:$0xff]
          %v2275 = vld [vmem:[%s284 + $0xd8] sm:$0xff]
          %v2276 = vld [vmem:[%s284 + $0xe0] sm:$0xff]
          %v2277 = vld [vmem:[%s284 + $0xe8] sm:$0xff]
          %v2278 = vld [vmem:[%s284 + $0xf0] sm:$0xff]
          %v2279 = vld [vmem:[%s284 + $0xf8] sm:$0xff]
          %v2280 = vld [vmem:[%s284 + $0x100] sm:$0xff]
          %v2281 = vld [vmem:[%s284 + $0x108] sm:$0xff]
          %v2282 = vld [vmem:[%s284 + $0x110] sm:$0xff]
          %v2283 = vld [vmem:[%s284 + $0x118] sm:$0xff]
          %v2284 = vld [vmem:[%s284 + $0x120] sm:$0xff]
          %v2285 = vld [vmem:[%s284 + $0x128] sm:$0xff]
          %v2286 = vld [vmem:[%s284 + $0x130] sm:$0xff]
          %v2287 = vld [vmem:[%s284 + $0x138] sm:$0xff]
          %2289 = vset.pattern.permute.xlu0 0
          %2290 = vperm.xlu0 %2289, %v2248
          %v2291 = vpop.permute.xlu0 %2290
          %2294 = vset.pattern.permute.xlu0 0
          %2295 = vperm.xlu0 %2294, %v2249
          %v2296 = vpop.permute.xlu0 %2295
          %2299 = vset.pattern.permute.xlu0 0
          %2300 = vperm.xlu0 %2299, %v2250
          %v2301 = vpop.permute.xlu0 %2300
          %2304 = vset.pattern.permute.xlu0 0
          %2305 = vperm.xlu0 %2304, %v2251
          %v2306 = vpop.permute.xlu0 %2305
          %2309 = vset.pattern.permute.xlu0 0
          %2310 = vperm.xlu0 %2309, %v2252
          %v2311 = vpop.permute.xlu0 %2310
          %2314 = vset.pattern.permute.xlu0 0
          %2315 = vperm.xlu0 %2314, %v2253
          %v2316 = vpop.permute.xlu0 %2315
          %2319 = vset.pattern.permute.xlu0 0
          %2320 = vperm.xlu0 %2319, %v2254
          %v2321 = vpop.permute.xlu0 %2320
          %2324 = vset.pattern.permute.xlu0 0
          %2325 = vperm.xlu0 %2324, %v2255
          %v2326 = vpop.permute.xlu0 %2325
          %2329 = vset.pattern.permute.xlu0 0
          %2330 = vperm.xlu0 %2329, %v2256
          %v2331 = vpop.permute.xlu0 %2330
          %2334 = vset.pattern.permute.xlu0 0
          %2335 = vperm.xlu0 %2334, %v2257
          %v2336 = vpop.permute.xlu0 %2335
          %2339 = vset.pattern.permute.xlu0 0
          %2340 = vperm.xlu0 %2339, %v2258
          %v2341 = vpop.permute.xlu0 %2340
          %2344 = vset.pattern.permute.xlu0 0
          %2345 = vperm.xlu0 %2344, %v2259
          %v2346 = vpop.permute.xlu0 %2345
          %2349 = vset.pattern.permute.xlu0 0
          %2350 = vperm.xlu0 %2349, %v2260
          %v2351 = vpop.permute.xlu0 %2350
          %2354 = vset.pattern.permute.xlu0 0
          %2355 = vperm.xlu0 %2354, %v2261
          %v2356 = vpop.permute.xlu0 %2355
          %2359 = vset.pattern.permute.xlu0 0
          %2360 = vperm.xlu0 %2359, %v2262
          %v2361 = vpop.permute.xlu0 %2360
          %2364 = vset.pattern.permute.xlu0 0
          %2365 = vperm.xlu0 %2364, %v2263
          %v2366 = vpop.permute.xlu0 %2365
          %2369 = vset.pattern.permute.xlu0 0
          %2370 = vperm.xlu0 %2369, %v2264
          %v2371 = vpop.permute.xlu0 %2370
          %2374 = vset.pattern.permute.xlu0 0
          %2375 = vperm.xlu0 %2374, %v2265
          %v2376 = vpop.permute.xlu0 %2375
          %2379 = vset.pattern.permute.xlu0 0
          %2380 = vperm.xlu0 %2379, %v2266
          %v2381 = vpop.permute.xlu0 %2380
          %2384 = vset.pattern.permute.xlu0 0
          %2385 = vperm.xlu0 %2384, %v2267
          %v2386 = vpop.permute.xlu0 %2385
          %2389 = vset.pattern.permute.xlu0 0
          %2390 = vperm.xlu0 %2389, %v2268
          %v2391 = vpop.permute.xlu0 %2390
          %2394 = vset.pattern.permute.xlu0 0
          %2395 = vperm.xlu0 %2394, %v2269
          %v2396 = vpop.permute.xlu0 %2395
          %2399 = vset.pattern.permute.xlu0 0
          %2400 = vperm.xlu0 %2399, %v2270
          %v2401 = vpop.permute.xlu0 %2400
          %2404 = vset.pattern.permute.xlu0 0
          %2405 = vperm.xlu0 %2404, %v2271
          %v2406 = vpop.permute.xlu0 %2405
          %2409 = vset.pattern.permute.xlu0 0
          %2410 = vperm.xlu0 %2409, %v2272
          %v2411 = vpop.permute.xlu0 %2410
          %2414 = vset.pattern.permute.xlu0 0
          %2415 = vperm.xlu0 %2414, %v2273
          %v2416 = vpop.permute.xlu0 %2415
          %2419 = vset.pattern.permute.xlu0 0
          %2420 = vperm.xlu0 %2419, %v2274
          %v2421 = vpop.permute.xlu0 %2420
          %2424 = vset.pattern.permute.xlu0 0
          %2425 = vperm.xlu0 %2424, %v2275
          %v2426 = vpop.permute.xlu0 %2425
          %2429 = vset.pattern.permute.xlu0 0
          %2430 = vperm.xlu0 %2429, %v2276
          %v2431 = vpop.permute.xlu0 %2430
          %2434 = vset.pattern.permute.xlu0 0
          %2435 = vperm.xlu0 %2434, %v2277
          %v2436 = vpop.permute.xlu0 %2435
          %2439 = vset.pattern.permute.xlu0 0
          %2440 = vperm.xlu0 %2439, %v2278
          %v2441 = vpop.permute.xlu0 %2440
          %2444 = vset.pattern.permute.xlu0 0
          %2445 = vperm.xlu0 %2444, %v2279
          %v2446 = vpop.permute.xlu0 %2445
          %2449 = vset.pattern.permute.xlu0 0
          %2450 = vperm.xlu0 %2449, %v2280
          %v2451 = vpop.permute.xlu0 %2450
          %2454 = vset.pattern.permute.xlu0 0
          %2455 = vperm.xlu0 %2454, %v2281
          %v2456 = vpop.permute.xlu0 %2455
          %2459 = vset.pattern.permute.xlu0 0
          %2460 = vperm.xlu0 %2459, %v2282
          %v2461 = vpop.permute.xlu0 %2460
          %2464 = vset.pattern.permute.xlu0 0
          %2465 = vperm.xlu0 %2464, %v2283
          %v2466 = vpop.permute.xlu0 %2465
          %2469 = vset.pattern.permute.xlu0 0
          %2470 = vperm.xlu0 %2469, %v2284
          %v2471 = vpop.permute.xlu0 %2470
          %2474 = vset.pattern.permute.xlu0 0
          %2475 = vperm.xlu0 %2474, %v2285
          %v2476 = vpop.permute.xlu0 %2475
          %2479 = vset.pattern.permute.xlu0 0
          %2480 = vperm.xlu0 %2479, %v2286
          %v2481 = vpop.permute.xlu0 %2480
          %2484 = vset.pattern.permute.xlu0 0
          %2485 = vperm.xlu0 %2484, %v2287
          %v2486 = vpop.permute.xlu0 %2485
          %v2488 = vadd.f32 %v892, %v2291
          %v2489 = vadd.f32 %v1303, %v2291
          %v2490 = vadd.f32 %v1714, %v2291
          %v2491 = vadd.f32 %v2125, %v2291
          %v2492 = vadd.f32 %v895, %v2296
          %v2493 = vadd.f32 %v1306, %v2296
          %v2494 = vadd.f32 %v1717, %v2296
          %v2495 = vadd.f32 %v2128, %v2296
          %v2496 = vadd.f32 %v898, %v2301
          %v2497 = vadd.f32 %v1309, %v2301
          %v2498 = vadd.f32 %v1720, %v2301
          %v2499 = vadd.f32 %v2131, %v2301
          %v2500 = vadd.f32 %v901, %v2306
          %v2501 = vadd.f32 %v1312, %v2306
          %v2502 = vadd.f32 %v1723, %v2306
          %v2503 = vadd.f32 %v2134, %v2306
          %v2504 = vadd.f32 %v904, %v2311
          %v2505 = vadd.f32 %v1315, %v2311
          %v2506 = vadd.f32 %v1726, %v2311
          %v2507 = vadd.f32 %v2137, %v2311
          %v2508 = vadd.f32 %v907, %v2316
          %v2509 = vadd.f32 %v1318, %v2316
          %v2510 = vadd.f32 %v1729, %v2316
          %v2511 = vadd.f32 %v2140, %v2316
          %v2512 = vadd.f32 %v910, %v2321
          %v2513 = vadd.f32 %v1321, %v2321
          %v2514 = vadd.f32 %v1732, %v2321
          %v2515 = vadd.f32 %v2143, %v2321
          %v2516 = vadd.f32 %v913, %v2326
          %v2517 = vadd.f32 %v1324, %v2326
          %v2518 = vadd.f32 %v1735, %v2326
          %v2519 = vadd.f32 %v2146, %v2326
          %v2520 = vadd.f32 %v916, %v2331
          %v2521 = vadd.f32 %v1327, %v2331
          %v2522 = vadd.f32 %v1738, %v2331
          %v2523 = vadd.f32 %v2149, %v2331
          %v2524 = vadd.f32 %v919, %v2336
          %v2525 = vadd.f32 %v1330, %v2336
          %v2526 = vadd.f32 %v1741, %v2336
          %v2527 = vadd.f32 %v2152, %v2336
          %v2528 = vadd.f32 %v922, %v2341
          %v2529 = vadd.f32 %v1333, %v2341
          %v2530 = vadd.f32 %v1744, %v2341
          %v2531 = vadd.f32 %v2155, %v2341
          %v2532 = vadd.f32 %v925, %v2346
          %v2533 = vadd.f32 %v1336, %v2346
          %v2534 = vadd.f32 %v1747, %v2346
          %v2535 = vadd.f32 %v2158, %v2346
          %v2536 = vadd.f32 %v928, %v2351
          %v2537 = vadd.f32 %v1339, %v2351
          %v2538 = vadd.f32 %v1750, %v2351
          %v2539 = vadd.f32 %v2161, %v2351
          %v2540 = vadd.f32 %v931, %v2356
          %v2541 = vadd.f32 %v1342, %v2356
          %v2542 = vadd.f32 %v1753, %v2356
          %v2543 = vadd.f32 %v2164, %v2356
          %v2544 = vadd.f32 %v934, %v2361
          %v2545 = vadd.f32 %v1345, %v2361
          %v2546 = vadd.f32 %v1756, %v2361
          %v2547 = vadd.f32 %v2167, %v2361
          %v2548 = vadd.f32 %v937, %v2366
          %v2549 = vadd.f32 %v1348, %v2366
          %v2550 = vadd.f32 %v1759, %v2366
          %v2551 = vadd.f32 %v2170, %v2366
          %v2552 = vadd.f32 %v940, %v2371
          %v2553 = vadd.f32 %v1351, %v2371
          %v2554 = vadd.f32 %v1762, %v2371
          %v2555 = vadd.f32 %v2173, %v2371
          %v2556 = vadd.f32 %v943, %v2376
          %v2557 = vadd.f32 %v1354, %v2376
          %v2558 = vadd.f32 %v1765, %v2376
          %v2559 = vadd.f32 %v2176, %v2376
          %v2560 = vadd.f32 %v946, %v2381
          %v2561 = vadd.f32 %v1357, %v2381
          %v2562 = vadd.f32 %v1768, %v2381
          %v2563 = vadd.f32 %v2179, %v2381
          %v2564 = vadd.f32 %v949, %v2386
          %v2565 = vadd.f32 %v1360, %v2386
          %v2566 = vadd.f32 %v1771, %v2386
          %v2567 = vadd.f32 %v2182, %v2386
          %v2568 = vadd.f32 %v952, %v2391
          %v2569 = vadd.f32 %v1363, %v2391
          %v2570 = vadd.f32 %v1774, %v2391
          %v2571 = vadd.f32 %v2185, %v2391
          %v2572 = vadd.f32 %v955, %v2396
          %v2573 = vadd.f32 %v1366, %v2396
          %v2574 = vadd.f32 %v1777, %v2396
          %v2575 = vadd.f32 %v2188, %v2396
          %v2576 = vadd.f32 %v958, %v2401
          %v2577 = vadd.f32 %v1369, %v2401
          %v2578 = vadd.f32 %v1780, %v2401
          %v2579 = vadd.f32 %v2191, %v2401
          %v2580 = vadd.f32 %v961, %v2406
          %v2581 = vadd.f32 %v1372, %v2406
          %v2582 = vadd.f32 %v1783, %v2406
          %v2583 = vadd.f32 %v2194, %v2406
          %v2584 = vadd.f32 %v964, %v2411
          %v2585 = vadd.f32 %v1375, %v2411
          %v2586 = vadd.f32 %v1786, %v2411
          %v2587 = vadd.f32 %v2197, %v2411
          %v2588 = vadd.f32 %v967, %v2416
          %v2589 = vadd.f32 %v1378, %v2416
          %v2590 = vadd.f32 %v1789, %v2416
          %v2591 = vadd.f32 %v2200, %v2416
          %v2592 = vadd.f32 %v970, %v2421
          %v2593 = vadd.f32 %v1381, %v2421
          %v2594 = vadd.f32 %v1792, %v2421
          %v2595 = vadd.f32 %v2203, %v2421
          %v2596 = vadd.f32 %v973, %v2426
          %v2597 = vadd.f32 %v1384, %v2426
          %v2598 = vadd.f32 %v1795, %v2426
          %v2599 = vadd.f32 %v2206, %v2426
          %v2600 = vadd.f32 %v976, %v2431
          %v2601 = vadd.f32 %v1387, %v2431
          %v2602 = vadd.f32 %v1798, %v2431
          %v2603 = vadd.f32 %v2209, %v2431
          %v2604 = vadd.f32 %v979, %v2436
          %v2605 = vadd.f32 %v1390, %v2436
          %v2606 = vadd.f32 %v1801, %v2436
          %v2607 = vadd.f32 %v2212, %v2436
          %v2608 = vadd.f32 %v982, %v2441
          %v2609 = vadd.f32 %v1393, %v2441
          %v2610 = vadd.f32 %v1804, %v2441
          %v2611 = vadd.f32 %v2215, %v2441
          %v2612 = vadd.f32 %v985, %v2446
          %v2613 = vadd.f32 %v1396, %v2446
          %v2614 = vadd.f32 %v1807, %v2446
          %v2615 = vadd.f32 %v2218, %v2446
          %v2616 = vadd.f32 %v988, %v2451
          %v2617 = vadd.f32 %v1399, %v2451
          %v2618 = vadd.f32 %v1810, %v2451
          %v2619 = vadd.f32 %v2221, %v2451
          %v2620 = vadd.f32 %v991, %v2456
          %v2621 = vadd.f32 %v1402, %v2456
          %v2622 = vadd.f32 %v1813, %v2456
          %v2623 = vadd.f32 %v2224, %v2456
          %v2624 = vadd.f32 %v994, %v2461
          %v2625 = vadd.f32 %v1405, %v2461
          %v2626 = vadd.f32 %v1816, %v2461
          %v2627 = vadd.f32 %v2227, %v2461
          %v2628 = vadd.f32 %v997, %v2466
          %v2629 = vadd.f32 %v1408, %v2466
          %v2630 = vadd.f32 %v1819, %v2466
          %v2631 = vadd.f32 %v2230, %v2466
          %v2632 = vadd.f32 %v1000, %v2471
          %v2633 = vadd.f32 %v1411, %v2471
          %v2634 = vadd.f32 %v1822, %v2471
          %v2635 = vadd.f32 %v2233, %v2471
          %v2636 = vadd.f32 %v1003, %v2476
          %v2637 = vadd.f32 %v1414, %v2476
          %v2638 = vadd.f32 %v1825, %v2476
          %v2639 = vadd.f32 %v2236, %v2476
          %v2640 = vadd.f32 %v1006, %v2481
          %v2641 = vadd.f32 %v1417, %v2481
          %v2642 = vadd.f32 %v1828, %v2481
          %v2643 = vadd.f32 %v2239, %v2481
          %v2644 = vadd.f32 %v1009, %v2486
          %v2645 = vadd.f32 %v1420, %v2486
          %v2646 = vadd.f32 %v1831, %v2486
          %v2647 = vadd.f32 %v2242, %v2486
          %2648 = vst [vmem:[%s275] sm:$0xff] %v2488
          %2649 = vst [vmem:[%s275 + $0x8] sm:$0xff] %v2489
          %2650 = vst [vmem:[%s275 + $0x10] sm:$0xff] %v2490
          %2651 = vst [vmem:[%s275 + $0x18] sm:$0xff] %v2491
          %2652 = vst [vmem:[%s275 + $0x20] sm:$0xff] %v2492
          %2653 = vst [vmem:[%s275 + $0x28] sm:$0xff] %v2493
          %2654 = vst [vmem:[%s275 + $0x30] sm:$0xff] %v2494
          %2655 = vst [vmem:[%s275 + $0x38] sm:$0xff] %v2495
          %2656 = vst [vmem:[%s275 + $0x40] sm:$0xff] %v2496
          %2657 = vst [vmem:[%s275 + $0x48] sm:$0xff] %v2497
          %2658 = vst [vmem:[%s275 + $0x50] sm:$0xff] %v2498
          %2659 = vst [vmem:[%s275 + $0x58] sm:$0xff] %v2499
          %2660 = vst [vmem:[%s275 + $0x60] sm:$0xff] %v2500
          %2661 = vst [vmem:[%s275 + $0x68] sm:$0xff] %v2501
          %2662 = vst [vmem:[%s275 + $0x70] sm:$0xff] %v2502
          %2663 = vst [vmem:[%s275 + $0x78] sm:$0xff] %v2503
          %2664 = vst [vmem:[%s275 + $0x80] sm:$0xff] %v2504
          %2665 = vst [vmem:[%s275 + $0x88] sm:$0xff] %v2505
          %2666 = vst [vmem:[%s275 + $0x90] sm:$0xff] %v2506
          %2667 = vst [vmem:[%s275 + $0x98] sm:$0xff] %v2507
          %2668 = vst [vmem:[%s275 + $0xa0] sm:$0xff] %v2508
          %2669 = vst [vmem:[%s275 + $0xa8] sm:$0xff] %v2509
          %2670 = vst [vmem:[%s275 + $0xb0] sm:$0xff] %v2510
          %2671 = vst [vmem:[%s275 + $0xb8] sm:$0xff] %v2511
          %2672 = vst [vmem:[%s275 + $0xc0] sm:$0xff] %v2512
          %2673 = vst [vmem:[%s275 + $0xc8] sm:$0xff] %v2513
          %2674 = vst [vmem:[%s275 + $0xd0] sm:$0xff] %v2514
          %2675 = vst [vmem:[%s275 + $0xd8] sm:$0xff] %v2515
          %2676 = vst [vmem:[%s275 + $0xe0] sm:$0xff] %v2516
          %2677 = vst [vmem:[%s275 + $0xe8] sm:$0xff] %v2517
          %2678 = vst [vmem:[%s275 + $0xf0] sm:$0xff] %v2518
          %2679 = vst [vmem:[%s275 + $0xf8] sm:$0xff] %v2519
          %2680 = vst [vmem:[%s275 + $0x100] sm:$0xff] %v2520
          %2681 = vst [vmem:[%s275 + $0x108] sm:$0xff] %v2521
          %2682 = vst [vmem:[%s275 + $0x110] sm:$0xff] %v2522
          %2683 = vst [vmem:[%s275 + $0x118] sm:$0xff] %v2523
          %2684 = vst [vmem:[%s275 + $0x120] sm:$0xff] %v2524
          %2685 = vst [vmem:[%s275 + $0x128] sm:$0xff] %v2525
          %2686 = vst [vmem:[%s275 + $0x130] sm:$0xff] %v2526
          %2687 = vst [vmem:[%s275 + $0x138] sm:$0xff] %v2527
          %2688 = vst [vmem:[%s275 + $0x140] sm:$0xff] %v2528
          %2689 = vst [vmem:[%s275 + $0x148] sm:$0xff] %v2529
          %2690 = vst [vmem:[%s275 + $0x150] sm:$0xff] %v2530
          %2691 = vst [vmem:[%s275 + $0x158] sm:$0xff] %v2531
          %2692 = vst [vmem:[%s275 + $0x160] sm:$0xff] %v2532
          %2693 = vst [vmem:[%s275 + $0x168] sm:$0xff] %v2533
          %2694 = vst [vmem:[%s275 + $0x170] sm:$0xff] %v2534
          %2695 = vst [vmem:[%s275 + $0x178] sm:$0xff] %v2535
          %2696 = vst [vmem:[%s275 + $0x180] sm:$0xff] %v2536
          %2697 = vst [vmem:[%s275 + $0x188] sm:$0xff] %v2537
          %2698 = vst [vmem:[%s275 + $0x190] sm:$0xff] %v2538
          %2699 = vst [vmem:[%s275 + $0x198] sm:$0xff] %v2539
          %2700 = vst [vmem:[%s275 + $0x1a0] sm:$0xff] %v2540
          %2701 = vst [vmem:[%s275 + $0x1a8] sm:$0xff] %v2541
          %2702 = vst [vmem:[%s275 + $0x1b0] sm:$0xff] %v2542
          %2703 = vst [vmem:[%s275 + $0x1b8] sm:$0xff] %v2543
          %2704 = vst [vmem:[%s275 + $0x1c0] sm:$0xff] %v2544
          %2705 = vst [vmem:[%s275 + $0x1c8] sm:$0xff] %v2545
          %2706 = vst [vmem:[%s275 + $0x1d0] sm:$0xff] %v2546
          %2707 = vst [vmem:[%s275 + $0x1d8] sm:$0xff] %v2547
          %2708 = vst [vmem:[%s275 + $0x1e0] sm:$0xff] %v2548
          %2709 = vst [vmem:[%s275 + $0x1e8] sm:$0xff] %v2549
          %2710 = vst [vmem:[%s275 + $0x1f0] sm:$0xff] %v2550
          %2711 = vst [vmem:[%s275 + $0x1f8] sm:$0xff] %v2551
          %2712 = vst [vmem:[%s275 + $0x200] sm:$0xff] %v2552
          %2713 = vst [vmem:[%s275 + $0x208] sm:$0xff] %v2553
          %2714 = vst [vmem:[%s275 + $0x210] sm:$0xff] %v2554
          %2715 = vst [vmem:[%s275 + $0x218] sm:$0xff] %v2555
          %2716 = vst [vmem:[%s275 + $0x220] sm:$0xff] %v2556
          %2717 = vst [vmem:[%s275 + $0x228] sm:$0xff] %v2557
          %2718 = vst [vmem:[%s275 + $0x230] sm:$0xff] %v2558
          %2719 = vst [vmem:[%s275 + $0x238] sm:$0xff] %v2559
          %2720 = vst [vmem:[%s275 + $0x240] sm:$0xff] %v2560
          %2721 = vst [vmem:[%s275 + $0x248] sm:$0xff] %v2561
          %2722 = vst [vmem:[%s275 + $0x250] sm:$0xff] %v2562
          %2723 = vst [vmem:[%s275 + $0x258] sm:$0xff] %v2563
          %2724 = vst [vmem:[%s275 + $0x260] sm:$0xff] %v2564
          %2725 = vst [vmem:[%s275 + $0x268] sm:$0xff] %v2565
          %2726 = vst [vmem:[%s275 + $0x270] sm:$0xff] %v2566
          %2727 = vst [vmem:[%s275 + $0x278] sm:$0xff] %v2567
          %2728 = vst [vmem:[%s275 + $0x280] sm:$0xff] %v2568
          %2729 = vst [vmem:[%s275 + $0x288] sm:$0xff] %v2569
          %2730 = vst [vmem:[%s275 + $0x290] sm:$0xff] %v2570
          %2731 = vst [vmem:[%s275 + $0x298] sm:$0xff] %v2571
          %2732 = vst [vmem:[%s275 + $0x2a0] sm:$0xff] %v2572
          %2733 = vst [vmem:[%s275 + $0x2a8] sm:$0xff] %v2573
          %2734 = vst [vmem:[%s275 + $0x2b0] sm:$0xff] %v2574
          %2735 = vst [vmem:[%s275 + $0x2b8] sm:$0xff] %v2575
          %2736 = vst [vmem:[%s275 + $0x2c0] sm:$0xff] %v2576
          %2737 = vst [vmem:[%s275 + $0x2c8] sm:$0xff] %v2577
          %2738 = vst [vmem:[%s275 + $0x2d0] sm:$0xff] %v2578
          %2739 = vst [vmem:[%s275 + $0x2d8] sm:$0xff] %v2579
          %2740 = vst [vmem:[%s275 + $0x2e0] sm:$0xff] %v2580
          %2741 = vst [vmem:[%s275 + $0x2e8] sm:$0xff] %v2581
          %2742 = vst [vmem:[%s275 + $0x2f0] sm:$0xff] %v2582
          %2743 = vst [vmem:[%s275 + $0x2f8] sm:$0xff] %v2583
          %2744 = vst [vmem:[%s275 + $0x300] sm:$0xff] %v2584
          %2745 = vst [vmem:[%s275 + $0x308] sm:$0xff] %v2585
          %2746 = vst [vmem:[%s275 + $0x310] sm:$0xff] %v2586
          %2747 = vst [vmem:[%s275 + $0x318] sm:$0xff] %v2587
          %2748 = vst [vmem:[%s275 + $0x320] sm:$0xff] %v2588
          %2749 = vst [vmem:[%s275 + $0x328] sm:$0xff] %v2589
          %2750 = vst [vmem:[%s275 + $0x330] sm:$0xff] %v2590
          %2751 = vst [vmem:[%s275 + $0x338] sm:$0xff] %v2591
          %2752 = vst [vmem:[%s275 + $0x340] sm:$0xff] %v2592
          %2753 = vst [vmem:[%s275 + $0x348] sm:$0xff] %v2593
          %2754 = vst [vmem:[%s275 + $0x350] sm:$0xff] %v2594
          %2755 = vst [vmem:[%s275 + $0x358] sm:$0xff] %v2595
          %2756 = vst [vmem:[%s275 + $0x360] sm:$0xff] %v2596
          %2757 = vst [vmem:[%s275 + $0x368] sm:$0xff] %v2597
          %2758 = vst [vmem:[%s275 + $0x370] sm:$0xff] %v2598
          %2759 = vst [vmem:[%s275 + $0x378] sm:$0xff] %v2599
          %2760 = vst [vmem:[%s275 + $0x380] sm:$0xff] %v2600
          %2761 = vst [vmem:[%s275 + $0x388] sm:$0xff] %v2601
          %2762 = vst [vmem:[%s275 + $0x390] sm:$0xff] %v2602
          %2763 = vst [vmem:[%s275 + $0x398] sm:$0xff] %v2603
          %2764 = vst [vmem:[%s275 + $0x3a0] sm:$0xff] %v2604
          %2765 = vst [vmem:[%s275 + $0x3a8] sm:$0xff] %v2605
          %2766 = vst [vmem:[%s275 + $0x3b0] sm:$0xff] %v2606
          %2767 = vst [vmem:[%s275 + $0x3b8] sm:$0xff] %v2607
          %2768 = vst [vmem:[%s275 + $0x3c0] sm:$0xff] %v2608
          %2769 = vst [vmem:[%s275 + $0x3c8] sm:$0xff] %v2609
          %2770 = vst [vmem:[%s275 + $0x3d0] sm:$0xff] %v2610
          %2771 = vst [vmem:[%s275 + $0x3d8] sm:$0xff] %v2611
          %2772 = vst [vmem:[%s275 + $0x3e0] sm:$0xff] %v2612
          %2773 = vst [vmem:[%s275 + $0x3e8] sm:$0xff] %v2613
          %2774 = vst [vmem:[%s275 + $0x3f0] sm:$0xff] %v2614
          %2775 = vst [vmem:[%s275 + $0x3f8] sm:$0xff] %v2615
          %2776 = vst [vmem:[%s275 + $0x400] sm:$0xff] %v2616
          %2777 = vst [vmem:[%s275 + $0x408] sm:$0xff] %v2617
          %2778 = vst [vmem:[%s275 + $0x410] sm:$0xff] %v2618
          %2779 = vst [vmem:[%s275 + $0x418] sm:$0xff] %v2619
          %2780 = vst [vmem:[%s275 + $0x420] sm:$0xff] %v2620
          %2781 = vst [vmem:[%s275 + $0x428] sm:$0xff] %v2621
          %2782 = vst [vmem:[%s275 + $0x430] sm:$0xff] %v2622
          %2783 = vst [vmem:[%s275 + $0x438] sm:$0xff] %v2623
          %2784 = vst [vmem:[%s275 + $0x440] sm:$0xff] %v2624
          %2785 = vst [vmem:[%s275 + $0x448] sm:$0xff] %v2625
          %2786 = vst [vmem:[%s275 + $0x450] sm:$0xff] %v2626
          %2787 = vst [vmem:[%s275 + $0x458] sm:$0xff] %v2627
          %2788 = vst [vmem:[%s275 + $0x460] sm:$0xff] %v2628
          %2789 = vst [vmem:[%s275 + $0x468] sm:$0xff] %v2629
          %2790 = vst [vmem:[%s275 + $0x470] sm:$0xff] %v2630
          %2791 = vst [vmem:[%s275 + $0x478] sm:$0xff] %v2631
          %2792 = vst [vmem:[%s275 + $0x480] sm:$0xff] %v2632
          %2793 = vst [vmem:[%s275 + $0x488] sm:$0xff] %v2633
          %2794 = vst [vmem:[%s275 + $0x490] sm:$0xff] %v2634
          %2795 = vst [vmem:[%s275 + $0x498] sm:$0xff] %v2635
          %2796 = vst [vmem:[%s275 + $0x4a0] sm:$0xff] %v2636
          %2797 = vst [vmem:[%s275 + $0x4a8] sm:$0xff] %v2637
          %2798 = vst [vmem:[%s275 + $0x4b0] sm:$0xff] %v2638
          %2799 = vst [vmem:[%s275 + $0x4b8] sm:$0xff] %v2639
          %2800 = vst [vmem:[%s275 + $0x4c0] sm:$0xff] %v2640
          %2801 = vst [vmem:[%s275 + $0x4c8] sm:$0xff] %v2641
          %2802 = vst [vmem:[%s275 + $0x4d0] sm:$0xff] %v2642
          %2803 = vst [vmem:[%s275 + $0x4d8] sm:$0xff] %v2643
          %2804 = vst [vmem:[%s275 + $0x4e0] sm:$0xff] %v2644
          %2805 = vst [vmem:[%s275 + $0x4e8] sm:$0xff] %v2645
          %2806 = vst [vmem:[%s275 + $0x4f0] sm:$0xff] %v2646
          %2807 = vst [vmem:[%s275 + $0x4f8] sm:$0xff] %v2647
        $region44: #{tpu_custom_call.1} parent=31 // pred_fallthru
          _
        %p2808 = scmp.gt.s32.totalorder %s30, 0
        // Predicated region
        $region45: #{tpu_custom_call.1} parent=31 // pred_check
          %p2809 = pneg %p2808
        $region46: #{tpu_custom_call.1} parent=31 // pred_check_branch
          %2811 = sbr.rel (%p2809) target = $region48
        $region47: #{tpu_custom_call.1} parent=31 // pred_region
          %v2812 = vld [vmem:[%s275] sm:$0xff]
          %v2813 = vld [vmem:[%s275 + $0x8] sm:$0xff]
          %v2814 = vld [vmem:[%s275 + $0x10] sm:$0xff]
          %v2815 = vld [vmem:[%s275 + $0x18] sm:$0xff]
          %v2816 = vld [vmem:[%s275 + $0x20] sm:$0xff]
          %v2817 = vld [vmem:[%s275 + $0x28] sm:$0xff]
          %v2818 = vld [vmem:[%s275 + $0x30] sm:$0xff]
          %v2819 = vld [vmem:[%s275 + $0x38] sm:$0xff]
          %v2820 = vld [vmem:[%s275 + $0x40] sm:$0xff]
          %v2821 = vld [vmem:[%s275 + $0x48] sm:$0xff]
          %v2822 = vld [vmem:[%s275 + $0x50] sm:$0xff]
          %v2823 = vld [vmem:[%s275 + $0x58] sm:$0xff]
          %v2824 = vld [vmem:[%s275 + $0x60] sm:$0xff]
          %v2825 = vld [vmem:[%s275 + $0x68] sm:$0xff]
          %v2826 = vld [vmem:[%s275 + $0x70] sm:$0xff]
          %v2827 = vld [vmem:[%s275 + $0x78] sm:$0xff]
          %v2828 = vld [vmem:[%s275 + $0x80] sm:$0xff]
          %v2829 = vld [vmem:[%s275 + $0x88] sm:$0xff]
          %v2830 = vld [vmem:[%s275 + $0x90] sm:$0xff]
          %v2831 = vld [vmem:[%s275 + $0x98] sm:$0xff]
          %v2832 = vld [vmem:[%s275 + $0xa0] sm:$0xff]
          %v2833 = vld [vmem:[%s275 + $0xa8] sm:$0xff]
          %v2834 = vld [vmem:[%s275 + $0xb0] sm:$0xff]
          %v2835 = vld [vmem:[%s275 + $0xb8] sm:$0xff]
          %v2836 = vld [vmem:[%s275 + $0xc0] sm:$0xff]
          %v2837 = vld [vmem:[%s275 + $0xc8] sm:$0xff]
          %v2838 = vld [vmem:[%s275 + $0xd0] sm:$0xff]
          %v2839 = vld [vmem:[%s275 + $0xd8] sm:$0xff]
          %v2840 = vld [vmem:[%s275 + $0xe0] sm:$0xff]
          %v2841 = vld [vmem:[%s275 + $0xe8] sm:$0xff]
          %v2842 = vld [vmem:[%s275 + $0xf0] sm:$0xff]
          %v2843 = vld [vmem:[%s275 + $0xf8] sm:$0xff]
          %v2844 = vld [vmem:[%s275 + $0x100] sm:$0xff]
          %v2845 = vld [vmem:[%s275 + $0x108] sm:$0xff]
          %v2846 = vld [vmem:[%s275 + $0x110] sm:$0xff]
          %v2847 = vld [vmem:[%s275 + $0x118] sm:$0xff]
          %v2848 = vld [vmem:[%s275 + $0x120] sm:$0xff]
          %v2849 = vld [vmem:[%s275 + $0x128] sm:$0xff]
          %v2850 = vld [vmem:[%s275 + $0x130] sm:$0xff]
          %v2851 = vld [vmem:[%s275 + $0x138] sm:$0xff]
          %v2852 = vld [vmem:[%s275 + $0x140] sm:$0xff]
          %v2853 = vld [vmem:[%s275 + $0x148] sm:$0xff]
          %v2854 = vld [vmem:[%s275 + $0x150] sm:$0xff]
          %v2855 = vld [vmem:[%s275 + $0x158] sm:$0xff]
          %v2856 = vld [vmem:[%s275 + $0x160] sm:$0xff]
          %v2857 = vld [vmem:[%s275 + $0x168] sm:$0xff]
          %v2858 = vld [vmem:[%s275 + $0x170] sm:$0xff]
          %v2859 = vld [vmem:[%s275 + $0x178] sm:$0xff]
          %v2860 = vld [vmem:[%s275 + $0x180] sm:$0xff]
          %v2861 = vld [vmem:[%s275 + $0x188] sm:$0xff]
          %v2862 = vld [vmem:[%s275 + $0x190] sm:$0xff]
          %v2863 = vld [vmem:[%s275 + $0x198] sm:$0xff]
          %v2864 = vld [vmem:[%s275 + $0x1a0] sm:$0xff]
          %v2865 = vld [vmem:[%s275 + $0x1a8] sm:$0xff]
          %v2866 = vld [vmem:[%s275 + $0x1b0] sm:$0xff]
          %v2867 = vld [vmem:[%s275 + $0x1b8] sm:$0xff]
          %v2868 = vld [vmem:[%s275 + $0x1c0] sm:$0xff]
          %v2869 = vld [vmem:[%s275 + $0x1c8] sm:$0xff]
          %v2870 = vld [vmem:[%s275 + $0x1d0] sm:$0xff]
          %v2871 = vld [vmem:[%s275 + $0x1d8] sm:$0xff]
          %v2872 = vld [vmem:[%s275 + $0x1e0] sm:$0xff]
          %v2873 = vld [vmem:[%s275 + $0x1e8] sm:$0xff]
          %v2874 = vld [vmem:[%s275 + $0x1f0] sm:$0xff]
          %v2875 = vld [vmem:[%s275 + $0x1f8] sm:$0xff]
          %v2876 = vld [vmem:[%s275 + $0x200] sm:$0xff]
          %v2877 = vld [vmem:[%s275 + $0x208] sm:$0xff]
          %v2878 = vld [vmem:[%s275 + $0x210] sm:$0xff]
          %v2879 = vld [vmem:[%s275 + $0x218] sm:$0xff]
          %v2880 = vld [vmem:[%s275 + $0x220] sm:$0xff]
          %v2881 = vld [vmem:[%s275 + $0x228] sm:$0xff]
          %v2882 = vld [vmem:[%s275 + $0x230] sm:$0xff]
          %v2883 = vld [vmem:[%s275 + $0x238] sm:$0xff]
          %v2884 = vld [vmem:[%s275 + $0x240] sm:$0xff]
          %v2885 = vld [vmem:[%s275 + $0x248] sm:$0xff]
          %v2886 = vld [vmem:[%s275 + $0x250] sm:$0xff]
          %v2887 = vld [vmem:[%s275 + $0x258] sm:$0xff]
          %v2888 = vld [vmem:[%s275 + $0x260] sm:$0xff]
          %v2889 = vld [vmem:[%s275 + $0x268] sm:$0xff]
          %v2890 = vld [vmem:[%s275 + $0x270] sm:$0xff]
          %v2891 = vld [vmem:[%s275 + $0x278] sm:$0xff]
          %v2892 = vld [vmem:[%s275 + $0x280] sm:$0xff]
          %v2893 = vld [vmem:[%s275 + $0x288] sm:$0xff]
          %v2894 = vld [vmem:[%s275 + $0x290] sm:$0xff]
          %v2895 = vld [vmem:[%s275 + $0x298] sm:$0xff]
          %v2896 = vld [vmem:[%s275 + $0x2a0] sm:$0xff]
          %v2897 = vld [vmem:[%s275 + $0x2a8] sm:$0xff]
          %v2898 = vld [vmem:[%s275 + $0x2b0] sm:$0xff]
          %v2899 = vld [vmem:[%s275 + $0x2b8] sm:$0xff]
          %v2900 = vld [vmem:[%s275 + $0x2c0] sm:$0xff]
          %v2901 = vld [vmem:[%s275 + $0x2c8] sm:$0xff]
          %v2902 = vld [vmem:[%s275 + $0x2d0] sm:$0xff]
          %v2903 = vld [vmem:[%s275 + $0x2d8] sm:$0xff]
          %v2904 = vld [vmem:[%s275 + $0x2e0] sm:$0xff]
          %v2905 = vld [vmem:[%s275 + $0x2e8] sm:$0xff]
          %v2906 = vld [vmem:[%s275 + $0x2f0] sm:$0xff]
          %v2907 = vld [vmem:[%s275 + $0x2f8] sm:$0xff]
          %v2908 = vld [vmem:[%s275 + $0x300] sm:$0xff]
          %v2909 = vld [vmem:[%s275 + $0x308] sm:$0xff]
          %v2910 = vld [vmem:[%s275 + $0x310] sm:$0xff]
          %v2911 = vld [vmem:[%s275 + $0x318] sm:$0xff]
          %v2912 = vld [vmem:[%s275 + $0x320] sm:$0xff]
          %v2913 = vld [vmem:[%s275 + $0x328] sm:$0xff]
          %v2914 = vld [vmem:[%s275 + $0x330] sm:$0xff]
          %v2915 = vld [vmem:[%s275 + $0x338] sm:$0xff]
          %v2916 = vld [vmem:[%s275 + $0x340] sm:$0xff]
          %v2917 = vld [vmem:[%s275 + $0x348] sm:$0xff]
          %v2918 = vld [vmem:[%s275 + $0x350] sm:$0xff]
          %v2919 = vld [vmem:[%s275 + $0x358] sm:$0xff]
          %v2920 = vld [vmem:[%s275 + $0x360] sm:$0xff]
          %v2921 = vld [vmem:[%s275 + $0x368] sm:$0xff]
          %v2922 = vld [vmem:[%s275 + $0x370] sm:$0xff]
          %v2923 = vld [vmem:[%s275 + $0x378] sm:$0xff]
          %v2924 = vld [vmem:[%s275 + $0x380] sm:$0xff]
          %v2925 = vld [vmem:[%s275 + $0x388] sm:$0xff]
          %v2926 = vld [vmem:[%s275 + $0x390] sm:$0xff]
          %v2927 = vld [vmem:[%s275 + $0x398] sm:$0xff]
          %v2928 = vld [vmem:[%s275 + $0x3a0] sm:$0xff]
          %v2929 = vld [vmem:[%s275 + $0x3a8] sm:$0xff]
          %v2930 = vld [vmem:[%s275 + $0x3b0] sm:$0xff]
          %v2931 = vld [vmem:[%s275 + $0x3b8] sm:$0xff]
          %v2932 = vld [vmem:[%s275 + $0x3c0] sm:$0xff]
          %v2933 = vld [vmem:[%s275 + $0x3c8] sm:$0xff]
          %v2934 = vld [vmem:[%s275 + $0x3d0] sm:$0xff]
          %v2935 = vld [vmem:[%s275 + $0x3d8] sm:$0xff]
          %v2936 = vld [vmem:[%s275 + $0x3e0] sm:$0xff]
          %v2937 = vld [vmem:[%s275 + $0x3e8] sm:$0xff]
          %v2938 = vld [vmem:[%s275 + $0x3f0] sm:$0xff]
          %v2939 = vld [vmem:[%s275 + $0x3f8] sm:$0xff]
          %v2940 = vld [vmem:[%s275 + $0x400] sm:$0xff]
          %v2941 = vld [vmem:[%s275 + $0x408] sm:$0xff]
          %v2942 = vld [vmem:[%s275 + $0x410] sm:$0xff]
          %v2943 = vld [vmem:[%s275 + $0x418] sm:$0xff]
          %v2944 = vld [vmem:[%s275 + $0x420] sm:$0xff]
          %v2945 = vld [vmem:[%s275 + $0x428] sm:$0xff]
          %v2946 = vld [vmem:[%s275 + $0x430] sm:$0xff]
          %v2947 = vld [vmem:[%s275 + $0x438] sm:$0xff]
          %v2948 = vld [vmem:[%s275 + $0x440] sm:$0xff]
          %v2949 = vld [vmem:[%s275 + $0x448] sm:$0xff]
          %v2950 = vld [vmem:[%s275 + $0x450] sm:$0xff]
          %v2951 = vld [vmem:[%s275 + $0x458] sm:$0xff]
          %v2952 = vld [vmem:[%s275 + $0x460] sm:$0xff]
          %v2953 = vld [vmem:[%s275 + $0x468] sm:$0xff]
          %v2954 = vld [vmem:[%s275 + $0x470] sm:$0xff]
          %v2955 = vld [vmem:[%s275 + $0x478] sm:$0xff]
          %v2956 = vld [vmem:[%s275 + $0x480] sm:$0xff]
          %v2957 = vld [vmem:[%s275 + $0x488] sm:$0xff]
          %v2958 = vld [vmem:[%s275 + $0x490] sm:$0xff]
          %v2959 = vld [vmem:[%s275 + $0x498] sm:$0xff]
          %v2960 = vld [vmem:[%s275 + $0x4a0] sm:$0xff]
          %v2961 = vld [vmem:[%s275 + $0x4a8] sm:$0xff]
          %v2962 = vld [vmem:[%s275 + $0x4b0] sm:$0xff]
          %v2963 = vld [vmem:[%s275 + $0x4b8] sm:$0xff]
          %v2964 = vld [vmem:[%s275 + $0x4c0] sm:$0xff]
          %v2965 = vld [vmem:[%s275 + $0x4c8] sm:$0xff]
          %v2966 = vld [vmem:[%s275 + $0x4d0] sm:$0xff]
          %v2967 = vld [vmem:[%s275 + $0x4d8] sm:$0xff]
          %v2968 = vld [vmem:[%s275 + $0x4e0] sm:$0xff]
          %v2969 = vld [vmem:[%s275 + $0x4e8] sm:$0xff]
          %v2970 = vld [vmem:[%s275 + $0x4f0] sm:$0xff]
          %v2971 = vld [vmem:[%s275 + $0x4f8] sm:$0xff]
          %v2972 = vadd.f32 %v2812, %v892
          %v2973 = vadd.f32 %v2813, %v1303
          %v2974 = vadd.f32 %v2814, %v1714
          %v2975 = vadd.f32 %v2815, %v2125
          %v2976 = vadd.f32 %v2816, %v895
          %v2977 = vadd.f32 %v2817, %v1306
          %v2978 = vadd.f32 %v2818, %v1717
          %v2979 = vadd.f32 %v2819, %v2128
          %v2980 = vadd.f32 %v2820, %v898
          %v2981 = vadd.f32 %v2821, %v1309
          %v2982 = vadd.f32 %v2822, %v1720
          %v2983 = vadd.f32 %v2823, %v2131
          %v2984 = vadd.f32 %v2824, %v901
          %v2985 = vadd.f32 %v2825, %v1312
          %v2986 = vadd.f32 %v2826, %v1723
          %v2987 = vadd.f32 %v2827, %v2134
          %v2988 = vadd.f32 %v2828, %v904
          %v2989 = vadd.f32 %v2829, %v1315
          %v2990 = vadd.f32 %v2830, %v1726
          %v2991 = vadd.f32 %v2831, %v2137
          %v2992 = vadd.f32 %v2832, %v907
          %v2993 = vadd.f32 %v2833, %v1318
          %v2994 = vadd.f32 %v2834, %v1729
          %v2995 = vadd.f32 %v2835, %v2140
          %v2996 = vadd.f32 %v2836, %v910
          %v2997 = vadd.f32 %v2837, %v1321
          %v2998 = vadd.f32 %v2838, %v1732
          %v2999 = vadd.f32 %v2839, %v2143
          %v3000 = vadd.f32 %v2840, %v913
          %v3001 = vadd.f32 %v2841, %v1324
          %v3002 = vadd.f32 %v2842, %v1735
          %v3003 = vadd.f32 %v2843, %v2146
          %v3004 = vadd.f32 %v2844, %v916
          %v3005 = vadd.f32 %v2845, %v1327
          %v3006 = vadd.f32 %v2846, %v1738
          %v3007 = vadd.f32 %v2847, %v2149
          %v3008 = vadd.f32 %v2848, %v919
          %v3009 = vadd.f32 %v2849, %v1330
          %v3010 = vadd.f32 %v2850, %v1741
          %v3011 = vadd.f32 %v2851, %v2152
          %v3012 = vadd.f32 %v2852, %v922
          %v3013 = vadd.f32 %v2853, %v1333
          %v3014 = vadd.f32 %v2854, %v1744
          %v3015 = vadd.f32 %v2855, %v2155
          %v3016 = vadd.f32 %v2856, %v925
          %v3017 = vadd.f32 %v2857, %v1336
          %v3018 = vadd.f32 %v2858, %v1747
          %v3019 = vadd.f32 %v2859, %v2158
          %v3020 = vadd.f32 %v2860, %v928
          %v3021 = vadd.f32 %v2861, %v1339
          %v3022 = vadd.f32 %v2862, %v1750
          %v3023 = vadd.f32 %v2863, %v2161
          %v3024 = vadd.f32 %v2864, %v931
          %v3025 = vadd.f32 %v2865, %v1342
          %v3026 = vadd.f32 %v2866, %v1753
          %v3027 = vadd.f32 %v2867, %v2164
          %v3028 = vadd.f32 %v2868, %v934
          %v3029 = vadd.f32 %v2869, %v1345
          %v3030 = vadd.f32 %v2870, %v1756
          %v3031 = vadd.f32 %v2871, %v2167
          %v3032 = vadd.f32 %v2872, %v937
          %v3033 = vadd.f32 %v2873, %v1348
          %v3034 = vadd.f32 %v2874, %v1759
          %v3035 = vadd.f32 %v2875, %v2170
          %v3036 = vadd.f32 %v2876, %v940
          %v3037 = vadd.f32 %v2877, %v1351
          %v3038 = vadd.f32 %v2878, %v1762
          %v3039 = vadd.f32 %v2879, %v2173
          %v3040 = vadd.f32 %v2880, %v943
          %v3041 = vadd.f32 %v2881, %v1354
          %v3042 = vadd.f32 %v2882, %v1765
          %v3043 = vadd.f32 %v2883, %v2176
          %v3044 = vadd.f32 %v2884, %v946
          %v3045 = vadd.f32 %v2885, %v1357
          %v3046 = vadd.f32 %v2886, %v1768
          %v3047 = vadd.f32 %v2887, %v2179
          %v3048 = vadd.f32 %v2888, %v949
          %v3049 = vadd.f32 %v2889, %v1360
          %v3050 = vadd.f32 %v2890, %v1771
          %v3051 = vadd.f32 %v2891, %v2182
          %v3052 = vadd.f32 %v2892, %v952
          %v3053 = vadd.f32 %v2893, %v1363
          %v3054 = vadd.f32 %v2894, %v1774
          %v3055 = vadd.f32 %v2895, %v2185
          %v3056 = vadd.f32 %v2896, %v955
          %v3057 = vadd.f32 %v2897, %v1366
          %v3058 = vadd.f32 %v2898, %v1777
          %v3059 = vadd.f32 %v2899, %v2188
          %v3060 = vadd.f32 %v2900, %v958
          %v3061 = vadd.f32 %v2901, %v1369
          %v3062 = vadd.f32 %v2902, %v1780
          %v3063 = vadd.f32 %v2903, %v2191
          %v3064 = vadd.f32 %v2904, %v961
          %v3065 = vadd.f32 %v2905, %v1372
          %v3066 = vadd.f32 %v2906, %v1783
          %v3067 = vadd.f32 %v2907, %v2194
          %v3068 = vadd.f32 %v2908, %v964
          %v3069 = vadd.f32 %v2909, %v1375
          %v3070 = vadd.f32 %v2910, %v1786
          %v3071 = vadd.f32 %v2911, %v2197
          %v3072 = vadd.f32 %v2912, %v967
          %v3073 = vadd.f32 %v2913, %v1378
          %v3074 = vadd.f32 %v2914, %v1789
          %v3075 = vadd.f32 %v2915, %v2200
          %v3076 = vadd.f32 %v2916, %v970
          %v3077 = vadd.f32 %v2917, %v1381
          %v3078 = vadd.f32 %v2918, %v1792
          %v3079 = vadd.f32 %v2919, %v2203
          %v3080 = vadd.f32 %v2920, %v973
          %v3081 = vadd.f32 %v2921, %v1384
          %v3082 = vadd.f32 %v2922, %v1795
          %v3083 = vadd.f32 %v2923, %v2206
          %v3084 = vadd.f32 %v2924, %v976
          %v3085 = vadd.f32 %v2925, %v1387
          %v3086 = vadd.f32 %v2926, %v1798
          %v3087 = vadd.f32 %v2927, %v2209
          %v3088 = vadd.f32 %v2928, %v979
          %v3089 = vadd.f32 %v2929, %v1390
          %v3090 = vadd.f32 %v2930, %v1801
          %v3091 = vadd.f32 %v2931, %v2212
          %v3092 = vadd.f32 %v2932, %v982
          %v3093 = vadd.f32 %v2933, %v1393
          %v3094 = vadd.f32 %v2934, %v1804
          %v3095 = vadd.f32 %v2935, %v2215
          %v3096 = vadd.f32 %v2936, %v985
          %v3097 = vadd.f32 %v2937, %v1396
          %v3098 = vadd.f32 %v2938, %v1807
          %v3099 = vadd.f32 %v2939, %v2218
          %v3100 = vadd.f32 %v2940, %v988
          %v3101 = vadd.f32 %v2941, %v1399
          %v3102 = vadd.f32 %v2942, %v1810
          %v3103 = vadd.f32 %v2943, %v2221
          %v3104 = vadd.f32 %v2944, %v991
          %v3105 = vadd.f32 %v2945, %v1402
          %v3106 = vadd.f32 %v2946, %v1813
          %v3107 = vadd.f32 %v2947, %v2224
          %v3108 = vadd.f32 %v2948, %v994
          %v3109 = vadd.f32 %v2949, %v1405
          %v3110 = vadd.f32 %v2950, %v1816
          %v3111 = vadd.f32 %v2951, %v2227
          %v3112 = vadd.f32 %v2952, %v997
          %v3113 = vadd.f32 %v2953, %v1408
          %v3114 = vadd.f32 %v2954, %v1819
          %v3115 = vadd.f32 %v2955, %v2230
          %v3116 = vadd.f32 %v2956, %v1000
          %v3117 = vadd.f32 %v2957, %v1411
          %v3118 = vadd.f32 %v2958, %v1822
          %v3119 = vadd.f32 %v2959, %v2233
          %v3120 = vadd.f32 %v2960, %v1003
          %v3121 = vadd.f32 %v2961, %v1414
          %v3122 = vadd.f32 %v2962, %v1825
          %v3123 = vadd.f32 %v2963, %v2236
          %v3124 = vadd.f32 %v2964, %v1006
          %v3125 = vadd.f32 %v2965, %v1417
          %v3126 = vadd.f32 %v2966, %v1828
          %v3127 = vadd.f32 %v2967, %v2239
          %v3128 = vadd.f32 %v2968, %v1009
          %v3129 = vadd.f32 %v2969, %v1420
          %v3130 = vadd.f32 %v2970, %v1831
          %v3131 = vadd.f32 %v2971, %v2242
          %3132 = vst [vmem:[%s275] sm:$0xff] %v2972
          %3133 = vst [vmem:[%s275 + $0x8] sm:$0xff] %v2973
          %3134 = vst [vmem:[%s275 + $0x10] sm:$0xff] %v2974
          %3135 = vst [vmem:[%s275 + $0x18] sm:$0xff] %v2975
          %3136 = vst [vmem:[%s275 + $0x20] sm:$0xff] %v2976
          %3137 = vst [vmem:[%s275 + $0x28] sm:$0xff] %v2977
          %3138 = vst [vmem:[%s275 + $0x30] sm:$0xff] %v2978
          %3139 = vst [vmem:[%s275 + $0x38] sm:$0xff] %v2979
          %3140 = vst [vmem:[%s275 + $0x40] sm:$0xff] %v2980
          %3141 = vst [vmem:[%s275 + $0x48] sm:$0xff] %v2981
          %3142 = vst [vmem:[%s275 + $0x50] sm:$0xff] %v2982
          %3143 = vst [vmem:[%s275 + $0x58] sm:$0xff] %v2983
          %3144 = vst [vmem:[%s275 + $0x60] sm:$0xff] %v2984
          %3145 = vst [vmem:[%s275 + $0x68] sm:$0xff] %v2985
          %3146 = vst [vmem:[%s275 + $0x70] sm:$0xff] %v2986
          %3147 = vst [vmem:[%s275 + $0x78] sm:$0xff] %v2987
          %3148 = vst [vmem:[%s275 + $0x80] sm:$0xff] %v2988
          %3149 = vst [vmem:[%s275 + $0x88] sm:$0xff] %v2989
          %3150 = vst [vmem:[%s275 + $0x90] sm:$0xff] %v2990
          %3151 = vst [vmem:[%s275 + $0x98] sm:$0xff] %v2991
          %3152 = vst [vmem:[%s275 + $0xa0] sm:$0xff] %v2992
          %3153 = vst [vmem:[%s275 + $0xa8] sm:$0xff] %v2993
          %3154 = vst [vmem:[%s275 + $0xb0] sm:$0xff] %v2994
          %3155 = vst [vmem:[%s275 + $0xb8] sm:$0xff] %v2995
          %3156 = vst [vmem:[%s275 + $0xc0] sm:$0xff] %v2996
          %3157 = vst [vmem:[%s275 + $0xc8] sm:$0xff] %v2997
          %3158 = vst [vmem:[%s275 + $0xd0] sm:$0xff] %v2998
          %3159 = vst [vmem:[%s275 + $0xd8] sm:$0xff] %v2999
          %3160 = vst [vmem:[%s275 + $0xe0] sm:$0xff] %v3000
          %3161 = vst [vmem:[%s275 + $0xe8] sm:$0xff] %v3001
          %3162 = vst [vmem:[%s275 + $0xf0] sm:$0xff] %v3002
          %3163 = vst [vmem:[%s275 + $0xf8] sm:$0xff] %v3003
          %3164 = vst [vmem:[%s275 + $0x100] sm:$0xff] %v3004
          %3165 = vst [vmem:[%s275 + $0x108] sm:$0xff] %v3005
          %3166 = vst [vmem:[%s275 + $0x110] sm:$0xff] %v3006
          %3167 = vst [vmem:[%s275 + $0x118] sm:$0xff] %v3007
          %3168 = vst [vmem:[%s275 + $0x120] sm:$0xff] %v3008
          %3169 = vst [vmem:[%s275 + $0x128] sm:$0xff] %v3009
          %3170 = vst [vmem:[%s275 + $0x130] sm:$0xff] %v3010
          %3171 = vst [vmem:[%s275 + $0x138] sm:$0xff] %v3011
          %3172 = vst [vmem:[%s275 + $0x140] sm:$0xff] %v3012
          %3173 = vst [vmem:[%s275 + $0x148] sm:$0xff] %v3013
          %3174 = vst [vmem:[%s275 + $0x150] sm:$0xff] %v3014
          %3175 = vst [vmem:[%s275 + $0x158] sm:$0xff] %v3015
          %3176 = vst [vmem:[%s275 + $0x160] sm:$0xff] %v3016
          %3177 = vst [vmem:[%s275 + $0x168] sm:$0xff] %v3017
          %3178 = vst [vmem:[%s275 + $0x170] sm:$0xff] %v3018
          %3179 = vst [vmem:[%s275 + $0x178] sm:$0xff] %v3019
          %3180 = vst [vmem:[%s275 + $0x180] sm:$0xff] %v3020
          %3181 = vst [vmem:[%s275 + $0x188] sm:$0xff] %v3021
          %3182 = vst [vmem:[%s275 + $0x190] sm:$0xff] %v3022
          %3183 = vst [vmem:[%s275 + $0x198] sm:$0xff] %v3023
          %3184 = vst [vmem:[%s275 + $0x1a0] sm:$0xff] %v3024
          %3185 = vst [vmem:[%s275 + $0x1a8] sm:$0xff] %v3025
          %3186 = vst [vmem:[%s275 + $0x1b0] sm:$0xff] %v3026
          %3187 = vst [vmem:[%s275 + $0x1b8] sm:$0xff] %v3027
          %3188 = vst [vmem:[%s275 + $0x1c0] sm:$0xff] %v3028
          %3189 = vst [vmem:[%s275 + $0x1c8] sm:$0xff] %v3029
          %3190 = vst [vmem:[%s275 + $0x1d0] sm:$0xff] %v3030
          %3191 = vst [vmem:[%s275 + $0x1d8] sm:$0xff] %v3031
          %3192 = vst [vmem:[%s275 + $0x1e0] sm:$0xff] %v3032
          %3193 = vst [vmem:[%s275 + $0x1e8] sm:$0xff] %v3033
          %3194 = vst [vmem:[%s275 + $0x1f0] sm:$0xff] %v3034
          %3195 = vst [vmem:[%s275 + $0x1f8] sm:$0xff] %v3035
          %3196 = vst [vmem:[%s275 + $0x200] sm:$0xff] %v3036
          %3197 = vst [vmem:[%s275 + $0x208] sm:$0xff] %v3037
          %3198 = vst [vmem:[%s275 + $0x210] sm:$0xff] %v3038
          %3199 = vst [vmem:[%s275 + $0x218] sm:$0xff] %v3039
          %3200 = vst [vmem:[%s275 + $0x220] sm:$0xff] %v3040
          %3201 = vst [vmem:[%s275 + $0x228] sm:$0xff] %v3041
          %3202 = vst [vmem:[%s275 + $0x230] sm:$0xff] %v3042
          %3203 = vst [vmem:[%s275 + $0x238] sm:$0xff] %v3043
          %3204 = vst [vmem:[%s275 + $0x240] sm:$0xff] %v3044
          %3205 = vst [vmem:[%s275 + $0x248] sm:$0xff] %v3045
          %3206 = vst [vmem:[%s275 + $0x250] sm:$0xff] %v3046
          %3207 = vst [vmem:[%s275 + $0x258] sm:$0xff] %v3047
          %3208 = vst [vmem:[%s275 + $0x260] sm:$0xff] %v3048
          %3209 = vst [vmem:[%s275 + $0x268] sm:$0xff] %v3049
          %3210 = vst [vmem:[%s275 + $0x270] sm:$0xff] %v3050
          %3211 = vst [vmem:[%s275 + $0x278] sm:$0xff] %v3051
          %3212 = vst [vmem:[%s275 + $0x280] sm:$0xff] %v3052
          %3213 = vst [vmem:[%s275 + $0x288] sm:$0xff] %v3053
          %3214 = vst [vmem:[%s275 + $0x290] sm:$0xff] %v3054
          %3215 = vst [vmem:[%s275 + $0x298] sm:$0xff] %v3055
          %3216 = vst [vmem:[%s275 + $0x2a0] sm:$0xff] %v3056
          %3217 = vst [vmem:[%s275 + $0x2a8] sm:$0xff] %v3057
          %3218 = vst [vmem:[%s275 + $0x2b0] sm:$0xff] %v3058
          %3219 = vst [vmem:[%s275 + $0x2b8] sm:$0xff] %v3059
          %3220 = vst [vmem:[%s275 + $0x2c0] sm:$0xff] %v3060
          %3221 = vst [vmem:[%s275 + $0x2c8] sm:$0xff] %v3061
          %3222 = vst [vmem:[%s275 + $0x2d0] sm:$0xff] %v3062
          %3223 = vst [vmem:[%s275 + $0x2d8] sm:$0xff] %v3063
          %3224 = vst [vmem:[%s275 + $0x2e0] sm:$0xff] %v3064
          %3225 = vst [vmem:[%s275 + $0x2e8] sm:$0xff] %v3065
          %3226 = vst [vmem:[%s275 + $0x2f0] sm:$0xff] %v3066
          %3227 = vst [vmem:[%s275 + $0x2f8] sm:$0xff] %v3067
          %3228 = vst [vmem:[%s275 + $0x300] sm:$0xff] %v3068
          %3229 = vst [vmem:[%s275 + $0x308] sm:$0xff] %v3069
          %3230 = vst [vmem:[%s275 + $0x310] sm:$0xff] %v3070
          %3231 = vst [vmem:[%s275 + $0x318] sm:$0xff] %v3071
          %3232 = vst [vmem:[%s275 + $0x320] sm:$0xff] %v3072
          %3233 = vst [vmem:[%s275 + $0x328] sm:$0xff] %v3073
          %3234 = vst [vmem:[%s275 + $0x330] sm:$0xff] %v3074
          %3235 = vst [vmem:[%s275 + $0x338] sm:$0xff] %v3075
          %3236 = vst [vmem:[%s275 + $0x340] sm:$0xff] %v3076
          %3237 = vst [vmem:[%s275 + $0x348] sm:$0xff] %v3077
          %3238 = vst [vmem:[%s275 + $0x350] sm:$0xff] %v3078
          %3239 = vst [vmem:[%s275 + $0x358] sm:$0xff] %v3079
          %3240 = vst [vmem:[%s275 + $0x360] sm:$0xff] %v3080
          %3241 = vst [vmem:[%s275 + $0x368] sm:$0xff] %v3081
          %3242 = vst [vmem:[%s275 + $0x370] sm:$0xff] %v3082
          %3243 = vst [vmem:[%s275 + $0x378] sm:$0xff] %v3083
          %3244 = vst [vmem:[%s275 + $0x380] sm:$0xff] %v3084
          %3245 = vst [vmem:[%s275 + $0x388] sm:$0xff] %v3085
          %3246 = vst [vmem:[%s275 + $0x390] sm:$0xff] %v3086
          %3247 = vst [vmem:[%s275 + $0x398] sm:$0xff] %v3087
          %3248 = vst [vmem:[%s275 + $0x3a0] sm:$0xff] %v3088
          %3249 = vst [vmem:[%s275 + $0x3a8] sm:$0xff] %v3089
          %3250 = vst [vmem:[%s275 + $0x3b0] sm:$0xff] %v3090
          %3251 = vst [vmem:[%s275 + $0x3b8] sm:$0xff] %v3091
          %3252 = vst [vmem:[%s275 + $0x3c0] sm:$0xff] %v3092
          %3253 = vst [vmem:[%s275 + $0x3c8] sm:$0xff] %v3093
          %3254 = vst [vmem:[%s275 + $0x3d0] sm:$0xff] %v3094
          %3255 = vst [vmem:[%s275 + $0x3d8] sm:$0xff] %v3095
          %3256 = vst [vmem:[%s275 + $0x3e0] sm:$0xff] %v3096
          %3257 = vst [vmem:[%s275 + $0x3e8] sm:$0xff] %v3097
          %3258 = vst [vmem:[%s275 + $0x3f0] sm:$0xff] %v3098
          %3259 = vst [vmem:[%s275 + $0x3f8] sm:$0xff] %v3099
          %3260 = vst [vmem:[%s275 + $0x400] sm:$0xff] %v3100
          %3261 = vst [vmem:[%s275 + $0x408] sm:$0xff] %v3101
          %3262 = vst [vmem:[%s275 + $0x410] sm:$0xff] %v3102
          %3263 = vst [vmem:[%s275 + $0x418] sm:$0xff] %v3103
          %3264 = vst [vmem:[%s275 + $0x420] sm:$0xff] %v3104
          %3265 = vst [vmem:[%s275 + $0x428] sm:$0xff] %v3105
          %3266 = vst [vmem:[%s275 + $0x430] sm:$0xff] %v3106
          %3267 = vst [vmem:[%s275 + $0x438] sm:$0xff] %v3107
          %3268 = vst [vmem:[%s275 + $0x440] sm:$0xff] %v3108
          %3269 = vst [vmem:[%s275 + $0x448] sm:$0xff] %v3109
          %3270 = vst [vmem:[%s275 + $0x450] sm:$0xff] %v3110
          %3271 = vst [vmem:[%s275 + $0x458] sm:$0xff] %v3111
          %3272 = vst [vmem:[%s275 + $0x460] sm:$0xff] %v3112
          %3273 = vst [vmem:[%s275 + $0x468] sm:$0xff] %v3113
          %3274 = vst [vmem:[%s275 + $0x470] sm:$0xff] %v3114
          %3275 = vst [vmem:[%s275 + $0x478] sm:$0xff] %v3115
          %3276 = vst [vmem:[%s275 + $0x480] sm:$0xff] %v3116
          %3277 = vst [vmem:[%s275 + $0x488] sm:$0xff] %v3117
          %3278 = vst [vmem:[%s275 + $0x490] sm:$0xff] %v3118
          %3279 = vst [vmem:[%s275 + $0x498] sm:$0xff] %v3119
          %3280 = vst [vmem:[%s275 + $0x4a0] sm:$0xff] %v3120
          %3281 = vst [vmem:[%s275 + $0x4a8] sm:$0xff] %v3121
          %3282 = vst [vmem:[%s275 + $0x4b0] sm:$0xff] %v3122
          %3283 = vst [vmem:[%s275 + $0x4b8] sm:$0xff] %v3123
          %3284 = vst [vmem:[%s275 + $0x4c0] sm:$0xff] %v3124
          %3285 = vst [vmem:[%s275 + $0x4c8] sm:$0xff] %v3125
          %3286 = vst [vmem:[%s275 + $0x4d0] sm:$0xff] %v3126
          %3287 = vst [vmem:[%s275 + $0x4d8] sm:$0xff] %v3127
          %3288 = vst [vmem:[%s275 + $0x4e0] sm:$0xff] %v3128
          %3289 = vst [vmem:[%s275 + $0x4e8] sm:$0xff] %v3129
          %3290 = vst [vmem:[%s275 + $0x4f0] sm:$0xff] %v3130
          %3291 = vst [vmem:[%s275 + $0x4f8] sm:$0xff] %v3131
        $region48: #{tpu_custom_call.1} parent=31 // pred_fallthru
          _
        %s3292 = sand.u32 %s143, 1
        %s3293 = scalar_lea.sflag [#allocation4], %s3292
        %s3294 = sand.u32 %s143, 1
        %s3295 = smul.addr %s3294, 1280
        %s3296 = scalar_lea.vmem [#allocation7], %s3295
        // Predicated region
        $region49: #{tpu_custom_call.1} parent=31 // pred_check
          %p3297 = pneg %p153
        $region50: #{tpu_custom_call.1} parent=31 // pred_check_branch
          %3299 = sbr.rel (%p3297) target = $region52
        $region51: #{tpu_custom_call.1} parent=31 // pred_region
          %s3300 = smul.u32 40, %s28
          %s3301 = smul.u32 4, %s29
          %3303 = vsyncadd %s3293, 0
          %s3304 = smul.addr %s3300, 4
          %s3305 = sadd.s32 %s3301, %s3304
          %s3306 = smul.addr %s27, 160
          %s3307 = sadd.s32 %s3305, %s3306
          %s3308 = smul.addr %s3307, 8
          %s3309 = scalar_lea.hbm %s3, %s3308
          %s3310 = sshll.u32 %s3296, 4
          %s3311 = int_to_ptr.vmem [resolvable:$true] %s3310
          %s3312 = sshll.u32 %s3309, 4
          %s3313 = int_to_ptr.hbm [resolvable:$true] %s3312
          %3318 = dma.vmem_to_hbm [thread:$0]  %s3311, 20480, %s3313, %s3293, 512, 512, 32
        $region52: #{tpu_custom_call.1} parent=31 // pred_fallthru
          _
      $region32: #{tpu_custom_call.1} parent=5 // pred_fallthru
        _
      %p3319 = scmp.le.s32.totalorder 2, %s16
      // Predicated region
      $region53: #{tpu_custom_call.1} parent=5 // pred_check
        %p3320 = pneg %p3319
      $region54: #{tpu_custom_call.1} parent=5 // pred_check_branch
        %3322 = sbr.rel (%p3320) target = $region56
      $region55: #{tpu_custom_call.1} parent=5 // pred_region
        %s3323 = ssub.s32 %s16, 2
        // Predicated region
        $region57: #{tpu_custom_call.1} parent=55 // pred_check
          %p3324 = pneg %p159
        $region58: #{tpu_custom_call.1} parent=55 // pred_check_branch
          %3326 = sbr.rel (%p3324) target = $region60
        $region59: #{tpu_custom_call.1} parent=55 // pred_region
          %s3327 = sand.u32 %s144, 1
          %s3328 = scalar_lea.sflag [#allocation4], %s3327
          %s3329 = sand.u32 %s144, 1
          %s3330 = smul.addr %s3329, 1280
          %s3331 = scalar_lea.vmem [#allocation7], %s3330
          %3333 = dma.done %s3328, 20480
        $region60: #{tpu_custom_call.1} parent=55 // pred_fallthru
          _
      $region56: #{tpu_custom_call.1} parent=5 // pred_fallthru
        _
    $region6: #{tpu_custom_call.1} parent=1 // loop_footer
      %s20 = sadd.s32 1, %s16
    $region7: #{tpu_custom_call.1} parent=1 // loop_footer_branch
      %15 = sbr.rel target = $region3
    $region8: #{tpu_custom_call.1} parent=1 // loop_exit
      _
    %3334 = vsyncpa [#allocation3], 1
    %s3335 = scalar_lea.sflag [#allocation3], 1
    %3336 = vsyncpa %s3335, 1
    %3337 = vsyncpa [#allocation6], 1
    %3338 = vsyncpa [#allocation4], 1
    %s3339 = scalar_lea.sflag [#allocation4], 1
    %3340 = vsyncpa %s3339, 1

</llo_original>
